<compile_context>
chip_gen: v7x
topology: tpu7x:2x2x1
jax: 0.10.0
libtpu: 0.0.40
codegen_flags: <defaults>
</compile_context>

<pallas_src>
import jax
import jax.numpy as jnp
from jax import lax
from jax.experimental import pallas as pl
from jax.experimental.pallas import tpu as pltpu

_BN_EPS = 1e-5


# ------------------------------ fused kernel --------------------------------

def _make_fused_kernel(num_conv):
    """Build the fused forward kernel for `num_conv` ConvBlocks + head."""

    def kernel(*refs):
        x_ref = refs[0]
        conv_refs = refs[1:1 + 4 * num_conv]          # (M, bt, R, B) per layer
        wh_ref = refs[1 + 4 * num_conv]
        bh_ref = refs[2 + 4 * num_conv]
        o_ref = refs[3 + 4 * num_conv]

        a = x_ref[...]                                 # (N, T0*C0) = (N, L)
        for i in range(num_conv):                      # unrolled at trace time
            m_ref = conv_refs[4 * i]                   # (Tin*Cin, Tout*Cout)
            b_ref = conv_refs[4 * i + 1]               # (1, Tout*Cout)
            r_ref = conv_refs[4 * i + 2]               # (Tout*Cout, Cout) / Tout
            br_ref = conv_refs[4 * i + 3]              # (Cout, Tout*Cout)

            # Conv1d(k=2, s=2) + bias as one dense matmul on the feature axis.
            y = jnp.dot(a, m_ref[...],
                        preferred_element_type=jnp.float32) + b_ref[...]

            # 'fixedbn' (batch stats, biased var, no affine) + ReLU, fused.
            col_mean = jnp.mean(y, axis=0, keepdims=True)          # (1, T*C)
            ch_mean = jnp.dot(col_mean, r_ref[...],
                              preferred_element_type=jnp.float32)  # (1, C)
            mean = jnp.dot(ch_mean, br_ref[...],
                           preferred_element_type=jnp.float32)     # (1, T*C)
            cent = y - mean
            col_sq = jnp.mean(cent * cent, axis=0, keepdims=True)
            ch_var = jnp.dot(col_sq, r_ref[...],
                             preferred_element_type=jnp.float32)
            var = jnp.dot(ch_var, br_ref[...],
                          preferred_element_type=jnp.float32)
            a = jnp.maximum(cent * lax.rsqrt(var + _BN_EPS), 0.0)

        # head LinearBlock (channel-major flatten already folded into wh)
        o_ref[...] = (jnp.dot(a, wh_ref[...],
                              preferred_element_type=jnp.float32) + bh_ref[...])

    return kernel


def mnist1d_convnet_forward(x, prepared):
    """x: (N, L) or (N, 1, L) float32 -> (N, out_channels)."""
    if x.ndim == 3:               # PyTorch path: already has channel dim (== 1)
        x = x[:, 0, :]
    n = x.shape[0]
    out_ch = prepared["out_channels"]
    inputs = (x,) + prepared["flat"]
    vmem = pl.BlockSpec(memory_space=pltpu.MemorySpace.VMEM)
    return pl.pallas_call(
        _make_fused_kernel(prepared["num_conv"]),
        out_shape=jax.ShapeDtypeStruct((n, out_ch), jnp.float32),
        in_specs=[vmem] * len(inputs),
        out_specs=vmem,
        compiler_params=pltpu.CompilerParams(vmem_limit_bytes=32 * 1024 * 1024),
    )(*inputs)


# ------------------------ one-time parameter repacking -----------------------

def prepare_params(params, length):
    """Repack PyTorch-layout params into fused-kernel operands (done ONCE).

    Activation layout inside the kernel is per-sample, time-major:
    feature index f = t * C + c.  For each ConvBlock (k=2, s=2) we build:
      M  (T_in*C_in, T_out*C_out): block-diagonal embedding of the conv weight
      bt (1, T_out*C_out):         bias tiled over output positions
      R  (T_out*C_out, C_out):     per-channel time-reduction (scaled 1/T_out)
      B  (C_out, T_out*C_out):     per-channel broadcast back to (t, c) columns
    The head weight gets the PyTorch channel-major flatten folded in.
    """
    flat = []
    t = length
    for (w, b) in params["conv"]:
        cout, cin, k = w.shape                    # PyTorch Conv1d (Cout,Cin,K)
        assert t % k == 0, "length must be divisible by stride at every stage"
        t_out = t // k                            # stride == kernel == 2
        # (K, Cin, Cout) -> (K*Cin, Cout): row index = k_idx*Cin + ci
        w_block = jnp.transpose(w, (2, 1, 0)).reshape(k * cin, cout)
        m = jnp.kron(jnp.eye(t_out, dtype=jnp.float32), w_block)
        bt = jnp.tile(b, t_out)[None, :]
        eye = jnp.eye(cout, dtype=jnp.float32)
        r = jnp.kron(jnp.ones((t_out, 1), jnp.float32), eye) / float(t_out)
        br = jnp.kron(jnp.ones((1, t_out), jnp.float32), eye)
        flat += [m, bt, r, br]
        t = t_out

    w_h, b_h = params["head"]                     # (out, C_last*T_final), (out,)
    out_ch, feat = w_h.shape
    c_last = feat // t
    # PyTorch nn.Flatten on NCL is channel-major (feature = c*T + t); fold that
    # permutation into the head weight so the kernel consumes the t-major
    # activation directly (no transpose in the hot path).
    wh = jnp.transpose(w_h.reshape(out_ch, c_last, t),
                       (2, 1, 0)).reshape(feat, out_ch)
    flat += [wh, b_h[None, :]]
    return {
        "flat": tuple(flat),
        "num_conv": len(params["conv"]),
        "out_channels": out_ch,
    }


# --------------------------- parameter creation ------------------------------

def init_params(key, hidden=(32, 64, 128, 256), out_channels=10):
    """Deterministic PyTorch-default-style (uniform +/- 1/sqrt(fan_in)) init."""
    channels = [1] + list(hidden)
    conv = []
    for cin, cout in zip(channels[:-1], channels[1:]):
        key, kw, kb = jax.random.split(key, 3)
        bound = 1.0 / float(jnp.sqrt(cin * 2.0))
        w = jax.random.uniform(kw, (cout, cin, 2), jnp.float32, -bound, bound)
        b = jax.random.uniform(kb, (cout,), jnp.float32, -bound, bound)
        conv.append((w, b))
    key, kw, kb = jax.random.split(key, 3)
    feat = channels[-1] * 2
    bound = 1.0 / float(jnp.sqrt(float(feat)))
    w_h = jax.random.uniform(kw, (out_channels, feat), jnp.float32, -bound, bound)
    b_h = jax.random.uniform(kb, (out_channels,), jnp.float32, -bound, bound)
    return {"conv": conv, "head": (w_h, b_h)}


# ---------------------- plain-JAX reference (NCL, like torch) ----------------

def reference_forward(x, params):
    a = x[:, None, :]  # (N, 1, L) NCL
    for (w, b) in params["conv"]:
        a = lax.conv_general_dilated(
            a, w, window_strides=(2,), padding="VALID",
            dimension_numbers=("NCH", "OIH", "NCH"),
            precision=lax.Precision.HIGHEST)
        a = a + b[None, :, None]
        mean = jnp.mean(a, axis=(0, 2), keepdims=True)
        var = jnp.mean((a - mean) ** 2, axis=(0, 2), keepdims=True)
        a = (a - mean) / jnp.sqrt(var + _BN_EPS)
        a = jnp.maximum(a, 0.0)
    w_h, b_h = params["head"]
    flat = a.reshape(a.shape[0], -1)       # nn.Flatten: channel-major
    return jnp.dot(flat, w_h.T, precision=lax.Precision.HIGHEST) + b_h


# ----------------------------------- main ------------------------------------

if __name__ == "__main__":
    key = jax.random.PRNGKey(0)
    k_x, k_p = jax.random.split(key)

    # Default module config: hidden=(32, 64, 128, 256).
    # L=32 -> 16 -> 8 -> 4 -> 2 after four k=2, s=2 convs (head sees 256*2=512).
    N, L = 8, 32
    hidden = (32, 64, 128, 256)
    out_channels = 10

    x = jax.random.normal(k_x, (N, L), jnp.float32)
    params = init_params(k_p, hidden=hidden, out_channels=out_channels)
    prepared = prepare_params(params, L)          # one-time repack, off hot path

    y = mnist1d_convnet_forward(x, prepared)
    y = jax.block_until_ready(y)
    assert y.shape == (N, out_channels)

    y_ref = reference_forward(x, params)
    max_err = float(jnp.max(jnp.abs(y - y_ref)))
    if not max_err < 2e-4:
        raise AssertionError(f"Pallas output mismatch, max abs err = {max_err}")

    print("KERNEL_OK")
</pallas_src>

<mosaic_0001>
module attributes {stable_mosaic.version = 11 : i64} {
  func.func @kernel(%arg0: memref<8x32xf32, #tpu.memory_space<vmem>>, %arg1: memref<32x512xf32, #tpu.memory_space<vmem>>, %arg2: memref<1x512xf32, #tpu.memory_space<vmem>>, %arg3: memref<512x32xf32, #tpu.memory_space<vmem>>, %arg4: memref<32x512xf32, #tpu.memory_space<vmem>>, %arg5: memref<512x512xf32, #tpu.memory_space<vmem>>, %arg6: memref<1x512xf32, #tpu.memory_space<vmem>>, %arg7: memref<512x64xf32, #tpu.memory_space<vmem>>, %arg8: memref<64x512xf32, #tpu.memory_space<vmem>>, %arg9: memref<512x512xf32, #tpu.memory_space<vmem>>, %arg10: memref<1x512xf32, #tpu.memory_space<vmem>>, %arg11: memref<512x128xf32, #tpu.memory_space<vmem>>, %arg12: memref<128x512xf32, #tpu.memory_space<vmem>>, %arg13: memref<512x512xf32, #tpu.memory_space<vmem>>, %arg14: memref<1x512xf32, #tpu.memory_space<vmem>>, %arg15: memref<512x256xf32, #tpu.memory_space<vmem>>, %arg16: memref<256x512xf32, #tpu.memory_space<vmem>>, %arg17: memref<512x10xf32, #tpu.memory_space<vmem>>, %arg18: memref<1x10xf32, #tpu.memory_space<vmem>>, %arg19: memref<8x10xf32, #tpu.memory_space<vmem>>) attributes {dimension_semantics = [], scalar_prefetch = 0 : i64, scratch_operands = 0 : i64, tpu.core_type = #tpu.core_type<tc>} {
    %c0 = arith.constant 0 : index
    %c0_0 = arith.constant 0 : index
    %0 = vector.load %arg0[%c0, %c0_0] : memref<8x32xf32, #tpu.memory_space<vmem>>, vector<8x32xf32>
    %c0_1 = arith.constant 0 : index
    %c0_2 = arith.constant 0 : index
    %1 = vector.load %arg1[%c0_1, %c0_2] : memref<32x512xf32, #tpu.memory_space<vmem>>, vector<32x512xf32>
    %cst = arith.constant dense<0.000000e+00> : vector<8x512xf32>
    %2 = tpu.matmul %0, %1, %cst {dimension_numbers = #tpu.dot_dimension_numbers<[1], [0], [0], [1], [0, 0, 1, 1], [], []>} : vector<8x32xf32>, vector<32x512xf32>, vector<8x512xf32> -> vector<8x512xf32>
    %c0_3 = arith.constant 0 : index
    %c0_4 = arith.constant 0 : index
    %3 = vector.load %arg2[%c0_3, %c0_4] : memref<1x512xf32, #tpu.memory_space<vmem>>, vector<1x512xf32>
    %4 = vector.broadcast %3 : vector<1x512xf32> to vector<8x512xf32>
    %5 = arith.addf %2, %4 : vector<8x512xf32>
    %cst_5 = arith.constant dense<0.000000e+00> : vector<512xf32>
    %6 = vector.multi_reduction <add>, %5, %cst_5 [0] : vector<8x512xf32> to vector<512xf32>
    %7 = vector.shape_cast %6 : vector<512xf32> to vector<1x512xf32>
    %cst_6 = arith.constant 8.000000e+00 : f32
    %8 = vector.broadcast %cst_6 : f32 to vector<1x512xf32>
    %9 = arith.divf %7, %8 : vector<1x512xf32>
    %c0_7 = arith.constant 0 : index
    %c0_8 = arith.constant 0 : index
    %10 = vector.load %arg3[%c0_7, %c0_8] : memref<512x32xf32, #tpu.memory_space<vmem>>, vector<512x32xf32>
    %cst_9 = arith.constant dense<0.000000e+00> : vector<1x32xf32>
    %11 = tpu.matmul %9, %10, %cst_9 {dimension_numbers = #tpu.dot_dimension_numbers<[1], [0], [0], [1], [0, 0, 1, 1], [], []>} : vector<1x512xf32>, vector<512x32xf32>, vector<1x32xf32> -> vector<1x32xf32>
    %c0_10 = arith.constant 0 : index
    %c0_11 = arith.constant 0 : index
    %12 = vector.load %arg4[%c0_10, %c0_11] : memref<32x512xf32, #tpu.memory_space<vmem>>, vector<32x512xf32>
    %cst_12 = arith.constant dense<0.000000e+00> : vector<1x512xf32>
    %13 = tpu.matmul %11, %12, %cst_12 {dimension_numbers = #tpu.dot_dimension_numbers<[1], [0], [0], [1], [0, 0, 1, 1], [], []>} : vector<1x32xf32>, vector<32x512xf32>, vector<1x512xf32> -> vector<1x512xf32>
    %14 = vector.broadcast %13 : vector<1x512xf32> to vector<8x512xf32>
    %15 = arith.subf %5, %14 : vector<8x512xf32>
    %16 = arith.mulf %15, %15 : vector<8x512xf32>
    %cst_13 = arith.constant dense<0.000000e+00> : vector<512xf32>
    %17 = vector.multi_reduction <add>, %16, %cst_13 [0] : vector<8x512xf32> to vector<512xf32>
    %18 = vector.shape_cast %17 : vector<512xf32> to vector<1x512xf32>
    %cst_14 = arith.constant 8.000000e+00 : f32
    %19 = vector.broadcast %cst_14 : f32 to vector<1x512xf32>
    %20 = arith.divf %18, %19 : vector<1x512xf32>
    %c0_15 = arith.constant 0 : index
    %c0_16 = arith.constant 0 : index
    %21 = vector.load %arg3[%c0_15, %c0_16] : memref<512x32xf32, #tpu.memory_space<vmem>>, vector<512x32xf32>
    %cst_17 = arith.constant dense<0.000000e+00> : vector<1x32xf32>
    %22 = tpu.matmul %20, %21, %cst_17 {dimension_numbers = #tpu.dot_dimension_numbers<[1], [0], [0], [1], [0, 0, 1, 1], [], []>} : vector<1x512xf32>, vector<512x32xf32>, vector<1x32xf32> -> vector<1x32xf32>
    %c0_18 = arith.constant 0 : index
    %c0_19 = arith.constant 0 : index
    %23 = vector.load %arg4[%c0_18, %c0_19] : memref<32x512xf32, #tpu.memory_space<vmem>>, vector<32x512xf32>
    %cst_20 = arith.constant dense<0.000000e+00> : vector<1x512xf32>
    %24 = tpu.matmul %22, %23, %cst_20 {dimension_numbers = #tpu.dot_dimension_numbers<[1], [0], [0], [1], [0, 0, 1, 1], [], []>} : vector<1x32xf32>, vector<32x512xf32>, vector<1x512xf32> -> vector<1x512xf32>
    %cst_21 = arith.constant 9.99999974E-6 : f32
    %25 = vector.broadcast %cst_21 : f32 to vector<1x512xf32>
    %26 = arith.addf %24, %25 : vector<1x512xf32>
    %27 = math.rsqrt %26 : vector<1x512xf32>
    %28 = vector.broadcast %27 : vector<1x512xf32> to vector<8x512xf32>
    %29 = arith.mulf %15, %28 : vector<8x512xf32>
    %cst_22 = arith.constant 0.000000e+00 : f32
    %30 = vector.broadcast %cst_22 : f32 to vector<8x512xf32>
    %31 = arith.maximumf %29, %30 : vector<8x512xf32>
    %c0_23 = arith.constant 0 : index
    %c0_24 = arith.constant 0 : index
    %32 = vector.load %arg5[%c0_23, %c0_24] : memref<512x512xf32, #tpu.memory_space<vmem>>, vector<512x512xf32>
    %cst_25 = arith.constant dense<0.000000e+00> : vector<8x512xf32>
    %33 = tpu.matmul %31, %32, %cst_25 {dimension_numbers = #tpu.dot_dimension_numbers<[1], [0], [0], [1], [0, 0, 1, 1], [], []>} : vector<8x512xf32>, vector<512x512xf32>, vector<8x512xf32> -> vector<8x512xf32>
    %c0_26 = arith.constant 0 : index
    %c0_27 = arith.constant 0 : index
    %34 = vector.load %arg6[%c0_26, %c0_27] : memref<1x512xf32, #tpu.memory_space<vmem>>, vector<1x512xf32>
    %35 = vector.broadcast %34 : vector<1x512xf32> to vector<8x512xf32>
    %36 = arith.addf %33, %35 : vector<8x512xf32>
    %cst_28 = arith.constant dense<0.000000e+00> : vector<512xf32>
    %37 = vector.multi_reduction <add>, %36, %cst_28 [0] : vector<8x512xf32> to vector<512xf32>
    %38 = vector.shape_cast %37 : vector<512xf32> to vector<1x512xf32>
    %cst_29 = arith.constant 8.000000e+00 : f32
    %39 = vector.broadcast %cst_29 : f32 to vector<1x512xf32>
    %40 = arith.divf %38, %39 : vector<1x512xf32>
    %c0_30 = arith.constant 0 : index
    %c0_31 = arith.constant 0 : index
    %41 = vector.load %arg7[%c0_30, %c0_31] : memref<512x64xf32, #tpu.memory_space<vmem>>, vector<512x64xf32>
    %cst_32 = arith.constant dense<0.000000e+00> : vector<1x64xf32>
    %42 = tpu.matmul %40, %41, %cst_32 {dimension_numbers = #tpu.dot_dimension_numbers<[1], [0], [0], [1], [0, 0, 1, 1], [], []>} : vector<1x512xf32>, vector<512x64xf32>, vector<1x64xf32> -> vector<1x64xf32>
    %c0_33 = arith.constant 0 : index
    %c0_34 = arith.constant 0 : index
    %43 = vector.load %arg8[%c0_33, %c0_34] : memref<64x512xf32, #tpu.memory_space<vmem>>, vector<64x512xf32>
    %cst_35 = arith.constant dense<0.000000e+00> : vector<1x512xf32>
    %44 = tpu.matmul %42, %43, %cst_35 {dimension_numbers = #tpu.dot_dimension_numbers<[1], [0], [0], [1], [0, 0, 1, 1], [], []>} : vector<1x64xf32>, vector<64x512xf32>, vector<1x512xf32> -> vector<1x512xf32>
    %45 = vector.broadcast %44 : vector<1x512xf32> to vector<8x512xf32>
    %46 = arith.subf %36, %45 : vector<8x512xf32>
    %47 = arith.mulf %46, %46 : vector<8x512xf32>
    %cst_36 = arith.constant dense<0.000000e+00> : vector<512xf32>
    %48 = vector.multi_reduction <add>, %47, %cst_36 [0] : vector<8x512xf32> to vector<512xf32>
    %49 = vector.shape_cast %48 : vector<512xf32> to vector<1x512xf32>
    %cst_37 = arith.constant 8.000000e+00 : f32
    %50 = vector.broadcast %cst_37 : f32 to vector<1x512xf32>
    %51 = arith.divf %49, %50 : vector<1x512xf32>
    %c0_38 = arith.constant 0 : index
    %c0_39 = arith.constant 0 : index
    %52 = vector.load %arg7[%c0_38, %c0_39] : memref<512x64xf32, #tpu.memory_space<vmem>>, vector<512x64xf32>
    %cst_40 = arith.constant dense<0.000000e+00> : vector<1x64xf32>
    %53 = tpu.matmul %51, %52, %cst_40 {dimension_numbers = #tpu.dot_dimension_numbers<[1], [0], [0], [1], [0, 0, 1, 1], [], []>} : vector<1x512xf32>, vector<512x64xf32>, vector<1x64xf32> -> vector<1x64xf32>
    %c0_41 = arith.constant 0 : index
    %c0_42 = arith.constant 0 : index
    %54 = vector.load %arg8[%c0_41, %c0_42] : memref<64x512xf32, #tpu.memory_space<vmem>>, vector<64x512xf32>
    %cst_43 = arith.constant dense<0.000000e+00> : vector<1x512xf32>
    %55 = tpu.matmul %53, %54, %cst_43 {dimension_numbers = #tpu.dot_dimension_numbers<[1], [0], [0], [1], [0, 0, 1, 1], [], []>} : vector<1x64xf32>, vector<64x512xf32>, vector<1x512xf32> -> vector<1x512xf32>
    %cst_44 = arith.constant 9.99999974E-6 : f32
    %56 = vector.broadcast %cst_44 : f32 to vector<1x512xf32>
    %57 = arith.addf %55, %56 : vector<1x512xf32>
    %58 = math.rsqrt %57 : vector<1x512xf32>
    %59 = vector.broadcast %58 : vector<1x512xf32> to vector<8x512xf32>
    %60 = arith.mulf %46, %59 : vector<8x512xf32>
    %cst_45 = arith.constant 0.000000e+00 : f32
    %61 = vector.broadcast %cst_45 : f32 to vector<8x512xf32>
    %62 = arith.maximumf %60, %61 : vector<8x512xf32>
    %c0_46 = arith.constant 0 : index
    %c0_47 = arith.constant 0 : index
    %63 = vector.load %arg9[%c0_46, %c0_47] : memref<512x512xf32, #tpu.memory_space<vmem>>, vector<512x512xf32>
    %cst_48 = arith.constant dense<0.000000e+00> : vector<8x512xf32>
    %64 = tpu.matmul %62, %63, %cst_48 {dimension_numbers = #tpu.dot_dimension_numbers<[1], [0], [0], [1], [0, 0, 1, 1], [], []>} : vector<8x512xf32>, vector<512x512xf32>, vector<8x512xf32> -> vector<8x512xf32>
    %c0_49 = arith.constant 0 : index
    %c0_50 = arith.constant 0 : index
    %65 = vector.load %arg10[%c0_49, %c0_50] : memref<1x512xf32, #tpu.memory_space<vmem>>, vector<1x512xf32>
    %66 = vector.broadcast %65 : vector<1x512xf32> to vector<8x512xf32>
    %67 = arith.addf %64, %66 : vector<8x512xf32>
    %cst_51 = arith.constant dense<0.000000e+00> : vector<512xf32>
    %68 = vector.multi_reduction <add>, %67, %cst_51 [0] : vector<8x512xf32> to vector<512xf32>
    %69 = vector.shape_cast %68 : vector<512xf32> to vector<1x512xf32>
    %cst_52 = arith.constant 8.000000e+00 : f32
    %70 = vector.broadcast %cst_52 : f32 to vector<1x512xf32>
    %71 = arith.divf %69, %70 : vector<1x512xf32>
    %c0_53 = arith.constant 0 : index
    %c0_54 = arith.constant 0 : index
    %72 = vector.load %arg11[%c0_53, %c0_54] : memref<512x128xf32, #tpu.memory_space<vmem>>, vector<512x128xf32>
    %cst_55 = arith.constant dense<0.000000e+00> : vector<1x128xf32>
    %73 = tpu.matmul %71, %72, %cst_55 {dimension_numbers = #tpu.dot_dimension_numbers<[1], [0], [0], [1], [0, 0, 1, 1], [], []>} : vector<1x512xf32>, vector<512x128xf32>, vector<1x128xf32> -> vector<1x128xf32>
    %c0_56 = arith.constant 0 : index
    %c0_57 = arith.constant 0 : index
    %74 = vector.load %arg12[%c0_56, %c0_57] : memref<128x512xf32, #tpu.memory_space<vmem>>, vector<128x512xf32>
    %cst_58 = arith.constant dense<0.000000e+00> : vector<1x512xf32>
    %75 = tpu.matmul %73, %74, %cst_58 {dimension_numbers = #tpu.dot_dimension_numbers<[1], [0], [0], [1], [0, 0, 1, 1], [], []>} : vector<1x128xf32>, vector<128x512xf32>, vector<1x512xf32> -> vector<1x512xf32>
    %76 = vector.broadcast %75 : vector<1x512xf32> to vector<8x512xf32>
    %77 = arith.subf %67, %76 : vector<8x512xf32>
    %78 = arith.mulf %77, %77 : vector<8x512xf32>
    %cst_59 = arith.constant dense<0.000000e+00> : vector<512xf32>
    %79 = vector.multi_reduction <add>, %78, %cst_59 [0] : vector<8x512xf32> to vector<512xf32>
    %80 = vector.shape_cast %79 : vector<512xf32> to vector<1x512xf32>
    %cst_60 = arith.constant 8.000000e+00 : f32
    %81 = vector.broadcast %cst_60 : f32 to vector<1x512xf32>
    %82 = arith.divf %80, %81 : vector<1x512xf32>
    %c0_61 = arith.constant 0 : index
    %c0_62 = arith.constant 0 : index
    %83 = vector.load %arg11[%c0_61, %c0_62] : memref<512x128xf32, #tpu.memory_space<vmem>>, vector<512x128xf32>
    %cst_63 = arith.constant dense<0.000000e+00> : vector<1x128xf32>
    %84 = tpu.matmul %82, %83, %cst_63 {dimension_numbers = #tpu.dot_dimension_numbers<[1], [0], [0], [1], [0, 0, 1, 1], [], []>} : vector<1x512xf32>, vector<512x128xf32>, vector<1x128xf32> -> vector<1x128xf32>
    %c0_64 = arith.constant 0 : index
    %c0_65 = arith.constant 0 : index
    %85 = vector.load %arg12[%c0_64, %c0_65] : memref<128x512xf32, #tpu.memory_space<vmem>>, vector<128x512xf32>
    %cst_66 = arith.constant dense<0.000000e+00> : vector<1x512xf32>
    %86 = tpu.matmul %84, %85, %cst_66 {dimension_numbers = #tpu.dot_dimension_numbers<[1], [0], [0], [1], [0, 0, 1, 1], [], []>} : vector<1x128xf32>, vector<128x512xf32>, vector<1x512xf32> -> vector<1x512xf32>
    %cst_67 = arith.constant 9.99999974E-6 : f32
    %87 = vector.broadcast %cst_67 : f32 to vector<1x512xf32>
    %88 = arith.addf %86, %87 : vector<1x512xf32>
    %89 = math.rsqrt %88 : vector<1x512xf32>
    %90 = vector.broadcast %89 : vector<1x512xf32> to vector<8x512xf32>
    %91 = arith.mulf %77, %90 : vector<8x512xf32>
    %cst_68 = arith.constant 0.000000e+00 : f32
    %92 = vector.broadcast %cst_68 : f32 to vector<8x512xf32>
    %93 = arith.maximumf %91, %92 : vector<8x512xf32>
    %c0_69 = arith.constant 0 : index
    %c0_70 = arith.constant 0 : index
    %94 = vector.load %arg13[%c0_69, %c0_70] : memref<512x512xf32, #tpu.memory_space<vmem>>, vector<512x512xf32>
    %cst_71 = arith.constant dense<0.000000e+00> : vector<8x512xf32>
    %95 = tpu.matmul %93, %94, %cst_71 {dimension_numbers = #tpu.dot_dimension_numbers<[1], [0], [0], [1], [0, 0, 1, 1], [], []>} : vector<8x512xf32>, vector<512x512xf32>, vector<8x512xf32> -> vector<8x512xf32>
    %c0_72 = arith.constant 0 : index
    %c0_73 = arith.constant 0 : index
    %96 = vector.load %arg14[%c0_72, %c0_73] : memref<1x512xf32, #tpu.memory_space<vmem>>, vector<1x512xf32>
    %97 = vector.broadcast %96 : vector<1x512xf32> to vector<8x512xf32>
    %98 = arith.addf %95, %97 : vector<8x512xf32>
    %cst_74 = arith.constant dense<0.000000e+00> : vector<512xf32>
    %99 = vector.multi_reduction <add>, %98, %cst_74 [0] : vector<8x512xf32> to vector<512xf32>
    %100 = vector.shape_cast %99 : vector<512xf32> to vector<1x512xf32>
    %cst_75 = arith.constant 8.000000e+00 : f32
    %101 = vector.broadcast %cst_75 : f32 to vector<1x512xf32>
    %102 = arith.divf %100, %101 : vector<1x512xf32>
    %c0_76 = arith.constant 0 : index
    %c0_77 = arith.constant 0 : index
    %103 = vector.load %arg15[%c0_76, %c0_77] : memref<512x256xf32, #tpu.memory_space<vmem>>, vector<512x256xf32>
    %cst_78 = arith.constant dense<0.000000e+00> : vector<1x256xf32>
    %104 = tpu.matmul %102, %103, %cst_78 {dimension_numbers = #tpu.dot_dimension_numbers<[1], [0], [0], [1], [0, 0, 1, 1], [], []>} : vector<1x512xf32>, vector<512x256xf32>, vector<1x256xf32> -> vector<1x256xf32>
    %c0_79 = arith.constant 0 : index
    %c0_80 = arith.constant 0 : index
    %105 = vector.load %arg16[%c0_79, %c0_80] : memref<256x512xf32, #tpu.memory_space<vmem>>, vector<256x512xf32>
    %cst_81 = arith.constant dense<0.000000e+00> : vector<1x512xf32>
    %106 = tpu.matmul %104, %105, %cst_81 {dimension_numbers = #tpu.dot_dimension_numbers<[1], [0], [0], [1], [0, 0, 1, 1], [], []>} : vector<1x256xf32>, vector<256x512xf32>, vector<1x512xf32> -> vector<1x512xf32>
    %107 = vector.broadcast %106 : vector<1x512xf32> to vector<8x512xf32>
    %108 = arith.subf %98, %107 : vector<8x512xf32>
    %109 = arith.mulf %108, %108 : vector<8x512xf32>
    %cst_82 = arith.constant dense<0.000000e+00> : vector<512xf32>
    %110 = vector.multi_reduction <add>, %109, %cst_82 [0] : vector<8x512xf32> to vector<512xf32>
    %111 = vector.shape_cast %110 : vector<512xf32> to vector<1x512xf32>
    %cst_83 = arith.constant 8.000000e+00 : f32
    %112 = vector.broadcast %cst_83 : f32 to vector<1x512xf32>
    %113 = arith.divf %111, %112 : vector<1x512xf32>
    %c0_84 = arith.constant 0 : index
    %c0_85 = arith.constant 0 : index
    %114 = vector.load %arg15[%c0_84, %c0_85] : memref<512x256xf32, #tpu.memory_space<vmem>>, vector<512x256xf32>
    %cst_86 = arith.constant dense<0.000000e+00> : vector<1x256xf32>
    %115 = tpu.matmul %113, %114, %cst_86 {dimension_numbers = #tpu.dot_dimension_numbers<[1], [0], [0], [1], [0, 0, 1, 1], [], []>} : vector<1x512xf32>, vector<512x256xf32>, vector<1x256xf32> -> vector<1x256xf32>
    %c0_87 = arith.constant 0 : index
    %c0_88 = arith.constant 0 : index
    %116 = vector.load %arg16[%c0_87, %c0_88] : memref<256x512xf32, #tpu.memory_space<vmem>>, vector<256x512xf32>
    %cst_89 = arith.constant dense<0.000000e+00> : vector<1x512xf32>
    %117 = tpu.matmul %115, %116, %cst_89 {dimension_numbers = #tpu.dot_dimension_numbers<[1], [0], [0], [1], [0, 0, 1, 1], [], []>} : vector<1x256xf32>, vector<256x512xf32>, vector<1x512xf32> -> vector<1x512xf32>
    %cst_90 = arith.constant 9.99999974E-6 : f32
    %118 = vector.broadcast %cst_90 : f32 to vector<1x512xf32>
    %119 = arith.addf %117, %118 : vector<1x512xf32>
    %120 = math.rsqrt %119 : vector<1x512xf32>
    %121 = vector.broadcast %120 : vector<1x512xf32> to vector<8x512xf32>
    %122 = arith.mulf %108, %121 : vector<8x512xf32>
    %cst_91 = arith.constant 0.000000e+00 : f32
    %123 = vector.broadcast %cst_91 : f32 to vector<8x512xf32>
    %124 = arith.maximumf %122, %123 : vector<8x512xf32>
    %c0_92 = arith.constant 0 : index
    %c0_93 = arith.constant 0 : index
    %125 = vector.load %arg17[%c0_92, %c0_93] : memref<512x10xf32, #tpu.memory_space<vmem>>, vector<512x10xf32>
    %cst_94 = arith.constant dense<0.000000e+00> : vector<8x10xf32>
    %126 = tpu.matmul %124, %125, %cst_94 {dimension_numbers = #tpu.dot_dimension_numbers<[1], [0], [0], [1], [0, 0, 1, 1], [], []>} : vector<8x512xf32>, vector<512x10xf32>, vector<8x10xf32> -> vector<8x10xf32>
    %c0_95 = arith.constant 0 : index
    %c0_96 = arith.constant 0 : index
    %127 = vector.load %arg18[%c0_95, %c0_96] : memref<1x10xf32, #tpu.memory_space<vmem>>, vector<1x10xf32>
    %128 = vector.broadcast %127 : vector<1x10xf32> to vector<8x10xf32>
    %129 = arith.addf %126, %128 : vector<8x10xf32>
    %c0_97 = arith.constant 0 : index
    %c0_98 = arith.constant 0 : index
    %130 = vector.load %arg19[%c0_97, %c0_98] : memref<8x10xf32, #tpu.memory_space<vmem>>, vector<8x10xf32>
    tpu.vector_store %arg19[%c0_97, %c0_98], %129 {strides = array<i32>} : memref<8x10xf32, #tpu.memory_space<vmem>>, vector<8x10xf32>,
    return
  }
}

</mosaic_0001>

<llo_original>
// kernel: tpu_custom_call.1
$region0: #{tpu_custom_call.1}
  #allocation0 [shape = 'u32[]', space=smem, size = 0x4, offset = 0x4, fixed_abs, tag = 'smem constant byte address 0x4 - core index']
  #allocation1 [shape = 'u32[144,128]{1,0:T(1,128)}', space=vmem, size = 0x12000, scoped, tag = 'internal scratch']
  %s0 = inlined_call_operand.vmem [shape: f32[8,32], index: 0, kind: input, shape index: {}]
  %s1 = inlined_call_operand.vmem [shape: f32[32,512], index: 1, kind: input, shape index: {}]
  %s2 = inlined_call_operand.vmem [shape: f32[1,512], index: 2, kind: input, shape index: {}]
  %s3 = inlined_call_operand.vmem [shape: f32[512,32], index: 3, kind: input, shape index: {}]
  %s4 = inlined_call_operand.hbm [shape: f32[32,512], index: 4, kind: input, shape index: {}]
  %s5 = inlined_call_operand.hbm [shape: f32[512,512], index: 5, kind: input, shape index: {}]
  %s6 = inlined_call_operand.vmem [shape: f32[1,512], index: 6, kind: input, shape index: {}]
  %s7 = inlined_call_operand.vmem [shape: f32[512,64], index: 7, kind: input, shape index: {}]
  %s8 = inlined_call_operand.vmem [shape: f32[64,512], index: 8, kind: input, shape index: {}]
  %s9 = inlined_call_operand.hbm [shape: f32[512,512], index: 9, kind: input, shape index: {}]
  %s10 = inlined_call_operand.vmem [shape: f32[1,512], index: 10, kind: input, shape index: {}]
  %s11 = inlined_call_operand.vmem [shape: f32[512,128], index: 11, kind: input, shape index: {}]
  %s12 = inlined_call_operand.hbm [shape: f32[128,512], index: 12, kind: input, shape index: {}]
  %s13 = inlined_call_operand.hbm [shape: f32[512,512], index: 13, kind: input, shape index: {}]
  %s14 = inlined_call_operand.vmem [shape: f32[1,512], index: 14, kind: input, shape index: {}]
  %s15 = inlined_call_operand.vmem [shape: f32[512,256], index: 15, kind: input, shape index: {}]
  %s16 = inlined_call_operand.hbm [shape: f32[256,512], index: 16, kind: input, shape index: {}]
  %s17 = inlined_call_operand.vmem [shape: f32[512,10], index: 17, kind: input, shape index: {}]
  %s18 = inlined_call_operand.vmem [shape: f32[1,10], index: 18, kind: input, shape index: {}]
  %s19 = inlined_call_operand.hbm [shape: f32[8,10], index: 19, kind: output, shape index: {}]
  %s20 = sld [smem:[#allocation0]]
  $region110: #{tpu_custom_call.1} parent=0
    _
  %s22 = ssub.s32 1, %s20
  %s23 = scalar_select 0, %s22, %s20
  $region1: #{tpu_custom_call.1} parent=0
    #allocation2 [shape = 'u8[65536]{0}', space=vmem, size = 0x10000, scoped, tag = 'input window, operand 4, single buffered']
    #allocation3 [shape = 's32[1]{0}', space=sflag, size = 0x4, scoped, tag = 'scoped memory for tpu_custom_call.1']
    #allocation4 [shape = 's32[1]{0}', space=sflag, size = 0x4, scoped, tag = 'scoped memory for tpu_custom_call.1']
    #allocation5 [shape = 'u8[1048576]{0}', space=vmem, size = 0x100000, scoped, tag = 'input window, operand 5, single buffered']
    #allocation6 [shape = 's32[1]{0}', space=sflag, size = 0x4, scoped, tag = 'scoped memory for tpu_custom_call.1']
    #allocation7 [shape = 'u8[1048576]{0}', space=vmem, size = 0x100000, scoped, tag = 'input window, operand 9, single buffered']
    #allocation8 [shape = 'u8[262144]{0}', space=vmem, size = 0x40000, scoped, tag = 'input window, operand 12, single buffered']
    #allocation9 [shape = 's32[1]{0}', space=sflag, size = 0x4, scoped, tag = 'scoped memory for tpu_custom_call.1']
    #allocation10 [shape = 'u8[1048576]{0}', space=vmem, size = 0x100000, scoped, tag = 'input window, operand 13, single buffered']
    #allocation11 [shape = 'u8[524288]{0}', space=vmem, size = 0x80000, scoped, tag = 'input window, operand 16, single buffered']
    #allocation12 [shape = 's32[1]{0}', space=sflag, size = 0x4, scoped, tag = 'scoped memory for tpu_custom_call.1']
    #allocation13 [shape = 'u8[4096]{0}', space=vmem, size = 0x1000, scoped, tag = 'output window, operand 0, single buffered']
    %24 = vsyncpa [#allocation3], 0
    %25 = vsyncpa [#allocation6], 0
    %26 = vsyncpa [#allocation9], 0
    %27 = vsyncpa [#allocation12], 0
    %28 = vsyncpa [#allocation4], 0
    // Predicated region
    $region2: #{tpu_custom_call.1} parent=1 // pred_check
      _
    $region3: #{tpu_custom_call.1} parent=1 // pred_check_branch
      %30 = sbr.rel (0) target = $region5
    $region4: #{tpu_custom_call.1} parent=1 // pred_region
      _
    $region5: #{tpu_custom_call.1} parent=1 // pred_fallthru
      _
    // Predicated region
    $region6: #{tpu_custom_call.1} parent=1 // pred_check
      _
    $region7: #{tpu_custom_call.1} parent=1 // pred_check_branch
      %32 = sbr.rel (0) target = $region9
    $region8: #{tpu_custom_call.1} parent=1 // pred_region
      _
    $region9: #{tpu_custom_call.1} parent=1 // pred_fallthru
      _
    // Predicated region
    $region10: #{tpu_custom_call.1} parent=1 // pred_check
      _
    $region11: #{tpu_custom_call.1} parent=1 // pred_check_branch
      %34 = sbr.rel (0) target = $region13
    $region12: #{tpu_custom_call.1} parent=1 // pred_region
      _
    $region13: #{tpu_custom_call.1} parent=1 // pred_fallthru
      _
    // Predicated region
    $region14: #{tpu_custom_call.1} parent=1 // pred_check
      _
    $region15: #{tpu_custom_call.1} parent=1 // pred_check_branch
      %36 = sbr.rel (0) target = $region17
    $region16: #{tpu_custom_call.1} parent=1 // pred_region
      _
    $region17: #{tpu_custom_call.1} parent=1 // pred_fallthru
      _
    // Predicated region
    $region18: #{tpu_custom_call.1} parent=1 // pred_check
      _
    $region19: #{tpu_custom_call.1} parent=1 // pred_check_branch
      %38 = sbr.rel (0) target = $region21
    $region20: #{tpu_custom_call.1} parent=1 // pred_region
      %s40 = ssub.s32 2048, 2048
      %41 = vsyncadd [#allocation3], %s40
      %s42 = sshll.u32 [#allocation2], 4
      %s43 = int_to_ptr.vmem [resolvable:$true] %s42
      %48 = dma.hbm_to_vmem [thread:$0]  %s4, 2048, %s43, [#allocation3], 512, 512, 32
    $region21: #{tpu_custom_call.1} parent=1 // pred_fallthru
      _
    // Predicated region
    $region22: #{tpu_custom_call.1} parent=1 // pred_check
      _
    $region23: #{tpu_custom_call.1} parent=1 // pred_check_branch
      %50 = sbr.rel (0) target = $region25
    $region24: #{tpu_custom_call.1} parent=1 // pred_region
      %s52 = ssub.s32 32768, 32768
      %53 = vsyncadd [#allocation6], %s52
      %s54 = sshll.u32 [#allocation5], 4
      %s55 = int_to_ptr.vmem [resolvable:$true] %s54
      %60 = dma.hbm_to_vmem [thread:$0]  %s5, 32768, %s55, [#allocation6], 512, 512, 32
    $region25: #{tpu_custom_call.1} parent=1 // pred_fallthru
      _
    // Predicated region
    $region26: #{tpu_custom_call.1} parent=1 // pred_check
      _
    $region27: #{tpu_custom_call.1} parent=1 // pred_check_branch
      %62 = sbr.rel (0) target = $region29
    $region28: #{tpu_custom_call.1} parent=1 // pred_region
      _
    $region29: #{tpu_custom_call.1} parent=1 // pred_fallthru
      _
    // Predicated region
    $region30: #{tpu_custom_call.1} parent=1 // pred_check
      _
    $region31: #{tpu_custom_call.1} parent=1 // pred_check_branch
      %64 = sbr.rel (0) target = $region33
    $region32: #{tpu_custom_call.1} parent=1 // pred_region
      _
    $region33: #{tpu_custom_call.1} parent=1 // pred_fallthru
      _
    // Predicated region
    $region34: #{tpu_custom_call.1} parent=1 // pred_check
      _
    $region35: #{tpu_custom_call.1} parent=1 // pred_check_branch
      %66 = sbr.rel (0) target = $region37
    $region36: #{tpu_custom_call.1} parent=1 // pred_region
      _
    $region37: #{tpu_custom_call.1} parent=1 // pred_fallthru
      _
    // Predicated region
    $region38: #{tpu_custom_call.1} parent=1 // pred_check
      _
    $region39: #{tpu_custom_call.1} parent=1 // pred_check_branch
      %68 = sbr.rel (0) target = $region41
    $region40: #{tpu_custom_call.1} parent=1 // pred_region
      %s70 = ssub.s32 32768, 32768
      %71 = vsyncadd [#allocation6], %s70
      %s72 = sshll.u32 [#allocation7], 4
      %s73 = int_to_ptr.vmem [resolvable:$true] %s72
      %78 = dma.hbm_to_vmem [thread:$0]  %s9, 32768, %s73, [#allocation6], 512, 512, 32
    $region41: #{tpu_custom_call.1} parent=1 // pred_fallthru
      _
    // Predicated region
    $region42: #{tpu_custom_call.1} parent=1 // pred_check
      _
    $region43: #{tpu_custom_call.1} parent=1 // pred_check_branch
      %80 = sbr.rel (0) target = $region45
    $region44: #{tpu_custom_call.1} parent=1 // pred_region
      _
    $region45: #{tpu_custom_call.1} parent=1 // pred_fallthru
      _
    // Predicated region
    $region46: #{tpu_custom_call.1} parent=1 // pred_check
      _
    $region47: #{tpu_custom_call.1} parent=1 // pred_check_branch
      %82 = sbr.rel (0) target = $region49
    $region48: #{tpu_custom_call.1} parent=1 // pred_region
      _
    $region49: #{tpu_custom_call.1} parent=1 // pred_fallthru
      _
    // Predicated region
    $region50: #{tpu_custom_call.1} parent=1 // pred_check
      _
    $region51: #{tpu_custom_call.1} parent=1 // pred_check_branch
      %84 = sbr.rel (0) target = $region53
    $region52: #{tpu_custom_call.1} parent=1 // pred_region
      %s86 = ssub.s32 8192, 8192
      %87 = vsyncadd [#allocation9], %s86
      %s88 = sshll.u32 [#allocation8], 4
      %s89 = int_to_ptr.vmem [resolvable:$true] %s88
      %94 = dma.hbm_to_vmem [thread:$0]  %s12, 8192, %s89, [#allocation9], 512, 512, 32
    $region53: #{tpu_custom_call.1} parent=1 // pred_fallthru
      _
    // Predicated region
    $region54: #{tpu_custom_call.1} parent=1 // pred_check
      _
    $region55: #{tpu_custom_call.1} parent=1 // pred_check_branch
      %96 = sbr.rel (0) target = $region57
    $region56: #{tpu_custom_call.1} parent=1 // pred_region
      %s98 = ssub.s32 32768, 32768
      %99 = vsyncadd [#allocation9], %s98
      %s100 = sshll.u32 [#allocation10], 4
      %s101 = int_to_ptr.vmem [resolvable:$true] %s100
      %106 = dma.hbm_to_vmem [thread:$0]  %s13, 32768, %s101, [#allocation9], 512, 512, 32
    $region57: #{tpu_custom_call.1} parent=1 // pred_fallthru
      _
    // Predicated region
    $region58: #{tpu_custom_call.1} parent=1 // pred_check
      _
    $region59: #{tpu_custom_call.1} parent=1 // pred_check_branch
      %108 = sbr.rel (0) target = $region61
    $region60: #{tpu_custom_call.1} parent=1 // pred_region
      _
    $region61: #{tpu_custom_call.1} parent=1 // pred_fallthru
      _
    // Predicated region
    $region62: #{tpu_custom_call.1} parent=1 // pred_check
      _
    $region63: #{tpu_custom_call.1} parent=1 // pred_check_branch
      %110 = sbr.rel (0) target = $region65
    $region64: #{tpu_custom_call.1} parent=1 // pred_region
      _
    $region65: #{tpu_custom_call.1} parent=1 // pred_fallthru
      _
    // Predicated region
    $region66: #{tpu_custom_call.1} parent=1 // pred_check
      _
    $region67: #{tpu_custom_call.1} parent=1 // pred_check_branch
      %112 = sbr.rel (0) target = $region69
    $region68: #{tpu_custom_call.1} parent=1 // pred_region
      %s114 = ssub.s32 16384, 16384
      %115 = vsyncadd [#allocation12], %s114
      %s116 = sshll.u32 [#allocation11], 4
      %s117 = int_to_ptr.vmem [resolvable:$true] %s116
      %122 = dma.hbm_to_vmem [thread:$0]  %s16, 16384, %s117, [#allocation12], 512, 512, 32
    $region69: #{tpu_custom_call.1} parent=1 // pred_fallthru
      _
    // Predicated region
    $region70: #{tpu_custom_call.1} parent=1 // pred_check
      _
    $region71: #{tpu_custom_call.1} parent=1 // pred_check_branch
      %124 = sbr.rel (0) target = $region73
    $region72: #{tpu_custom_call.1} parent=1 // pred_region
      _
    $region73: #{tpu_custom_call.1} parent=1 // pred_fallthru
      _
    // Predicated region
    $region74: #{tpu_custom_call.1} parent=1 // pred_check
      _
    $region75: #{tpu_custom_call.1} parent=1 // pred_check_branch
      %126 = sbr.rel (0) target = $region77
    $region76: #{tpu_custom_call.1} parent=1 // pred_region
      _
    $region77: #{tpu_custom_call.1} parent=1 // pred_fallthru
      _
    // Predicated region
    $region78: #{tpu_custom_call.1} parent=1 // pred_check
      _
    $region79: #{tpu_custom_call.1} parent=1 // pred_check_branch
      %128 = sbr.rel (0) target = $region81
    $region80: #{tpu_custom_call.1} parent=1 // pred_region
      %129 = dma.done [#allocation3], 2048
    $region81: #{tpu_custom_call.1} parent=1 // pred_fallthru
      _
    // Predicated region
    $region82: #{tpu_custom_call.1} parent=1 // pred_check
      _
    $region83: #{tpu_custom_call.1} parent=1 // pred_check_branch
      %131 = sbr.rel (0) target = $region85
    $region84: #{tpu_custom_call.1} parent=1 // pred_region
      %132 = dma.done [#allocation6], 32768
    $region85: #{tpu_custom_call.1} parent=1 // pred_fallthru
      _
    // Predicated region
    $region86: #{tpu_custom_call.1} parent=1 // pred_check
      _
    $region87: #{tpu_custom_call.1} parent=1 // pred_check_branch
      %134 = sbr.rel (0) target = $region89
    $region88: #{tpu_custom_call.1} parent=1 // pred_region
      %135 = dma.done [#allocation6], 32768
    $region89: #{tpu_custom_call.1} parent=1 // pred_fallthru
      _
    // Predicated region
    $region90: #{tpu_custom_call.1} parent=1 // pred_check
      _
    $region91: #{tpu_custom_call.1} parent=1 // pred_check_branch
      %137 = sbr.rel (0) target = $region93
    $region92: #{tpu_custom_call.1} parent=1 // pred_region
      %138 = dma.done [#allocation9], 8192
    $region93: #{tpu_custom_call.1} parent=1 // pred_fallthru
      _
    // Predicated region
    $region94: #{tpu_custom_call.1} parent=1 // pred_check
      _
    $region95: #{tpu_custom_call.1} parent=1 // pred_check_branch
      %140 = sbr.rel (0) target = $region97
    $region96: #{tpu_custom_call.1} parent=1 // pred_region
      %141 = dma.done [#allocation9], 32768
    $region97: #{tpu_custom_call.1} parent=1 // pred_fallthru
      _
    // Predicated region
    $region98: #{tpu_custom_call.1} parent=1 // pred_check
      _
    $region99: #{tpu_custom_call.1} parent=1 // pred_check_branch
      %143 = sbr.rel (0) target = $region101
    $region100: #{tpu_custom_call.1} parent=1 // pred_region
      %144 = dma.done [#allocation12], 16384
    $region101: #{tpu_custom_call.1} parent=1 // pred_fallthru
      _
    %v145 = vld [vmem:[%s0] sm:$0xff]
    %v146 = vld [vmem:[%s1] sm:$0xff]
    %v147 = vld [vmem:[%s1 + $0x8] sm:$0xff]
    %v148 = vld [vmem:[%s1 + $0x10] sm:$0xff]
    %v149 = vld [vmem:[%s1 + $0x18] sm:$0xff]
    %v150 = vld [vmem:[%s1 + $0x20] sm:$0xff]
    %v151 = vld [vmem:[%s1 + $0x28] sm:$0xff]
    %v152 = vld [vmem:[%s1 + $0x30] sm:$0xff]
    %v153 = vld [vmem:[%s1 + $0x38] sm:$0xff]
    %v154 = vld [vmem:[%s1 + $0x40] sm:$0xff]
    %v155 = vld [vmem:[%s1 + $0x48] sm:$0xff]
    %v156 = vld [vmem:[%s1 + $0x50] sm:$0xff]
    %v157 = vld [vmem:[%s1 + $0x58] sm:$0xff]
    %v158 = vld [vmem:[%s1 + $0x60] sm:$0xff]
    %v159 = vld [vmem:[%s1 + $0x68] sm:$0xff]
    %v160 = vld [vmem:[%s1 + $0x70] sm:$0xff]
    %v161 = vld [vmem:[%s1 + $0x78] sm:$0xff]
    %v162 = vld [vmem:[%s2] sm:$0xf]
    %v164 = vlaneseq
    %v165 = vshrl.u32 %v164, 7
    %v166 = vsub.s32 0, %v165
    %v167 = vrot.slane %v162, %v166
    %v168 = vlaneseq
    %v169 = vshrl.u32 %v168, 7
    %v170 = vsub.s32 1, %v169
    %v171 = vrot.slane %v162, %v170
    %v172 = vlaneseq
    %v173 = vshrl.u32 %v172, 7
    %v174 = vsub.s32 2, %v173
    %v175 = vrot.slane %v162, %v174
    %v176 = vlaneseq
    %v177 = vshrl.u32 %v176, 7
    %v178 = vsub.s32 3, %v177
    %v179 = vrot.slane %v162, %v178
    %vm184 = vcmask 261120
    %v186 = vsel %vm184, %v145, 0
    %188 = vmatprep.subr.mxu0 %v147
    %189 = vmatpush1.msra.mxu0 %v146
    %190 = vmatprep.subr.mxu0 %v151
    %191 = vmatpush1.msra.mxu0 %v150
    %192 = vmatprep.subr.mxu0 %v155
    %193 = vmatpush1.msra.mxu0 %v154
    %194 = vmatprep.subr.mxu0 %v159
    %195 = vmatpush1.msra.mxu0 %v158
    %196 = vmatprep.subr.mxu0 0.0
    %197 = vmatpush1.msra.mxu0 0.0
    %198 = vmatprep.subr.mxu0 0.0
    %199 = vmatpush1.msra.mxu0 0.0
    %200 = vmatprep.subr.mxu0 0.0
    %201 = vmatpush1.msra.mxu0 0.0
    %202 = vmatprep.subr.mxu0 0.0
    %203 = vmatpush1.msra.mxu0 0.0
    %204 = vmatprep.subr.mxu0 0.0
    %205 = vmatpush1.msra.mxu0 0.0
    %206 = vmatprep.subr.mxu0 0.0
    %207 = vmatpush1.msra.mxu0 0.0
    %208 = vmatprep.subr.mxu0 0.0
    %209 = vmatpush1.msra.mxu0 0.0
    %210 = vmatprep.subr.mxu0 0.0
    %211 = vmatpush1.msra.mxu0 0.0
    %212 = vmatprep.subr.mxu0 0.0
    %213 = vmatpush1.msra.mxu0 0.0
    %214 = vmatprep.subr.mxu0 0.0
    %215 = vmatpush1.msra.mxu0 0.0
    %216 = vmatprep.subr.mxu0 0.0
    %217 = vmatpush1.msra.mxu0 0.0
    %218 = vmatprep.subr.mxu0 0.0
    %219 = vmatpush1.msra.mxu0 0.0
    %220 = vmatprep.subr.mxu0 0.0
    %221 = vmatpush1.msra.mxu0 0.0
    %222 = vmatprep.subr.mxu0 0.0
    %223 = vmatpush1.msra.mxu0 0.0
    %224 = vmatprep.subr.mxu0 0.0
    %225 = vmatpush1.msra.mxu0 0.0
    %226 = vmatprep.subr.mxu0 0.0
    %227 = vmatpush1.msra.mxu0 0.0
    %228 = vmatprep.subr.mxu0 0.0
    %229 = vmatpush1.msra.mxu0 0.0
    %230 = vmatprep.subr.mxu0 0.0
    %231 = vmatpush1.msra.mxu0 0.0
    %232 = vmatprep.subr.mxu0 0.0
    %233 = vmatpush1.msra.mxu0 0.0
    %234 = vmatprep.subr.mxu0 0.0
    %235 = vmatpush1.msra.mxu0 0.0
    %236 = vmatprep.subr.mxu0 0.0
    %237 = vmatpush1.msra.mxu0 0.0
    %238 = vmatprep.subr.mxu0 0.0
    %239 = vmatpush1.msra.mxu0 0.0
    %240 = vmatprep.subr.mxu0 0.0
    %241 = vmatpush1.msra.mxu0 0.0
    %242 = vmatprep.subr.mxu0 0.0
    %243 = vmatpush1.msra.mxu0 0.0
    %244 = vmatprep.subr.mxu0 0.0
    %245 = vmatpush1.msra.mxu0 0.0
    %246 = vmatprep.subr.mxu0 0.0
    %247 = vmatpush1.msra.mxu0 0.0
    %248 = vmatprep.subr.mxu0 0.0
    %249 = vmatpush1.msra.mxu0 0.0
    %250 = vmatprep.subr.mxu0 0.0
    %251 = vmatpush1.msra.mxu0 0.0
    %252 = vmatprep.mubr.f32.mxu0 0.0
    %253 = vmatmul.mubr.f32.gmra.mrb[0].mxu0 %v186
    %v254 = vpop.f32.mrb[0].mxu0
    %v255 = vadd.f32 %v167, %v254
    %v256 = vpop.f32.mrb[0].mxu0
    %v257 = vadd.f32 %v171, %v256
    %258 = vdwg.mxu0
    %259 = vmatprep.subr.mxu0 %v149
    %260 = vmatpush1.msra.mxu0 %v148
    %261 = vmatprep.subr.mxu0 %v153
    %262 = vmatpush1.msra.mxu0 %v152
    %263 = vmatprep.subr.mxu0 %v157
    %264 = vmatpush1.msra.mxu0 %v156
    %265 = vmatprep.subr.mxu0 %v161
    %266 = vmatpush1.msra.mxu0 %v160
    %267 = vmatprep.subr.mxu0 0.0
    %268 = vmatpush1.msra.mxu0 0.0
    %269 = vmatprep.subr.mxu0 0.0
    %270 = vmatpush1.msra.mxu0 0.0
    %271 = vmatprep.subr.mxu0 0.0
    %272 = vmatpush1.msra.mxu0 0.0
    %273 = vmatprep.subr.mxu0 0.0
    %274 = vmatpush1.msra.mxu0 0.0
    %275 = vmatprep.subr.mxu0 0.0
    %276 = vmatpush1.msra.mxu0 0.0
    %277 = vmatprep.subr.mxu0 0.0
    %278 = vmatpush1.msra.mxu0 0.0
    %279 = vmatprep.subr.mxu0 0.0
    %280 = vmatpush1.msra.mxu0 0.0
    %281 = vmatprep.subr.mxu0 0.0
    %282 = vmatpush1.msra.mxu0 0.0
    %283 = vmatprep.subr.mxu0 0.0
    %284 = vmatpush1.msra.mxu0 0.0
    %285 = vmatprep.subr.mxu0 0.0
    %286 = vmatpush1.msra.mxu0 0.0
    %287 = vmatprep.subr.mxu0 0.0
    %288 = vmatpush1.msra.mxu0 0.0
    %289 = vmatprep.subr.mxu0 0.0
    %290 = vmatpush1.msra.mxu0 0.0
    %291 = vmatprep.subr.mxu0 0.0
    %292 = vmatpush1.msra.mxu0 0.0
    %293 = vmatprep.subr.mxu0 0.0
    %294 = vmatpush1.msra.mxu0 0.0
    %295 = vmatprep.subr.mxu0 0.0
    %296 = vmatpush1.msra.mxu0 0.0
    %297 = vmatprep.subr.mxu0 0.0
    %298 = vmatpush1.msra.mxu0 0.0
    %299 = vmatprep.subr.mxu0 0.0
    %300 = vmatpush1.msra.mxu0 0.0
    %301 = vmatprep.subr.mxu0 0.0
    %302 = vmatpush1.msra.mxu0 0.0
    %303 = vmatprep.subr.mxu0 0.0
    %304 = vmatpush1.msra.mxu0 0.0
    %305 = vmatprep.subr.mxu0 0.0
    %306 = vmatpush1.msra.mxu0 0.0
    %307 = vmatprep.subr.mxu0 0.0
    %308 = vmatpush1.msra.mxu0 0.0
    %309 = vmatprep.subr.mxu0 0.0
    %310 = vmatpush1.msra.mxu0 0.0
    %311 = vmatprep.subr.mxu0 0.0
    %312 = vmatpush1.msra.mxu0 0.0
    %313 = vmatprep.subr.mxu0 0.0
    %314 = vmatpush1.msra.mxu0 0.0
    %315 = vmatprep.subr.mxu0 0.0
    %316 = vmatpush1.msra.mxu0 0.0
    %317 = vmatprep.subr.mxu0 0.0
    %318 = vmatpush1.msra.mxu0 0.0
    %319 = vmatprep.subr.mxu0 0.0
    %320 = vmatpush1.msra.mxu0 0.0
    %321 = vmatprep.subr.mxu0 0.0
    %322 = vmatpush1.msra.mxu0 0.0
    %323 = vmatprep.mubr.f32.mxu0 0.0
    %324 = vmatmul.mubr.f32.gmra.mrb[0].mxu0 %v186
    %v325 = vpop.f32.mrb[0].mxu0
    %v326 = vadd.f32 %v175, %v325
    %v327 = vpop.f32.mrb[0].mxu0
    %v328 = vadd.f32 %v179, %v327
    %329 = vdwg.mxu0
    %v330 = vrot.slane %v255, 4
    %v331 = vadd.f32 %v255, %v330
    %v332 = vrot.slane %v331, 2
    %v333 = vadd.f32 %v331, %v332
    %v334 = vrot.slane %v333, 1
    %v335 = vadd.f32 %v333, %v334
    %v336 = vrot.slane %v257, 4
    %v337 = vadd.f32 %v257, %v336
    %v338 = vrot.slane %v337, 2
    %v339 = vadd.f32 %v337, %v338
    %v340 = vrot.slane %v339, 1
    %v341 = vadd.f32 %v339, %v340
    %v342 = vrot.slane %v326, 4
    %v343 = vadd.f32 %v326, %v342
    %v344 = vrot.slane %v343, 2
    %v345 = vadd.f32 %v343, %v344
    %v346 = vrot.slane %v345, 1
    %v347 = vadd.f32 %v345, %v346
    %v348 = vrot.slane %v328, 4
    %v349 = vadd.f32 %v328, %v348
    %v350 = vrot.slane %v349, 2
    %v351 = vadd.f32 %v349, %v350
    %v352 = vrot.slane %v351, 1
    %v353 = vadd.f32 %v351, %v352
    %v354 = vrcp.pop 8.0
    %v355 = vmul.f32 %v335, %v354
    %v356 = vmul.f32 %v341, %v354
    %v357 = vmul.f32 %v347, %v354
    %v358 = vmul.f32 %v353, %v354
    %v359 = vld [vmem:[%s3] sm:$0xff]
    %v360 = vld [vmem:[%s3 + $0x8] sm:$0xff]
    %v361 = vld [vmem:[%s3 + $0x10] sm:$0xff]
    %v362 = vld [vmem:[%s3 + $0x18] sm:$0xff]
    %v363 = vld [vmem:[%s3 + $0x20] sm:$0xff]
    %v364 = vld [vmem:[%s3 + $0x28] sm:$0xff]
    %v365 = vld [vmem:[%s3 + $0x30] sm:$0xff]
    %v366 = vld [vmem:[%s3 + $0x38] sm:$0xff]
    %v367 = vld [vmem:[%s3 + $0x40] sm:$0xff]
    %v368 = vld [vmem:[%s3 + $0x48] sm:$0xff]
    %v369 = vld [vmem:[%s3 + $0x50] sm:$0xff]
    %v370 = vld [vmem:[%s3 + $0x58] sm:$0xff]
    %v371 = vld [vmem:[%s3 + $0x60] sm:$0xff]
    %v372 = vld [vmem:[%s3 + $0x68] sm:$0xff]
    %v373 = vld [vmem:[%s3 + $0x70] sm:$0xff]
    %v374 = vld [vmem:[%s3 + $0x78] sm:$0xff]
    %v375 = vld [vmem:[%s3 + $0x80] sm:$0xff]
    %v376 = vld [vmem:[%s3 + $0x88] sm:$0xff]
    %v377 = vld [vmem:[%s3 + $0x90] sm:$0xff]
    %v378 = vld [vmem:[%s3 + $0x98] sm:$0xff]
    %v379 = vld [vmem:[%s3 + $0xa0] sm:$0xff]
    %v380 = vld [vmem:[%s3 + $0xa8] sm:$0xff]
    %v381 = vld [vmem:[%s3 + $0xb0] sm:$0xff]
    %v382 = vld [vmem:[%s3 + $0xb8] sm:$0xff]
    %v383 = vld [vmem:[%s3 + $0xc0] sm:$0xff]
    %v384 = vld [vmem:[%s3 + $0xc8] sm:$0xff]
    %v385 = vld [vmem:[%s3 + $0xd0] sm:$0xff]
    %v386 = vld [vmem:[%s3 + $0xd8] sm:$0xff]
    %v387 = vld [vmem:[%s3 + $0xe0] sm:$0xff]
    %v388 = vld [vmem:[%s3 + $0xe8] sm:$0xff]
    %v389 = vld [vmem:[%s3 + $0xf0] sm:$0xff]
    %v390 = vld [vmem:[%s3 + $0xf8] sm:$0xff]
    %v391 = vld [vmem:[%s3 + $0x100] sm:$0xff]
    %v392 = vld [vmem:[%s3 + $0x108] sm:$0xff]
    %v393 = vld [vmem:[%s3 + $0x110] sm:$0xff]
    %v394 = vld [vmem:[%s3 + $0x118] sm:$0xff]
    %v395 = vld [vmem:[%s3 + $0x120] sm:$0xff]
    %v396 = vld [vmem:[%s3 + $0x128] sm:$0xff]
    %v397 = vld [vmem:[%s3 + $0x130] sm:$0xff]
    %v398 = vld [vmem:[%s3 + $0x138] sm:$0xff]
    %v399 = vld [vmem:[%s3 + $0x140] sm:$0xff]
    %v400 = vld [vmem:[%s3 + $0x148] sm:$0xff]
    %v401 = vld [vmem:[%s3 + $0x150] sm:$0xff]
    %v402 = vld [vmem:[%s3 + $0x158] sm:$0xff]
    %v403 = vld [vmem:[%s3 + $0x160] sm:$0xff]
    %v404 = vld [vmem:[%s3 + $0x168] sm:$0xff]
    %v405 = vld [vmem:[%s3 + $0x170] sm:$0xff]
    %v406 = vld [vmem:[%s3 + $0x178] sm:$0xff]
    %v407 = vld [vmem:[%s3 + $0x180] sm:$0xff]
    %v408 = vld [vmem:[%s3 + $0x188] sm:$0xff]
    %v409 = vld [vmem:[%s3 + $0x190] sm:$0xff]
    %v410 = vld [vmem:[%s3 + $0x198] sm:$0xff]
    %v411 = vld [vmem:[%s3 + $0x1a0] sm:$0xff]
    %v412 = vld [vmem:[%s3 + $0x1a8] sm:$0xff]
    %v413 = vld [vmem:[%s3 + $0x1b0] sm:$0xff]
    %v414 = vld [vmem:[%s3 + $0x1b8] sm:$0xff]
    %v415 = vld [vmem:[%s3 + $0x1c0] sm:$0xff]
    %v416 = vld [vmem:[%s3 + $0x1c8] sm:$0xff]
    %v417 = vld [vmem:[%s3 + $0x1d0] sm:$0xff]
    %v418 = vld [vmem:[%s3 + $0x1d8] sm:$0xff]
    %v419 = vld [vmem:[%s3 + $0x1e0] sm:$0xff]
    %v420 = vld [vmem:[%s3 + $0x1e8] sm:$0xff]
    %v421 = vld [vmem:[%s3 + $0x1f0] sm:$0xff]
    %v422 = vld [vmem:[%s3 + $0x1f8] sm:$0xff]
    %423 = vmatprep.subr.mxu0 0.0
    %424 = vmatpush1.msra.mxu0 %v359
    %425 = vmatprep.subr.mxu0 0.0
    %426 = vmatpush1.msra.mxu0 %v360
    %427 = vmatprep.subr.mxu0 0.0
    %428 = vmatpush1.msra.mxu0 %v361
    %429 = vmatprep.subr.mxu0 0.0
    %430 = vmatpush1.msra.mxu0 %v362
    %431 = vmatprep.subr.mxu0 0.0
    %432 = vmatpush1.msra.mxu0 %v363
    %433 = vmatprep.subr.mxu0 0.0
    %434 = vmatpush1.msra.mxu0 %v364
    %435 = vmatprep.subr.mxu0 0.0
    %436 = vmatpush1.msra.mxu0 %v365
    %437 = vmatprep.subr.mxu0 0.0
    %438 = vmatpush1.msra.mxu0 %v366
    %439 = vmatprep.subr.mxu0 0.0
    %440 = vmatpush1.msra.mxu0 %v367
    %441 = vmatprep.subr.mxu0 0.0
    %442 = vmatpush1.msra.mxu0 %v368
    %443 = vmatprep.subr.mxu0 0.0
    %444 = vmatpush1.msra.mxu0 %v369
    %445 = vmatprep.subr.mxu0 0.0
    %446 = vmatpush1.msra.mxu0 %v370
    %447 = vmatprep.subr.mxu0 0.0
    %448 = vmatpush1.msra.mxu0 %v371
    %449 = vmatprep.subr.mxu0 0.0
    %450 = vmatpush1.msra.mxu0 %v372
    %451 = vmatprep.subr.mxu0 0.0
    %452 = vmatpush1.msra.mxu0 %v373
    %453 = vmatprep.subr.mxu0 0.0
    %454 = vmatpush1.msra.mxu0 %v374
    %455 = vmatprep.subr.mxu0 0.0
    %456 = vmatpush1.msra.mxu0 %v375
    %457 = vmatprep.subr.mxu0 0.0
    %458 = vmatpush1.msra.mxu0 %v376
    %459 = vmatprep.subr.mxu0 0.0
    %460 = vmatpush1.msra.mxu0 %v377
    %461 = vmatprep.subr.mxu0 0.0
    %462 = vmatpush1.msra.mxu0 %v378
    %463 = vmatprep.subr.mxu0 0.0
    %464 = vmatpush1.msra.mxu0 %v379
    %465 = vmatprep.subr.mxu0 0.0
    %466 = vmatpush1.msra.mxu0 %v380
    %467 = vmatprep.subr.mxu0 0.0
    %468 = vmatpush1.msra.mxu0 %v381
    %469 = vmatprep.subr.mxu0 0.0
    %470 = vmatpush1.msra.mxu0 %v382
    %471 = vmatprep.subr.mxu0 0.0
    %472 = vmatpush1.msra.mxu0 %v383
    %473 = vmatprep.subr.mxu0 0.0
    %474 = vmatpush1.msra.mxu0 %v384
    %475 = vmatprep.subr.mxu0 0.0
    %476 = vmatpush1.msra.mxu0 %v385
    %477 = vmatprep.subr.mxu0 0.0
    %478 = vmatpush1.msra.mxu0 %v386
    %479 = vmatprep.subr.mxu0 0.0
    %480 = vmatpush1.msra.mxu0 %v387
    %481 = vmatprep.subr.mxu0 0.0
    %482 = vmatpush1.msra.mxu0 %v388
    %483 = vmatprep.subr.mxu0 0.0
    %484 = vmatpush1.msra.mxu0 %v389
    %485 = vmatprep.subr.mxu0 0.0
    %486 = vmatpush1.msra.mxu0 %v390
    %487 = vmatprep.mubr.f32.mxu0 %v356
    %488 = vmatmul.mubr.f32.gmra.mrb[0].mxu0 %v355
    %v489 = vpop.f32.mrb[0].mxu0
    %v490 = vadd.f32 0.0, %v489
    %v491 = vpop.f32.mrb[0].mxu0
    %492 = vdwg.mxu0
    %493 = vmatprep.subr.mxu0 0.0
    %494 = vmatpush1.msra.mxu0 %v391
    %495 = vmatprep.subr.mxu0 0.0
    %496 = vmatpush1.msra.mxu0 %v392
    %497 = vmatprep.subr.mxu0 0.0
    %498 = vmatpush1.msra.mxu0 %v393
    %499 = vmatprep.subr.mxu0 0.0
    %500 = vmatpush1.msra.mxu0 %v394
    %501 = vmatprep.subr.mxu0 0.0
    %502 = vmatpush1.msra.mxu0 %v395
    %503 = vmatprep.subr.mxu0 0.0
    %504 = vmatpush1.msra.mxu0 %v396
    %505 = vmatprep.subr.mxu0 0.0
    %506 = vmatpush1.msra.mxu0 %v397
    %507 = vmatprep.subr.mxu0 0.0
    %508 = vmatpush1.msra.mxu0 %v398
    %509 = vmatprep.subr.mxu0 0.0
    %510 = vmatpush1.msra.mxu0 %v399
    %511 = vmatprep.subr.mxu0 0.0
    %512 = vmatpush1.msra.mxu0 %v400
    %513 = vmatprep.subr.mxu0 0.0
    %514 = vmatpush1.msra.mxu0 %v401
    %515 = vmatprep.subr.mxu0 0.0
    %516 = vmatpush1.msra.mxu0 %v402
    %517 = vmatprep.subr.mxu0 0.0
    %518 = vmatpush1.msra.mxu0 %v403
    %519 = vmatprep.subr.mxu0 0.0
    %520 = vmatpush1.msra.mxu0 %v404
    %521 = vmatprep.subr.mxu0 0.0
    %522 = vmatpush1.msra.mxu0 %v405
    %523 = vmatprep.subr.mxu0 0.0
    %524 = vmatpush1.msra.mxu0 %v406
    %525 = vmatprep.subr.mxu0 0.0
    %526 = vmatpush1.msra.mxu0 %v407
    %527 = vmatprep.subr.mxu0 0.0
    %528 = vmatpush1.msra.mxu0 %v408
    %529 = vmatprep.subr.mxu0 0.0
    %530 = vmatpush1.msra.mxu0 %v409
    %531 = vmatprep.subr.mxu0 0.0
    %532 = vmatpush1.msra.mxu0 %v410
    %533 = vmatprep.subr.mxu0 0.0
    %534 = vmatpush1.msra.mxu0 %v411
    %535 = vmatprep.subr.mxu0 0.0
    %536 = vmatpush1.msra.mxu0 %v412
    %537 = vmatprep.subr.mxu0 0.0
    %538 = vmatpush1.msra.mxu0 %v413
    %539 = vmatprep.subr.mxu0 0.0
    %540 = vmatpush1.msra.mxu0 %v414
    %541 = vmatprep.subr.mxu0 0.0
    %542 = vmatpush1.msra.mxu0 %v415
    %543 = vmatprep.subr.mxu0 0.0
    %544 = vmatpush1.msra.mxu0 %v416
    %545 = vmatprep.subr.mxu0 0.0
    %546 = vmatpush1.msra.mxu0 %v417
    %547 = vmatprep.subr.mxu0 0.0
    %548 = vmatpush1.msra.mxu0 %v418
    %549 = vmatprep.subr.mxu0 0.0
    %550 = vmatpush1.msra.mxu0 %v419
    %551 = vmatprep.subr.mxu0 0.0
    %552 = vmatpush1.msra.mxu0 %v420
    %553 = vmatprep.subr.mxu0 0.0
    %554 = vmatpush1.msra.mxu0 %v421
    %555 = vmatprep.subr.mxu0 0.0
    %556 = vmatpush1.msra.mxu0 %v422
    %557 = vmatprep.mubr.f32.mxu0 %v358
    %558 = vmatmul.mubr.f32.gmra.mrb[0].mxu0 %v357
    %v559 = vpop.f32.mrb[0].mxu0
    %v560 = vadd.f32 %v490, %v559
    %v561 = vpop.f32.mrb[0].mxu0
    %562 = vdwg.mxu0
    %v563 = vld [vmem:[#allocation2] sm:$0xff]
    %v564 = vld [vmem:[#allocation2 + $0x8] sm:$0xff]
    %v565 = vld [vmem:[#allocation2 + $0x10] sm:$0xff]
    %v566 = vld [vmem:[#allocation2 + $0x18] sm:$0xff]
    %v567 = vld [vmem:[#allocation2 + $0x20] sm:$0xff]
    %v568 = vld [vmem:[#allocation2 + $0x28] sm:$0xff]
    %v569 = vld [vmem:[#allocation2 + $0x30] sm:$0xff]
    %v570 = vld [vmem:[#allocation2 + $0x38] sm:$0xff]
    %v571 = vld [vmem:[#allocation2 + $0x40] sm:$0xff]
    %v572 = vld [vmem:[#allocation2 + $0x48] sm:$0xff]
    %v573 = vld [vmem:[#allocation2 + $0x50] sm:$0xff]
    %v574 = vld [vmem:[#allocation2 + $0x58] sm:$0xff]
    %v575 = vld [vmem:[#allocation2 + $0x60] sm:$0xff]
    %v576 = vld [vmem:[#allocation2 + $0x68] sm:$0xff]
    %v577 = vld [vmem:[#allocation2 + $0x70] sm:$0xff]
    %v578 = vld [vmem:[#allocation2 + $0x78] sm:$0xff]
    %v580 = vsel %vm184, %v560, 0
    %582 = vmatprep.subr.mxu0 %v564
    %583 = vmatpush1.msra.mxu0 %v563
    %584 = vmatprep.subr.mxu0 %v568
    %585 = vmatpush1.msra.mxu0 %v567
    %586 = vmatprep.subr.mxu0 %v572
    %587 = vmatpush1.msra.mxu0 %v571
    %588 = vmatprep.subr.mxu0 %v576
    %589 = vmatpush1.msra.mxu0 %v575
    %590 = vmatprep.subr.mxu0 0.0
    %591 = vmatpush1.msra.mxu0 0.0
    %592 = vmatprep.subr.mxu0 0.0
    %593 = vmatpush1.msra.mxu0 0.0
    %594 = vmatprep.subr.mxu0 0.0
    %595 = vmatpush1.msra.mxu0 0.0
    %596 = vmatprep.subr.mxu0 0.0
    %597 = vmatpush1.msra.mxu0 0.0
    %598 = vmatprep.subr.mxu0 0.0
    %599 = vmatpush1.msra.mxu0 0.0
    %600 = vmatprep.subr.mxu0 0.0
    %601 = vmatpush1.msra.mxu0 0.0
    %602 = vmatprep.subr.mxu0 0.0
    %603 = vmatpush1.msra.mxu0 0.0
    %604 = vmatprep.subr.mxu0 0.0
    %605 = vmatpush1.msra.mxu0 0.0
    %606 = vmatprep.subr.mxu0 0.0
    %607 = vmatpush1.msra.mxu0 0.0
    %608 = vmatprep.subr.mxu0 0.0
    %609 = vmatpush1.msra.mxu0 0.0
    %610 = vmatprep.subr.mxu0 0.0
    %611 = vmatpush1.msra.mxu0 0.0
    %612 = vmatprep.subr.mxu0 0.0
    %613 = vmatpush1.msra.mxu0 0.0
    %614 = vmatprep.subr.mxu0 0.0
    %615 = vmatpush1.msra.mxu0 0.0
    %616 = vmatprep.subr.mxu0 0.0
    %617 = vmatpush1.msra.mxu0 0.0
    %618 = vmatprep.subr.mxu0 0.0
    %619 = vmatpush1.msra.mxu0 0.0
    %620 = vmatprep.subr.mxu0 0.0
    %621 = vmatpush1.msra.mxu0 0.0
    %622 = vmatprep.subr.mxu0 0.0
    %623 = vmatpush1.msra.mxu0 0.0
    %624 = vmatprep.subr.mxu0 0.0
    %625 = vmatpush1.msra.mxu0 0.0
    %626 = vmatprep.subr.mxu0 0.0
    %627 = vmatpush1.msra.mxu0 0.0
    %628 = vmatprep.subr.mxu0 0.0
    %629 = vmatpush1.msra.mxu0 0.0
    %630 = vmatprep.subr.mxu0 0.0
    %631 = vmatpush1.msra.mxu0 0.0
    %632 = vmatprep.subr.mxu0 0.0
    %633 = vmatpush1.msra.mxu0 0.0
    %634 = vmatprep.subr.mxu0 0.0
    %635 = vmatpush1.msra.mxu0 0.0
    %636 = vmatprep.subr.mxu0 0.0
    %637 = vmatpush1.msra.mxu0 0.0
    %638 = vmatprep.subr.mxu0 0.0
    %639 = vmatpush1.msra.mxu0 0.0
    %640 = vmatprep.subr.mxu0 0.0
    %641 = vmatpush1.msra.mxu0 0.0
    %642 = vmatprep.subr.mxu0 0.0
    %643 = vmatpush1.msra.mxu0 0.0
    %644 = vmatprep.subr.mxu0 0.0
    %645 = vmatpush1.msra.mxu0 0.0
    %646 = vmatprep.mubr.f32.mxu0 0.0
    %647 = vmatmul.mubr.f32.gmra.mrb[0].mxu0 %v580
    %v648 = vpop.f32.mrb[0].mxu0
    %v649 = vadd.f32 0.0, %v648
    %v650 = vpop.f32.mrb[0].mxu0
    %v651 = vadd.f32 0.0, %v650
    %652 = vdwg.mxu0
    %653 = vmatprep.subr.mxu0 %v566
    %654 = vmatpush1.msra.mxu0 %v565
    %655 = vmatprep.subr.mxu0 %v570
    %656 = vmatpush1.msra.mxu0 %v569
    %657 = vmatprep.subr.mxu0 %v574
    %658 = vmatpush1.msra.mxu0 %v573
    %659 = vmatprep.subr.mxu0 %v578
    %660 = vmatpush1.msra.mxu0 %v577
    %661 = vmatprep.subr.mxu0 0.0
    %662 = vmatpush1.msra.mxu0 0.0
    %663 = vmatprep.subr.mxu0 0.0
    %664 = vmatpush1.msra.mxu0 0.0
    %665 = vmatprep.subr.mxu0 0.0
    %666 = vmatpush1.msra.mxu0 0.0
    %667 = vmatprep.subr.mxu0 0.0
    %668 = vmatpush1.msra.mxu0 0.0
    %669 = vmatprep.subr.mxu0 0.0
    %670 = vmatpush1.msra.mxu0 0.0
    %671 = vmatprep.subr.mxu0 0.0
    %672 = vmatpush1.msra.mxu0 0.0
    %673 = vmatprep.subr.mxu0 0.0
    %674 = vmatpush1.msra.mxu0 0.0
    %675 = vmatprep.subr.mxu0 0.0
    %676 = vmatpush1.msra.mxu0 0.0
    %677 = vmatprep.subr.mxu0 0.0
    %678 = vmatpush1.msra.mxu0 0.0
    %679 = vmatprep.subr.mxu0 0.0
    %680 = vmatpush1.msra.mxu0 0.0
    %681 = vmatprep.subr.mxu0 0.0
    %682 = vmatpush1.msra.mxu0 0.0
    %683 = vmatprep.subr.mxu0 0.0
    %684 = vmatpush1.msra.mxu0 0.0
    %685 = vmatprep.subr.mxu0 0.0
    %686 = vmatpush1.msra.mxu0 0.0
    %687 = vmatprep.subr.mxu0 0.0
    %688 = vmatpush1.msra.mxu0 0.0
    %689 = vmatprep.subr.mxu0 0.0
    %690 = vmatpush1.msra.mxu0 0.0
    %691 = vmatprep.subr.mxu0 0.0
    %692 = vmatpush1.msra.mxu0 0.0
    %693 = vmatprep.subr.mxu0 0.0
    %694 = vmatpush1.msra.mxu0 0.0
    %695 = vmatprep.subr.mxu0 0.0
    %696 = vmatpush1.msra.mxu0 0.0
    %697 = vmatprep.subr.mxu0 0.0
    %698 = vmatpush1.msra.mxu0 0.0
    %699 = vmatprep.subr.mxu0 0.0
    %700 = vmatpush1.msra.mxu0 0.0
    %701 = vmatprep.subr.mxu0 0.0
    %702 = vmatpush1.msra.mxu0 0.0
    %703 = vmatprep.subr.mxu0 0.0
    %704 = vmatpush1.msra.mxu0 0.0
    %705 = vmatprep.subr.mxu0 0.0
    %706 = vmatpush1.msra.mxu0 0.0
    %707 = vmatprep.subr.mxu0 0.0
    %708 = vmatpush1.msra.mxu0 0.0
    %709 = vmatprep.subr.mxu0 0.0
    %710 = vmatpush1.msra.mxu0 0.0
    %711 = vmatprep.subr.mxu0 0.0
    %712 = vmatpush1.msra.mxu0 0.0
    %713 = vmatprep.subr.mxu0 0.0
    %714 = vmatpush1.msra.mxu0 0.0
    %715 = vmatprep.subr.mxu0 0.0
    %716 = vmatpush1.msra.mxu0 0.0
    %717 = vmatprep.mubr.f32.mxu0 0.0
    %718 = vmatmul.mubr.f32.gmra.mrb[0].mxu0 %v580
    %v719 = vpop.f32.mrb[0].mxu0
    %v720 = vadd.f32 0.0, %v719
    %v721 = vpop.f32.mrb[0].mxu0
    %v722 = vadd.f32 0.0, %v721
    %723 = vdwg.mxu0
    %v724 = vlaneseq
    %v725 = vshrl.u32 %v724, 7
    %v726 = vsub.s32 0, %v725
    %v727 = vrot.slane %v649, %v726
    %v728 = vlaneseq
    %v729 = vshrl.u32 %v728, 7
    %v730 = vsub.s32 0, %v729
    %v731 = vrot.slane %v651, %v730
    %v732 = vlaneseq
    %v733 = vshrl.u32 %v732, 7
    %v734 = vsub.s32 0, %v733
    %v735 = vrot.slane %v720, %v734
    %v736 = vlaneseq
    %v737 = vshrl.u32 %v736, 7
    %v738 = vsub.s32 0, %v737
    %v739 = vrot.slane %v722, %v738
    %v740 = vsub.f32 %v255, %v727
    %v741 = vsub.f32 %v257, %v731
    %v742 = vsub.f32 %v326, %v735
    %v743 = vsub.f32 %v328, %v739
    %v744 = vmul.f32 %v740, %v740
    %v745 = vmul.f32 %v741, %v741
    %v746 = vmul.f32 %v742, %v742
    %v747 = vmul.f32 %v743, %v743
    %v748 = vrot.slane %v744, 4
    %v749 = vadd.f32 %v744, %v748
    %v750 = vrot.slane %v749, 2
    %v751 = vadd.f32 %v749, %v750
    %v752 = vrot.slane %v751, 1
    %v753 = vadd.f32 %v751, %v752
    %v754 = vrot.slane %v745, 4
    %v755 = vadd.f32 %v745, %v754
    %v756 = vrot.slane %v755, 2
    %v757 = vadd.f32 %v755, %v756
    %v758 = vrot.slane %v757, 1
    %v759 = vadd.f32 %v757, %v758
    %v760 = vrot.slane %v746, 4
    %v761 = vadd.f32 %v746, %v760
    %v762 = vrot.slane %v761, 2
    %v763 = vadd.f32 %v761, %v762
    %v764 = vrot.slane %v763, 1
    %v765 = vadd.f32 %v763, %v764
    %v766 = vrot.slane %v747, 4
    %v767 = vadd.f32 %v747, %v766
    %v768 = vrot.slane %v767, 2
    %v769 = vadd.f32 %v767, %v768
    %v770 = vrot.slane %v769, 1
    %v771 = vadd.f32 %v769, %v770
    %v772 = vmul.f32 %v753, %v354
    %v773 = vmul.f32 %v759, %v354
    %v774 = vmul.f32 %v765, %v354
    %v775 = vmul.f32 %v771, %v354
    %776 = vmatprep.subr.mxu0 0.0
    %777 = vmatpush1.msra.mxu0 %v359
    %778 = vmatprep.subr.mxu0 0.0
    %779 = vmatpush1.msra.mxu0 %v360
    %780 = vmatprep.subr.mxu0 0.0
    %781 = vmatpush1.msra.mxu0 %v361
    %782 = vmatprep.subr.mxu0 0.0
    %783 = vmatpush1.msra.mxu0 %v362
    %784 = vmatprep.subr.mxu0 0.0
    %785 = vmatpush1.msra.mxu0 %v363
    %786 = vmatprep.subr.mxu0 0.0
    %787 = vmatpush1.msra.mxu0 %v364
    %788 = vmatprep.subr.mxu0 0.0
    %789 = vmatpush1.msra.mxu0 %v365
    %790 = vmatprep.subr.mxu0 0.0
    %791 = vmatpush1.msra.mxu0 %v366
    %792 = vmatprep.subr.mxu0 0.0
    %793 = vmatpush1.msra.mxu0 %v367
    %794 = vmatprep.subr.mxu0 0.0
    %795 = vmatpush1.msra.mxu0 %v368
    %796 = vmatprep.subr.mxu0 0.0
    %797 = vmatpush1.msra.mxu0 %v369
    %798 = vmatprep.subr.mxu0 0.0
    %799 = vmatpush1.msra.mxu0 %v370
    %800 = vmatprep.subr.mxu0 0.0
    %801 = vmatpush1.msra.mxu0 %v371
    %802 = vmatprep.subr.mxu0 0.0
    %803 = vmatpush1.msra.mxu0 %v372
    %804 = vmatprep.subr.mxu0 0.0
    %805 = vmatpush1.msra.mxu0 %v373
    %806 = vmatprep.subr.mxu0 0.0
    %807 = vmatpush1.msra.mxu0 %v374
    %808 = vmatprep.subr.mxu0 0.0
    %809 = vmatpush1.msra.mxu0 %v375
    %810 = vmatprep.subr.mxu0 0.0
    %811 = vmatpush1.msra.mxu0 %v376
    %812 = vmatprep.subr.mxu0 0.0
    %813 = vmatpush1.msra.mxu0 %v377
    %814 = vmatprep.subr.mxu0 0.0
    %815 = vmatpush1.msra.mxu0 %v378
    %816 = vmatprep.subr.mxu0 0.0
    %817 = vmatpush1.msra.mxu0 %v379
    %818 = vmatprep.subr.mxu0 0.0
    %819 = vmatpush1.msra.mxu0 %v380
    %820 = vmatprep.subr.mxu0 0.0
    %821 = vmatpush1.msra.mxu0 %v381
    %822 = vmatprep.subr.mxu0 0.0
    %823 = vmatpush1.msra.mxu0 %v382
    %824 = vmatprep.subr.mxu0 0.0
    %825 = vmatpush1.msra.mxu0 %v383
    %826 = vmatprep.subr.mxu0 0.0
    %827 = vmatpush1.msra.mxu0 %v384
    %828 = vmatprep.subr.mxu0 0.0
    %829 = vmatpush1.msra.mxu0 %v385
    %830 = vmatprep.subr.mxu0 0.0
    %831 = vmatpush1.msra.mxu0 %v386
    %832 = vmatprep.subr.mxu0 0.0
    %833 = vmatpush1.msra.mxu0 %v387
    %834 = vmatprep.subr.mxu0 0.0
    %835 = vmatpush1.msra.mxu0 %v388
    %836 = vmatprep.subr.mxu0 0.0
    %837 = vmatpush1.msra.mxu0 %v389
    %838 = vmatprep.subr.mxu0 0.0
    %839 = vmatpush1.msra.mxu0 %v390
    %840 = vmatprep.mubr.f32.mxu0 %v773
    %841 = vmatmul.mubr.f32.gmra.mrb[0].mxu0 %v772
    %v842 = vpop.f32.mrb[0].mxu0
    %v843 = vadd.f32 0.0, %v842
    %v844 = vpop.f32.mrb[0].mxu0
    %845 = vdwg.mxu0
    %846 = vmatprep.subr.mxu0 0.0
    %847 = vmatpush1.msra.mxu0 %v391
    %848 = vmatprep.subr.mxu0 0.0
    %849 = vmatpush1.msra.mxu0 %v392
    %850 = vmatprep.subr.mxu0 0.0
    %851 = vmatpush1.msra.mxu0 %v393
    %852 = vmatprep.subr.mxu0 0.0
    %853 = vmatpush1.msra.mxu0 %v394
    %854 = vmatprep.subr.mxu0 0.0
    %855 = vmatpush1.msra.mxu0 %v395
    %856 = vmatprep.subr.mxu0 0.0
    %857 = vmatpush1.msra.mxu0 %v396
    %858 = vmatprep.subr.mxu0 0.0
    %859 = vmatpush1.msra.mxu0 %v397
    %860 = vmatprep.subr.mxu0 0.0
    %861 = vmatpush1.msra.mxu0 %v398
    %862 = vmatprep.subr.mxu0 0.0
    %863 = vmatpush1.msra.mxu0 %v399
    %864 = vmatprep.subr.mxu0 0.0
    %865 = vmatpush1.msra.mxu0 %v400
    %866 = vmatprep.subr.mxu0 0.0
    %867 = vmatpush1.msra.mxu0 %v401
    %868 = vmatprep.subr.mxu0 0.0
    %869 = vmatpush1.msra.mxu0 %v402
    %870 = vmatprep.subr.mxu0 0.0
    %871 = vmatpush1.msra.mxu0 %v403
    %872 = vmatprep.subr.mxu0 0.0
    %873 = vmatpush1.msra.mxu0 %v404
    %874 = vmatprep.subr.mxu0 0.0
    %875 = vmatpush1.msra.mxu0 %v405
    %876 = vmatprep.subr.mxu0 0.0
    %877 = vmatpush1.msra.mxu0 %v406
    %878 = vmatprep.subr.mxu0 0.0
    %879 = vmatpush1.msra.mxu0 %v407
    %880 = vmatprep.subr.mxu0 0.0
    %881 = vmatpush1.msra.mxu0 %v408
    %882 = vmatprep.subr.mxu0 0.0
    %883 = vmatpush1.msra.mxu0 %v409
    %884 = vmatprep.subr.mxu0 0.0
    %885 = vmatpush1.msra.mxu0 %v410
    %886 = vmatprep.subr.mxu0 0.0
    %887 = vmatpush1.msra.mxu0 %v411
    %888 = vmatprep.subr.mxu0 0.0
    %889 = vmatpush1.msra.mxu0 %v412
    %890 = vmatprep.subr.mxu0 0.0
    %891 = vmatpush1.msra.mxu0 %v413
    %892 = vmatprep.subr.mxu0 0.0
    %893 = vmatpush1.msra.mxu0 %v414
    %894 = vmatprep.subr.mxu0 0.0
    %895 = vmatpush1.msra.mxu0 %v415
    %896 = vmatprep.subr.mxu0 0.0
    %897 = vmatpush1.msra.mxu0 %v416
    %898 = vmatprep.subr.mxu0 0.0
    %899 = vmatpush1.msra.mxu0 %v417
    %900 = vmatprep.subr.mxu0 0.0
    %901 = vmatpush1.msra.mxu0 %v418
    %902 = vmatprep.subr.mxu0 0.0
    %903 = vmatpush1.msra.mxu0 %v419
    %904 = vmatprep.subr.mxu0 0.0
    %905 = vmatpush1.msra.mxu0 %v420
    %906 = vmatprep.subr.mxu0 0.0
    %907 = vmatpush1.msra.mxu0 %v421
    %908 = vmatprep.subr.mxu0 0.0
    %909 = vmatpush1.msra.mxu0 %v422
    %910 = vmatprep.mubr.f32.mxu0 %v775
    %911 = vmatmul.mubr.f32.gmra.mrb[0].mxu0 %v774
    %v912 = vpop.f32.mrb[0].mxu0
    %v913 = vadd.f32 %v843, %v912
    %v914 = vpop.f32.mrb[0].mxu0
    %915 = vdwg.mxu0
    %v917 = vsel %vm184, %v913, 0
    %919 = vmatprep.subr.mxu0 %v564
    %920 = vmatpush1.msra.mxu0 %v563
    %921 = vmatprep.subr.mxu0 %v568
    %922 = vmatpush1.msra.mxu0 %v567
    %923 = vmatprep.subr.mxu0 %v572
    %924 = vmatpush1.msra.mxu0 %v571
    %925 = vmatprep.subr.mxu0 %v576
    %926 = vmatpush1.msra.mxu0 %v575
    %927 = vmatprep.subr.mxu0 0.0
    %928 = vmatpush1.msra.mxu0 0.0
    %929 = vmatprep.subr.mxu0 0.0
    %930 = vmatpush1.msra.mxu0 0.0
    %931 = vmatprep.subr.mxu0 0.0
    %932 = vmatpush1.msra.mxu0 0.0
    %933 = vmatprep.subr.mxu0 0.0
    %934 = vmatpush1.msra.mxu0 0.0
    %935 = vmatprep.subr.mxu0 0.0
    %936 = vmatpush1.msra.mxu0 0.0
    %937 = vmatprep.subr.mxu0 0.0
    %938 = vmatpush1.msra.mxu0 0.0
    %939 = vmatprep.subr.mxu0 0.0
    %940 = vmatpush1.msra.mxu0 0.0
    %941 = vmatprep.subr.mxu0 0.0
    %942 = vmatpush1.msra.mxu0 0.0
    %943 = vmatprep.subr.mxu0 0.0
    %944 = vmatpush1.msra.mxu0 0.0
    %945 = vmatprep.subr.mxu0 0.0
    %946 = vmatpush1.msra.mxu0 0.0
    %947 = vmatprep.subr.mxu0 0.0
    %948 = vmatpush1.msra.mxu0 0.0
    %949 = vmatprep.subr.mxu0 0.0
    %950 = vmatpush1.msra.mxu0 0.0
    %951 = vmatprep.subr.mxu0 0.0
    %952 = vmatpush1.msra.mxu0 0.0
    %953 = vmatprep.subr.mxu0 0.0
    %954 = vmatpush1.msra.mxu0 0.0
    %955 = vmatprep.subr.mxu0 0.0
    %956 = vmatpush1.msra.mxu0 0.0
    %957 = vmatprep.subr.mxu0 0.0
    %958 = vmatpush1.msra.mxu0 0.0
    %959 = vmatprep.subr.mxu0 0.0
    %960 = vmatpush1.msra.mxu0 0.0
    %961 = vmatprep.subr.mxu0 0.0
    %962 = vmatpush1.msra.mxu0 0.0
    %963 = vmatprep.subr.mxu0 0.0
    %964 = vmatpush1.msra.mxu0 0.0
    %965 = vmatprep.subr.mxu0 0.0
    %966 = vmatpush1.msra.mxu0 0.0
    %967 = vmatprep.subr.mxu0 0.0
    %968 = vmatpush1.msra.mxu0 0.0
    %969 = vmatprep.subr.mxu0 0.0
    %970 = vmatpush1.msra.mxu0 0.0
    %971 = vmatprep.subr.mxu0 0.0
    %972 = vmatpush1.msra.mxu0 0.0
    %973 = vmatprep.subr.mxu0 0.0
    %974 = vmatpush1.msra.mxu0 0.0
    %975 = vmatprep.subr.mxu0 0.0
    %976 = vmatpush1.msra.mxu0 0.0
    %977 = vmatprep.subr.mxu0 0.0
    %978 = vmatpush1.msra.mxu0 0.0
    %979 = vmatprep.subr.mxu0 0.0
    %980 = vmatpush1.msra.mxu0 0.0
    %981 = vmatprep.subr.mxu0 0.0
    %982 = vmatpush1.msra.mxu0 0.0
    %983 = vmatprep.mubr.f32.mxu0 0.0
    %984 = vmatmul.mubr.f32.gmra.mrb[0].mxu0 %v917
    %v985 = vpop.f32.mrb[0].mxu0
    %v986 = vadd.f32 1e-05, %v985
    %v987 = vpop.f32.mrb[0].mxu0
    %v988 = vadd.f32 1e-05, %v987
    %989 = vdwg.mxu0
    %990 = vmatprep.subr.mxu0 %v566
    %991 = vmatpush1.msra.mxu0 %v565
    %992 = vmatprep.subr.mxu0 %v570
    %993 = vmatpush1.msra.mxu0 %v569
    %994 = vmatprep.subr.mxu0 %v574
    %995 = vmatpush1.msra.mxu0 %v573
    %996 = vmatprep.subr.mxu0 %v578
    %997 = vmatpush1.msra.mxu0 %v577
    %998 = vmatprep.subr.mxu0 0.0
    %999 = vmatpush1.msra.mxu0 0.0
    %1000 = vmatprep.subr.mxu0 0.0
    %1001 = vmatpush1.msra.mxu0 0.0
    %1002 = vmatprep.subr.mxu0 0.0
    %1003 = vmatpush1.msra.mxu0 0.0
    %1004 = vmatprep.subr.mxu0 0.0
    %1005 = vmatpush1.msra.mxu0 0.0
    %1006 = vmatprep.subr.mxu0 0.0
    %1007 = vmatpush1.msra.mxu0 0.0
    %1008 = vmatprep.subr.mxu0 0.0
    %1009 = vmatpush1.msra.mxu0 0.0
    %1010 = vmatprep.subr.mxu0 0.0
    %1011 = vmatpush1.msra.mxu0 0.0
    %1012 = vmatprep.subr.mxu0 0.0
    %1013 = vmatpush1.msra.mxu0 0.0
    %1014 = vmatprep.subr.mxu0 0.0
    %1015 = vmatpush1.msra.mxu0 0.0
    %1016 = vmatprep.subr.mxu0 0.0
    %1017 = vmatpush1.msra.mxu0 0.0
    %1018 = vmatprep.subr.mxu0 0.0
    %1019 = vmatpush1.msra.mxu0 0.0
    %1020 = vmatprep.subr.mxu0 0.0
    %1021 = vmatpush1.msra.mxu0 0.0
    %1022 = vmatprep.subr.mxu0 0.0
    %1023 = vmatpush1.msra.mxu0 0.0
    %1024 = vmatprep.subr.mxu0 0.0
    %1025 = vmatpush1.msra.mxu0 0.0
    %1026 = vmatprep.subr.mxu0 0.0
    %1027 = vmatpush1.msra.mxu0 0.0
    %1028 = vmatprep.subr.mxu0 0.0
    %1029 = vmatpush1.msra.mxu0 0.0
    %1030 = vmatprep.subr.mxu0 0.0
    %1031 = vmatpush1.msra.mxu0 0.0
    %1032 = vmatprep.subr.mxu0 0.0
    %1033 = vmatpush1.msra.mxu0 0.0
    %1034 = vmatprep.subr.mxu0 0.0
    %1035 = vmatpush1.msra.mxu0 0.0
    %1036 = vmatprep.subr.mxu0 0.0
    %1037 = vmatpush1.msra.mxu0 0.0
    %1038 = vmatprep.subr.mxu0 0.0
    %1039 = vmatpush1.msra.mxu0 0.0
    %1040 = vmatprep.subr.mxu0 0.0
    %1041 = vmatpush1.msra.mxu0 0.0
    %1042 = vmatprep.subr.mxu0 0.0
    %1043 = vmatpush1.msra.mxu0 0.0
    %1044 = vmatprep.subr.mxu0 0.0
    %1045 = vmatpush1.msra.mxu0 0.0
    %1046 = vmatprep.subr.mxu0 0.0
    %1047 = vmatpush1.msra.mxu0 0.0
    %1048 = vmatprep.subr.mxu0 0.0
    %1049 = vmatpush1.msra.mxu0 0.0
    %1050 = vmatprep.subr.mxu0 0.0
    %1051 = vmatpush1.msra.mxu0 0.0
    %1052 = vmatprep.subr.mxu0 0.0
    %1053 = vmatpush1.msra.mxu0 0.0
    %1054 = vmatprep.mubr.f32.mxu0 0.0
    %1055 = vmatmul.mubr.f32.gmra.mrb[0].mxu0 %v917
    %v1056 = vpop.f32.mrb[0].mxu0
    %v1057 = vadd.f32 1e-05, %v1056
    %v1058 = vpop.f32.mrb[0].mxu0
    %v1059 = vadd.f32 1e-05, %v1058
    %1060 = vdwg.mxu0
    %v1061 = vrsqrt.pop %v986
    %v1062 = vrsqrt.pop %v988
    %v1063 = vrsqrt.pop %v1057
    %v1064 = vrsqrt.pop %v1059
    %v1065 = vlaneseq
    %v1066 = vshrl.u32 %v1065, 7
    %v1067 = vsub.s32 0, %v1066
    %v1068 = vrot.slane %v1061, %v1067
    %v1069 = vlaneseq
    %v1070 = vshrl.u32 %v1069, 7
    %v1071 = vsub.s32 0, %v1070
    %v1072 = vrot.slane %v1062, %v1071
    %v1073 = vlaneseq
    %v1074 = vshrl.u32 %v1073, 7
    %v1075 = vsub.s32 0, %v1074
    %v1076 = vrot.slane %v1063, %v1075
    %v1077 = vlaneseq
    %v1078 = vshrl.u32 %v1077, 7
    %v1079 = vsub.s32 0, %v1078
    %v1080 = vrot.slane %v1064, %v1079
    %v1081 = vmul.f32 %v740, %v1068
    %v1082 = vmul.f32 %v741, %v1072
    %v1083 = vmul.f32 %v742, %v1076
    %v1084 = vmul.f32 %v743, %v1080
    %v1085 = vmax.f32 %v1081, 0.0
    %v1086 = vmax.f32 %v1082, 0.0
    %v1087 = vmax.f32 %v1083, 0.0
    %v1088 = vmax.f32 %v1084, 0.0
    %v1089 = vld [vmem:[#allocation5] sm:$0xff]
    %v1090 = vld [vmem:[#allocation5 + $0x8] sm:$0xff]
    %v1091 = vld [vmem:[#allocation5 + $0x10] sm:$0xff]
    %v1092 = vld [vmem:[#allocation5 + $0x18] sm:$0xff]
    %v1093 = vld [vmem:[#allocation5 + $0x20] sm:$0xff]
    %v1094 = vld [vmem:[#allocation5 + $0x28] sm:$0xff]
    %v1095 = vld [vmem:[#allocation5 + $0x30] sm:$0xff]
    %v1096 = vld [vmem:[#allocation5 + $0x38] sm:$0xff]
    %v1097 = vld [vmem:[#allocation5 + $0x40] sm:$0xff]
    %v1098 = vld [vmem:[#allocation5 + $0x48] sm:$0xff]
    %v1099 = vld [vmem:[#allocation5 + $0x50] sm:$0xff]
    %v1100 = vld [vmem:[#allocation5 + $0x58] sm:$0xff]
    %v1101 = vld [vmem:[#allocation5 + $0x60] sm:$0xff]
    %v1102 = vld [vmem:[#allocation5 + $0x68] sm:$0xff]
    %v1103 = vld [vmem:[#allocation5 + $0x70] sm:$0xff]
    %v1104 = vld [vmem:[#allocation5 + $0x78] sm:$0xff]
    %v1105 = vld [vmem:[#allocation5 + $0x80] sm:$0xff]
    %v1106 = vld [vmem:[#allocation5 + $0x88] sm:$0xff]
    %v1107 = vld [vmem:[#allocation5 + $0x90] sm:$0xff]
    %v1108 = vld [vmem:[#allocation5 + $0x98] sm:$0xff]
    %v1109 = vld [vmem:[#allocation5 + $0xa0] sm:$0xff]
    %v1110 = vld [vmem:[#allocation5 + $0xa8] sm:$0xff]
    %v1111 = vld [vmem:[#allocation5 + $0xb0] sm:$0xff]
    %v1112 = vld [vmem:[#allocation5 + $0xb8] sm:$0xff]
    %v1113 = vld [vmem:[#allocation5 + $0xc0] sm:$0xff]
    %v1114 = vld [vmem:[#allocation5 + $0xc8] sm:$0xff]
    %v1115 = vld [vmem:[#allocation5 + $0xd0] sm:$0xff]
    %v1116 = vld [vmem:[#allocation5 + $0xd8] sm:$0xff]
    %v1117 = vld [vmem:[#allocation5 + $0xe0] sm:$0xff]
    %v1118 = vld [vmem:[#allocation5 + $0xe8] sm:$0xff]
    %v1119 = vld [vmem:[#allocation5 + $0xf0] sm:$0xff]
    %v1120 = vld [vmem:[#allocation5 + $0xf8] sm:$0xff]
    %v1121 = vld [vmem:[#allocation5 + $0x100] sm:$0xff]
    %v1122 = vld [vmem:[#allocation5 + $0x108] sm:$0xff]
    %v1123 = vld [vmem:[#allocation5 + $0x110] sm:$0xff]
    %v1124 = vld [vmem:[#allocation5 + $0x118] sm:$0xff]
    %v1125 = vld [vmem:[#allocation5 + $0x120] sm:$0xff]
    %v1126 = vld [vmem:[#allocation5 + $0x128] sm:$0xff]
    %v1127 = vld [vmem:[#allocation5 + $0x130] sm:$0xff]
    %v1128 = vld [vmem:[#allocation5 + $0x138] sm:$0xff]
    %v1129 = vld [vmem:[#allocation5 + $0x140] sm:$0xff]
    %v1130 = vld [vmem:[#allocation5 + $0x148] sm:$0xff]
    %v1131 = vld [vmem:[#allocation5 + $0x150] sm:$0xff]
    %v1132 = vld [vmem:[#allocation5 + $0x158] sm:$0xff]
    %v1133 = vld [vmem:[#allocation5 + $0x160] sm:$0xff]
    %v1134 = vld [vmem:[#allocation5 + $0x168] sm:$0xff]
    %v1135 = vld [vmem:[#allocation5 + $0x170] sm:$0xff]
    %v1136 = vld [vmem:[#allocation5 + $0x178] sm:$0xff]
    %v1137 = vld [vmem:[#allocation5 + $0x180] sm:$0xff]
    %v1138 = vld [vmem:[#allocation5 + $0x188] sm:$0xff]
    %v1139 = vld [vmem:[#allocation5 + $0x190] sm:$0xff]
    %v1140 = vld [vmem:[#allocation5 + $0x198] sm:$0xff]
    %v1141 = vld [vmem:[#allocation5 + $0x1a0] sm:$0xff]
    %v1142 = vld [vmem:[#allocation5 + $0x1a8] sm:$0xff]
    %v1143 = vld [vmem:[#allocation5 + $0x1b0] sm:$0xff]
    %v1144 = vld [vmem:[#allocation5 + $0x1b8] sm:$0xff]
    %v1145 = vld [vmem:[#allocation5 + $0x1c0] sm:$0xff]
    %v1146 = vld [vmem:[#allocation5 + $0x1c8] sm:$0xff]
    %v1147 = vld [vmem:[#allocation5 + $0x1d0] sm:$0xff]
    %v1148 = vld [vmem:[#allocation5 + $0x1d8] sm:$0xff]
    %v1149 = vld [vmem:[#allocation5 + $0x1e0] sm:$0xff]
    %v1150 = vld [vmem:[#allocation5 + $0x1e8] sm:$0xff]
    %v1151 = vld [vmem:[#allocation5 + $0x1f0] sm:$0xff]
    %v1152 = vld [vmem:[#allocation5 + $0x1f8] sm:$0xff]
    %v1153 = vld [vmem:[#allocation5 + $0x200] sm:$0xff]
    %v1154 = vld [vmem:[#allocation5 + $0x208] sm:$0xff]
    %v1155 = vld [vmem:[#allocation5 + $0x210] sm:$0xff]
    %v1156 = vld [vmem:[#allocation5 + $0x218] sm:$0xff]
    %v1157 = vld [vmem:[#allocation5 + $0x220] sm:$0xff]
    %v1158 = vld [vmem:[#allocation5 + $0x228] sm:$0xff]
    %v1159 = vld [vmem:[#allocation5 + $0x230] sm:$0xff]
    %v1160 = vld [vmem:[#allocation5 + $0x238] sm:$0xff]
    %v1161 = vld [vmem:[#allocation5 + $0x240] sm:$0xff]
    %v1162 = vld [vmem:[#allocation5 + $0x248] sm:$0xff]
    %v1163 = vld [vmem:[#allocation5 + $0x250] sm:$0xff]
    %v1164 = vld [vmem:[#allocation5 + $0x258] sm:$0xff]
    %v1165 = vld [vmem:[#allocation5 + $0x260] sm:$0xff]
    %v1166 = vld [vmem:[#allocation5 + $0x268] sm:$0xff]
    %v1167 = vld [vmem:[#allocation5 + $0x270] sm:$0xff]
    %v1168 = vld [vmem:[#allocation5 + $0x278] sm:$0xff]
    %v1169 = vld [vmem:[#allocation5 + $0x280] sm:$0xff]
    %v1170 = vld [vmem:[#allocation5 + $0x288] sm:$0xff]
    %v1171 = vld [vmem:[#allocation5 + $0x290] sm:$0xff]
    %v1172 = vld [vmem:[#allocation5 + $0x298] sm:$0xff]
    %v1173 = vld [vmem:[#allocation5 + $0x2a0] sm:$0xff]
    %v1174 = vld [vmem:[#allocation5 + $0x2a8] sm:$0xff]
    %v1175 = vld [vmem:[#allocation5 + $0x2b0] sm:$0xff]
    %v1176 = vld [vmem:[#allocation5 + $0x2b8] sm:$0xff]
    %v1177 = vld [vmem:[#allocation5 + $0x2c0] sm:$0xff]
    %v1178 = vld [vmem:[#allocation5 + $0x2c8] sm:$0xff]
    %v1179 = vld [vmem:[#allocation5 + $0x2d0] sm:$0xff]
    %v1180 = vld [vmem:[#allocation5 + $0x2d8] sm:$0xff]
    %v1181 = vld [vmem:[#allocation5 + $0x2e0] sm:$0xff]
    %v1182 = vld [vmem:[#allocation5 + $0x2e8] sm:$0xff]
    %v1183 = vld [vmem:[#allocation5 + $0x2f0] sm:$0xff]
    %v1184 = vld [vmem:[#allocation5 + $0x2f8] sm:$0xff]
    %v1185 = vld [vmem:[#allocation5 + $0x300] sm:$0xff]
    %v1186 = vld [vmem:[#allocation5 + $0x308] sm:$0xff]
    %v1187 = vld [vmem:[#allocation5 + $0x310] sm:$0xff]
    %v1188 = vld [vmem:[#allocation5 + $0x318] sm:$0xff]
    %v1189 = vld [vmem:[#allocation5 + $0x320] sm:$0xff]
    %v1190 = vld [vmem:[#allocation5 + $0x328] sm:$0xff]
    %v1191 = vld [vmem:[#allocation5 + $0x330] sm:$0xff]
    %v1192 = vld [vmem:[#allocation5 + $0x338] sm:$0xff]
    %v1193 = vld [vmem:[#allocation5 + $0x340] sm:$0xff]
    %v1194 = vld [vmem:[#allocation5 + $0x348] sm:$0xff]
    %v1195 = vld [vmem:[#allocation5 + $0x350] sm:$0xff]
    %v1196 = vld [vmem:[#allocation5 + $0x358] sm:$0xff]
    %v1197 = vld [vmem:[#allocation5 + $0x360] sm:$0xff]
    %v1198 = vld [vmem:[#allocation5 + $0x368] sm:$0xff]
    %v1199 = vld [vmem:[#allocation5 + $0x370] sm:$0xff]
    %v1200 = vld [vmem:[#allocation5 + $0x378] sm:$0xff]
    %v1201 = vld [vmem:[#allocation5 + $0x380] sm:$0xff]
    %v1202 = vld [vmem:[#allocation5 + $0x388] sm:$0xff]
    %v1203 = vld [vmem:[#allocation5 + $0x390] sm:$0xff]
    %v1204 = vld [vmem:[#allocation5 + $0x398] sm:$0xff]
    %v1205 = vld [vmem:[#allocation5 + $0x3a0] sm:$0xff]
    %v1206 = vld [vmem:[#allocation5 + $0x3a8] sm:$0xff]
    %v1207 = vld [vmem:[#allocation5 + $0x3b0] sm:$0xff]
    %v1208 = vld [vmem:[#allocation5 + $0x3b8] sm:$0xff]
    %v1209 = vld [vmem:[#allocation5 + $0x3c0] sm:$0xff]
    %v1210 = vld [vmem:[#allocation5 + $0x3c8] sm:$0xff]
    %v1211 = vld [vmem:[#allocation5 + $0x3d0] sm:$0xff]
    %v1212 = vld [vmem:[#allocation5 + $0x3d8] sm:$0xff]
    %v1213 = vld [vmem:[#allocation5 + $0x3e0] sm:$0xff]
    %v1214 = vld [vmem:[#allocation5 + $0x3e8] sm:$0xff]
    %v1215 = vld [vmem:[#allocation5 + $0x3f0] sm:$0xff]
    %v1216 = vld [vmem:[#allocation5 + $0x3f8] sm:$0xff]
    %v1217 = vld [vmem:[#allocation5 + $0x400] sm:$0xff]
    %v1218 = vld [vmem:[#allocation5 + $0x408] sm:$0xff]
    %v1219 = vld [vmem:[#allocation5 + $0x410] sm:$0xff]
    %v1220 = vld [vmem:[#allocation5 + $0x418] sm:$0xff]
    %v1221 = vld [vmem:[#allocation5 + $0x420] sm:$0xff]
    %v1222 = vld [vmem:[#allocation5 + $0x428] sm:$0xff]
    %v1223 = vld [vmem:[#allocation5 + $0x430] sm:$0xff]
    %v1224 = vld [vmem:[#allocation5 + $0x438] sm:$0xff]
    %v1225 = vld [vmem:[#allocation5 + $0x440] sm:$0xff]
    %v1226 = vld [vmem:[#allocation5 + $0x448] sm:$0xff]
    %v1227 = vld [vmem:[#allocation5 + $0x450] sm:$0xff]
    %v1228 = vld [vmem:[#allocation5 + $0x458] sm:$0xff]
    %v1229 = vld [vmem:[#allocation5 + $0x460] sm:$0xff]
    %v1230 = vld [vmem:[#allocation5 + $0x468] sm:$0xff]
    %v1231 = vld [vmem:[#allocation5 + $0x470] sm:$0xff]
    %v1232 = vld [vmem:[#allocation5 + $0x478] sm:$0xff]
    %v1233 = vld [vmem:[#allocation5 + $0x480] sm:$0xff]
    %v1234 = vld [vmem:[#allocation5 + $0x488] sm:$0xff]
    %v1235 = vld [vmem:[#allocation5 + $0x490] sm:$0xff]
    %v1236 = vld [vmem:[#allocation5 + $0x498] sm:$0xff]
    %v1237 = vld [vmem:[#allocation5 + $0x4a0] sm:$0xff]
    %v1238 = vld [vmem:[#allocation5 + $0x4a8] sm:$0xff]
    %v1239 = vld [vmem:[#allocation5 + $0x4b0] sm:$0xff]
    %v1240 = vld [vmem:[#allocation5 + $0x4b8] sm:$0xff]
    %v1241 = vld [vmem:[#allocation5 + $0x4c0] sm:$0xff]
    %v1242 = vld [vmem:[#allocation5 + $0x4c8] sm:$0xff]
    %v1243 = vld [vmem:[#allocation5 + $0x4d0] sm:$0xff]
    %v1244 = vld [vmem:[#allocation5 + $0x4d8] sm:$0xff]
    %v1245 = vld [vmem:[#allocation5 + $0x4e0] sm:$0xff]
    %v1246 = vld [vmem:[#allocation5 + $0x4e8] sm:$0xff]
    %v1247 = vld [vmem:[#allocation5 + $0x4f0] sm:$0xff]
    %v1248 = vld [vmem:[#allocation5 + $0x4f8] sm:$0xff]
    %v1249 = vld [vmem:[#allocation5 + $0x500] sm:$0xff]
    %v1250 = vld [vmem:[#allocation5 + $0x508] sm:$0xff]
    %v1251 = vld [vmem:[#allocation5 + $0x510] sm:$0xff]
    %v1252 = vld [vmem:[#allocation5 + $0x518] sm:$0xff]
    %v1253 = vld [vmem:[#allocation5 + $0x520] sm:$0xff]
    %v1254 = vld [vmem:[#allocation5 + $0x528] sm:$0xff]
    %v1255 = vld [vmem:[#allocation5 + $0x530] sm:$0xff]
    %v1256 = vld [vmem:[#allocation5 + $0x538] sm:$0xff]
    %v1257 = vld [vmem:[#allocation5 + $0x540] sm:$0xff]
    %v1258 = vld [vmem:[#allocation5 + $0x548] sm:$0xff]
    %v1259 = vld [vmem:[#allocation5 + $0x550] sm:$0xff]
    %v1260 = vld [vmem:[#allocation5 + $0x558] sm:$0xff]
    %v1261 = vld [vmem:[#allocation5 + $0x560] sm:$0xff]
    %v1262 = vld [vmem:[#allocation5 + $0x568] sm:$0xff]
    %v1263 = vld [vmem:[#allocation5 + $0x570] sm:$0xff]
    %v1264 = vld [vmem:[#allocation5 + $0x578] sm:$0xff]
    %v1265 = vld [vmem:[#allocation5 + $0x580] sm:$0xff]
    %v1266 = vld [vmem:[#allocation5 + $0x588] sm:$0xff]
    %v1267 = vld [vmem:[#allocation5 + $0x590] sm:$0xff]
    %v1268 = vld [vmem:[#allocation5 + $0x598] sm:$0xff]
    %v1269 = vld [vmem:[#allocation5 + $0x5a0] sm:$0xff]
    %v1270 = vld [vmem:[#allocation5 + $0x5a8] sm:$0xff]
    %v1271 = vld [vmem:[#allocation5 + $0x5b0] sm:$0xff]
    %v1272 = vld [vmem:[#allocation5 + $0x5b8] sm:$0xff]
    %v1273 = vld [vmem:[#allocation5 + $0x5c0] sm:$0xff]
    %v1274 = vld [vmem:[#allocation5 + $0x5c8] sm:$0xff]
    %v1275 = vld [vmem:[#allocation5 + $0x5d0] sm:$0xff]
    %v1276 = vld [vmem:[#allocation5 + $0x5d8] sm:$0xff]
    %v1277 = vld [vmem:[#allocation5 + $0x5e0] sm:$0xff]
    %v1278 = vld [vmem:[#allocation5 + $0x5e8] sm:$0xff]
    %v1279 = vld [vmem:[#allocation5 + $0x5f0] sm:$0xff]
    %v1280 = vld [vmem:[#allocation5 + $0x5f8] sm:$0xff]
    %v1281 = vld [vmem:[#allocation5 + $0x600] sm:$0xff]
    %v1282 = vld [vmem:[#allocation5 + $0x608] sm:$0xff]
    %v1283 = vld [vmem:[#allocation5 + $0x610] sm:$0xff]
    %v1284 = vld [vmem:[#allocation5 + $0x618] sm:$0xff]
    %v1285 = vld [vmem:[#allocation5 + $0x620] sm:$0xff]
    %v1286 = vld [vmem:[#allocation5 + $0x628] sm:$0xff]
    %v1287 = vld [vmem:[#allocation5 + $0x630] sm:$0xff]
    %v1288 = vld [vmem:[#allocation5 + $0x638] sm:$0xff]
    %v1289 = vld [vmem:[#allocation5 + $0x640] sm:$0xff]
    %v1290 = vld [vmem:[#allocation5 + $0x648] sm:$0xff]
    %v1291 = vld [vmem:[#allocation5 + $0x650] sm:$0xff]
    %v1292 = vld [vmem:[#allocation5 + $0x658] sm:$0xff]
    %v1293 = vld [vmem:[#allocation5 + $0x660] sm:$0xff]
    %v1294 = vld [vmem:[#allocation5 + $0x668] sm:$0xff]
    %v1295 = vld [vmem:[#allocation5 + $0x670] sm:$0xff]
    %v1296 = vld [vmem:[#allocation5 + $0x678] sm:$0xff]
    %v1297 = vld [vmem:[#allocation5 + $0x680] sm:$0xff]
    %v1298 = vld [vmem:[#allocation5 + $0x688] sm:$0xff]
    %v1299 = vld [vmem:[#allocation5 + $0x690] sm:$0xff]
    %v1300 = vld [vmem:[#allocation5 + $0x698] sm:$0xff]
    %v1301 = vld [vmem:[#allocation5 + $0x6a0] sm:$0xff]
    %v1302 = vld [vmem:[#allocation5 + $0x6a8] sm:$0xff]
    %v1303 = vld [vmem:[#allocation5 + $0x6b0] sm:$0xff]
    %v1304 = vld [vmem:[#allocation5 + $0x6b8] sm:$0xff]
    %v1305 = vld [vmem:[#allocation5 + $0x6c0] sm:$0xff]
    %v1306 = vld [vmem:[#allocation5 + $0x6c8] sm:$0xff]
    %v1307 = vld [vmem:[#allocation5 + $0x6d0] sm:$0xff]
    %v1308 = vld [vmem:[#allocation5 + $0x6d8] sm:$0xff]
    %v1309 = vld [vmem:[#allocation5 + $0x6e0] sm:$0xff]
    %v1310 = vld [vmem:[#allocation5 + $0x6e8] sm:$0xff]
    %v1311 = vld [vmem:[#allocation5 + $0x6f0] sm:$0xff]
    %v1312 = vld [vmem:[#allocation5 + $0x6f8] sm:$0xff]
    %v1313 = vld [vmem:[#allocation5 + $0x700] sm:$0xff]
    %v1314 = vld [vmem:[#allocation5 + $0x708] sm:$0xff]
    %v1315 = vld [vmem:[#allocation5 + $0x710] sm:$0xff]
    %v1316 = vld [vmem:[#allocation5 + $0x718] sm:$0xff]
    %v1317 = vld [vmem:[#allocation5 + $0x720] sm:$0xff]
    %v1318 = vld [vmem:[#allocation5 + $0x728] sm:$0xff]
    %v1319 = vld [vmem:[#allocation5 + $0x730] sm:$0xff]
    %v1320 = vld [vmem:[#allocation5 + $0x738] sm:$0xff]
    %v1321 = vld [vmem:[#allocation5 + $0x740] sm:$0xff]
    %v1322 = vld [vmem:[#allocation5 + $0x748] sm:$0xff]
    %v1323 = vld [vmem:[#allocation5 + $0x750] sm:$0xff]
    %v1324 = vld [vmem:[#allocation5 + $0x758] sm:$0xff]
    %v1325 = vld [vmem:[#allocation5 + $0x760] sm:$0xff]
    %v1326 = vld [vmem:[#allocation5 + $0x768] sm:$0xff]
    %v1327 = vld [vmem:[#allocation5 + $0x770] sm:$0xff]
    %v1328 = vld [vmem:[#allocation5 + $0x778] sm:$0xff]
    %v1329 = vld [vmem:[#allocation5 + $0x780] sm:$0xff]
    %v1330 = vld [vmem:[#allocation5 + $0x788] sm:$0xff]
    %v1331 = vld [vmem:[#allocation5 + $0x790] sm:$0xff]
    %v1332 = vld [vmem:[#allocation5 + $0x798] sm:$0xff]
    %v1333 = vld [vmem:[#allocation5 + $0x7a0] sm:$0xff]
    %v1334 = vld [vmem:[#allocation5 + $0x7a8] sm:$0xff]
    %v1335 = vld [vmem:[#allocation5 + $0x7b0] sm:$0xff]
    %v1336 = vld [vmem:[#allocation5 + $0x7b8] sm:$0xff]
    %v1337 = vld [vmem:[#allocation5 + $0x7c0] sm:$0xff]
    %v1338 = vld [vmem:[#allocation5 + $0x7c8] sm:$0xff]
    %v1339 = vld [vmem:[#allocation5 + $0x7d0] sm:$0xff]
    %v1340 = vld [vmem:[#allocation5 + $0x7d8] sm:$0xff]
    %v1341 = vld [vmem:[#allocation5 + $0x7e0] sm:$0xff]
    %v1342 = vld [vmem:[#allocation5 + $0x7e8] sm:$0xff]
    %v1343 = vld [vmem:[#allocation5 + $0x7f0] sm:$0xff]
    %v1344 = vld [vmem:[#allocation5 + $0x7f8] sm:$0xff]
    %v1345 = vld [vmem:[%s6] sm:$0xf]
    %v1347 = vlaneseq
    %v1348 = vshrl.u32 %v1347, 7
    %v1349 = vsub.s32 0, %v1348
    %v1350 = vrot.slane %v1345, %v1349
    %v1351 = vlaneseq
    %v1352 = vshrl.u32 %v1351, 7
    %v1353 = vsub.s32 1, %v1352
    %v1354 = vrot.slane %v1345, %v1353
    %v1355 = vlaneseq
    %v1356 = vshrl.u32 %v1355, 7
    %v1357 = vsub.s32 2, %v1356
    %v1358 = vrot.slane %v1345, %v1357
    %v1359 = vlaneseq
    %v1360 = vshrl.u32 %v1359, 7
    %v1361 = vsub.s32 3, %v1360
    %v1362 = vrot.slane %v1345, %v1361
    %1367 = vmatprep.subr.mxu0 %v1090
    %1368 = vmatpush1.msra.mxu0 %v1089
    %1369 = vmatprep.subr.mxu0 %v1094
    %1370 = vmatpush1.msra.mxu0 %v1093
    %1371 = vmatprep.subr.mxu0 %v1098
    %1372 = vmatpush1.msra.mxu0 %v1097
    %1373 = vmatprep.subr.mxu0 %v1102
    %1374 = vmatpush1.msra.mxu0 %v1101
    %1375 = vmatprep.subr.mxu0 %v1106
    %1376 = vmatpush1.msra.mxu0 %v1105
    %1377 = vmatprep.subr.mxu0 %v1110
    %1378 = vmatpush1.msra.mxu0 %v1109
    %1379 = vmatprep.subr.mxu0 %v1114
    %1380 = vmatpush1.msra.mxu0 %v1113
    %1381 = vmatprep.subr.mxu0 %v1118
    %1382 = vmatpush1.msra.mxu0 %v1117
    %1383 = vmatprep.subr.mxu0 %v1122
    %1384 = vmatpush1.msra.mxu0 %v1121
    %1385 = vmatprep.subr.mxu0 %v1126
    %1386 = vmatpush1.msra.mxu0 %v1125
    %1387 = vmatprep.subr.mxu0 %v1130
    %1388 = vmatpush1.msra.mxu0 %v1129
    %1389 = vmatprep.subr.mxu0 %v1134
    %1390 = vmatpush1.msra.mxu0 %v1133
    %1391 = vmatprep.subr.mxu0 %v1138
    %1392 = vmatpush1.msra.mxu0 %v1137
    %1393 = vmatprep.subr.mxu0 %v1142
    %1394 = vmatpush1.msra.mxu0 %v1141
    %1395 = vmatprep.subr.mxu0 %v1146
    %1396 = vmatpush1.msra.mxu0 %v1145
    %1397 = vmatprep.subr.mxu0 %v1150
    %1398 = vmatpush1.msra.mxu0 %v1149
    %1399 = vmatprep.subr.mxu0 %v1154
    %1400 = vmatpush1.msra.mxu0 %v1153
    %1401 = vmatprep.subr.mxu0 %v1158
    %1402 = vmatpush1.msra.mxu0 %v1157
    %1403 = vmatprep.subr.mxu0 %v1162
    %1404 = vmatpush1.msra.mxu0 %v1161
    %1405 = vmatprep.subr.mxu0 %v1166
    %1406 = vmatpush1.msra.mxu0 %v1165
    %1407 = vmatprep.subr.mxu0 %v1170
    %1408 = vmatpush1.msra.mxu0 %v1169
    %1409 = vmatprep.subr.mxu0 %v1174
    %1410 = vmatpush1.msra.mxu0 %v1173
    %1411 = vmatprep.subr.mxu0 %v1178
    %1412 = vmatpush1.msra.mxu0 %v1177
    %1413 = vmatprep.subr.mxu0 %v1182
    %1414 = vmatpush1.msra.mxu0 %v1181
    %1415 = vmatprep.subr.mxu0 %v1186
    %1416 = vmatpush1.msra.mxu0 %v1185
    %1417 = vmatprep.subr.mxu0 %v1190
    %1418 = vmatpush1.msra.mxu0 %v1189
    %1419 = vmatprep.subr.mxu0 %v1194
    %1420 = vmatpush1.msra.mxu0 %v1193
    %1421 = vmatprep.subr.mxu0 %v1198
    %1422 = vmatpush1.msra.mxu0 %v1197
    %1423 = vmatprep.subr.mxu0 %v1202
    %1424 = vmatpush1.msra.mxu0 %v1201
    %1425 = vmatprep.subr.mxu0 %v1206
    %1426 = vmatpush1.msra.mxu0 %v1205
    %1427 = vmatprep.subr.mxu0 %v1210
    %1428 = vmatpush1.msra.mxu0 %v1209
    %1429 = vmatprep.subr.mxu0 %v1214
    %1430 = vmatpush1.msra.mxu0 %v1213
    %1431 = vmatprep.mubr.f32.mxu0 %v1086
    %1432 = vmatmul.mubr.f32.gmra.mrb[0].mxu0 %v1085
    %v1433 = vpop.f32.mrb[0].mxu0
    %v1434 = vadd.f32 %v1350, %v1433
    %v1435 = vpop.f32.mrb[0].mxu0
    %v1436 = vadd.f32 %v1354, %v1435
    %1437 = vdwg.mxu0
    %1438 = vmatprep.subr.mxu0 %v1218
    %1439 = vmatpush1.msra.mxu0 %v1217
    %1440 = vmatprep.subr.mxu0 %v1222
    %1441 = vmatpush1.msra.mxu0 %v1221
    %1442 = vmatprep.subr.mxu0 %v1226
    %1443 = vmatpush1.msra.mxu0 %v1225
    %1444 = vmatprep.subr.mxu0 %v1230
    %1445 = vmatpush1.msra.mxu0 %v1229
    %1446 = vmatprep.subr.mxu0 %v1234
    %1447 = vmatpush1.msra.mxu0 %v1233
    %1448 = vmatprep.subr.mxu0 %v1238
    %1449 = vmatpush1.msra.mxu0 %v1237
    %1450 = vmatprep.subr.mxu0 %v1242
    %1451 = vmatpush1.msra.mxu0 %v1241
    %1452 = vmatprep.subr.mxu0 %v1246
    %1453 = vmatpush1.msra.mxu0 %v1245
    %1454 = vmatprep.subr.mxu0 %v1250
    %1455 = vmatpush1.msra.mxu0 %v1249
    %1456 = vmatprep.subr.mxu0 %v1254
    %1457 = vmatpush1.msra.mxu0 %v1253
    %1458 = vmatprep.subr.mxu0 %v1258
    %1459 = vmatpush1.msra.mxu0 %v1257
    %1460 = vmatprep.subr.mxu0 %v1262
    %1461 = vmatpush1.msra.mxu0 %v1261
    %1462 = vmatprep.subr.mxu0 %v1266
    %1463 = vmatpush1.msra.mxu0 %v1265
    %1464 = vmatprep.subr.mxu0 %v1270
    %1465 = vmatpush1.msra.mxu0 %v1269
    %1466 = vmatprep.subr.mxu0 %v1274
    %1467 = vmatpush1.msra.mxu0 %v1273
    %1468 = vmatprep.subr.mxu0 %v1278
    %1469 = vmatpush1.msra.mxu0 %v1277
    %1470 = vmatprep.subr.mxu0 %v1282
    %1471 = vmatpush1.msra.mxu0 %v1281
    %1472 = vmatprep.subr.mxu0 %v1286
    %1473 = vmatpush1.msra.mxu0 %v1285
    %1474 = vmatprep.subr.mxu0 %v1290
    %1475 = vmatpush1.msra.mxu0 %v1289
    %1476 = vmatprep.subr.mxu0 %v1294
    %1477 = vmatpush1.msra.mxu0 %v1293
    %1478 = vmatprep.subr.mxu0 %v1298
    %1479 = vmatpush1.msra.mxu0 %v1297
    %1480 = vmatprep.subr.mxu0 %v1302
    %1481 = vmatpush1.msra.mxu0 %v1301
    %1482 = vmatprep.subr.mxu0 %v1306
    %1483 = vmatpush1.msra.mxu0 %v1305
    %1484 = vmatprep.subr.mxu0 %v1310
    %1485 = vmatpush1.msra.mxu0 %v1309
    %1486 = vmatprep.subr.mxu0 %v1314
    %1487 = vmatpush1.msra.mxu0 %v1313
    %1488 = vmatprep.subr.mxu0 %v1318
    %1489 = vmatpush1.msra.mxu0 %v1317
    %1490 = vmatprep.subr.mxu0 %v1322
    %1491 = vmatpush1.msra.mxu0 %v1321
    %1492 = vmatprep.subr.mxu0 %v1326
    %1493 = vmatpush1.msra.mxu0 %v1325
    %1494 = vmatprep.subr.mxu0 %v1330
    %1495 = vmatpush1.msra.mxu0 %v1329
    %1496 = vmatprep.subr.mxu0 %v1334
    %1497 = vmatpush1.msra.mxu0 %v1333
    %1498 = vmatprep.subr.mxu0 %v1338
    %1499 = vmatpush1.msra.mxu0 %v1337
    %1500 = vmatprep.subr.mxu0 %v1342
    %1501 = vmatpush1.msra.mxu0 %v1341
    %1502 = vmatprep.mubr.f32.mxu0 %v1088
    %1503 = vmatmul.mubr.f32.gmra.mrb[0].mxu0 %v1087
    %v1504 = vpop.f32.mrb[0].mxu0
    %v1505 = vadd.f32 %v1434, %v1504
    %v1506 = vpop.f32.mrb[0].mxu0
    %v1507 = vadd.f32 %v1436, %v1506
    %1508 = vdwg.mxu0
    %1509 = vmatprep.subr.mxu0 %v1092
    %1510 = vmatpush1.msra.mxu0 %v1091
    %1511 = vmatprep.subr.mxu0 %v1096
    %1512 = vmatpush1.msra.mxu0 %v1095
    %1513 = vmatprep.subr.mxu0 %v1100
    %1514 = vmatpush1.msra.mxu0 %v1099
    %1515 = vmatprep.subr.mxu0 %v1104
    %1516 = vmatpush1.msra.mxu0 %v1103
    %1517 = vmatprep.subr.mxu0 %v1108
    %1518 = vmatpush1.msra.mxu0 %v1107
    %1519 = vmatprep.subr.mxu0 %v1112
    %1520 = vmatpush1.msra.mxu0 %v1111
    %1521 = vmatprep.subr.mxu0 %v1116
    %1522 = vmatpush1.msra.mxu0 %v1115
    %1523 = vmatprep.subr.mxu0 %v1120
    %1524 = vmatpush1.msra.mxu0 %v1119
    %1525 = vmatprep.subr.mxu0 %v1124
    %1526 = vmatpush1.msra.mxu0 %v1123
    %1527 = vmatprep.subr.mxu0 %v1128
    %1528 = vmatpush1.msra.mxu0 %v1127
    %1529 = vmatprep.subr.mxu0 %v1132
    %1530 = vmatpush1.msra.mxu0 %v1131
    %1531 = vmatprep.subr.mxu0 %v1136
    %1532 = vmatpush1.msra.mxu0 %v1135
    %1533 = vmatprep.subr.mxu0 %v1140
    %1534 = vmatpush1.msra.mxu0 %v1139
    %1535 = vmatprep.subr.mxu0 %v1144
    %1536 = vmatpush1.msra.mxu0 %v1143
    %1537 = vmatprep.subr.mxu0 %v1148
    %1538 = vmatpush1.msra.mxu0 %v1147
    %1539 = vmatprep.subr.mxu0 %v1152
    %1540 = vmatpush1.msra.mxu0 %v1151
    %1541 = vmatprep.subr.mxu0 %v1156
    %1542 = vmatpush1.msra.mxu0 %v1155
    %1543 = vmatprep.subr.mxu0 %v1160
    %1544 = vmatpush1.msra.mxu0 %v1159
    %1545 = vmatprep.subr.mxu0 %v1164
    %1546 = vmatpush1.msra.mxu0 %v1163
    %1547 = vmatprep.subr.mxu0 %v1168
    %1548 = vmatpush1.msra.mxu0 %v1167
    %1549 = vmatprep.subr.mxu0 %v1172
    %1550 = vmatpush1.msra.mxu0 %v1171
    %1551 = vmatprep.subr.mxu0 %v1176
    %1552 = vmatpush1.msra.mxu0 %v1175
    %1553 = vmatprep.subr.mxu0 %v1180
    %1554 = vmatpush1.msra.mxu0 %v1179
    %1555 = vmatprep.subr.mxu0 %v1184
    %1556 = vmatpush1.msra.mxu0 %v1183
    %1557 = vmatprep.subr.mxu0 %v1188
    %1558 = vmatpush1.msra.mxu0 %v1187
    %1559 = vmatprep.subr.mxu0 %v1192
    %1560 = vmatpush1.msra.mxu0 %v1191
    %1561 = vmatprep.subr.mxu0 %v1196
    %1562 = vmatpush1.msra.mxu0 %v1195
    %1563 = vmatprep.subr.mxu0 %v1200
    %1564 = vmatpush1.msra.mxu0 %v1199
    %1565 = vmatprep.subr.mxu0 %v1204
    %1566 = vmatpush1.msra.mxu0 %v1203
    %1567 = vmatprep.subr.mxu0 %v1208
    %1568 = vmatpush1.msra.mxu0 %v1207
    %1569 = vmatprep.subr.mxu0 %v1212
    %1570 = vmatpush1.msra.mxu0 %v1211
    %1571 = vmatprep.subr.mxu0 %v1216
    %1572 = vmatpush1.msra.mxu0 %v1215
    %1573 = vmatprep.mubr.f32.mxu0 %v1086
    %1574 = vmatmul.mubr.f32.gmra.mrb[0].mxu0 %v1085
    %v1575 = vpop.f32.mrb[0].mxu0
    %v1576 = vadd.f32 %v1358, %v1575
    %v1577 = vpop.f32.mrb[0].mxu0
    %v1578 = vadd.f32 %v1362, %v1577
    %1579 = vdwg.mxu0
    %1580 = vmatprep.subr.mxu0 %v1220
    %1581 = vmatpush1.msra.mxu0 %v1219
    %1582 = vmatprep.subr.mxu0 %v1224
    %1583 = vmatpush1.msra.mxu0 %v1223
    %1584 = vmatprep.subr.mxu0 %v1228
    %1585 = vmatpush1.msra.mxu0 %v1227
    %1586 = vmatprep.subr.mxu0 %v1232
    %1587 = vmatpush1.msra.mxu0 %v1231
    %1588 = vmatprep.subr.mxu0 %v1236
    %1589 = vmatpush1.msra.mxu0 %v1235
    %1590 = vmatprep.subr.mxu0 %v1240
    %1591 = vmatpush1.msra.mxu0 %v1239
    %1592 = vmatprep.subr.mxu0 %v1244
    %1593 = vmatpush1.msra.mxu0 %v1243
    %1594 = vmatprep.subr.mxu0 %v1248
    %1595 = vmatpush1.msra.mxu0 %v1247
    %1596 = vmatprep.subr.mxu0 %v1252
    %1597 = vmatpush1.msra.mxu0 %v1251
    %1598 = vmatprep.subr.mxu0 %v1256
    %1599 = vmatpush1.msra.mxu0 %v1255
    %1600 = vmatprep.subr.mxu0 %v1260
    %1601 = vmatpush1.msra.mxu0 %v1259
    %1602 = vmatprep.subr.mxu0 %v1264
    %1603 = vmatpush1.msra.mxu0 %v1263
    %1604 = vmatprep.subr.mxu0 %v1268
    %1605 = vmatpush1.msra.mxu0 %v1267
    %1606 = vmatprep.subr.mxu0 %v1272
    %1607 = vmatpush1.msra.mxu0 %v1271
    %1608 = vmatprep.subr.mxu0 %v1276
    %1609 = vmatpush1.msra.mxu0 %v1275
    %1610 = vmatprep.subr.mxu0 %v1280
    %1611 = vmatpush1.msra.mxu0 %v1279
    %1612 = vmatprep.subr.mxu0 %v1284
    %1613 = vmatpush1.msra.mxu0 %v1283
    %1614 = vmatprep.subr.mxu0 %v1288
    %1615 = vmatpush1.msra.mxu0 %v1287
    %1616 = vmatprep.subr.mxu0 %v1292
    %1617 = vmatpush1.msra.mxu0 %v1291
    %1618 = vmatprep.subr.mxu0 %v1296
    %1619 = vmatpush1.msra.mxu0 %v1295
    %1620 = vmatprep.subr.mxu0 %v1300
    %1621 = vmatpush1.msra.mxu0 %v1299
    %1622 = vmatprep.subr.mxu0 %v1304
    %1623 = vmatpush1.msra.mxu0 %v1303
    %1624 = vmatprep.subr.mxu0 %v1308
    %1625 = vmatpush1.msra.mxu0 %v1307
    %1626 = vmatprep.subr.mxu0 %v1312
    %1627 = vmatpush1.msra.mxu0 %v1311
    %1628 = vmatprep.subr.mxu0 %v1316
    %1629 = vmatpush1.msra.mxu0 %v1315
    %1630 = vmatprep.subr.mxu0 %v1320
    %1631 = vmatpush1.msra.mxu0 %v1319
    %1632 = vmatprep.subr.mxu0 %v1324
    %1633 = vmatpush1.msra.mxu0 %v1323
    %1634 = vmatprep.subr.mxu0 %v1328
    %1635 = vmatpush1.msra.mxu0 %v1327
    %1636 = vmatprep.subr.mxu0 %v1332
    %1637 = vmatpush1.msra.mxu0 %v1331
    %1638 = vmatprep.subr.mxu0 %v1336
    %1639 = vmatpush1.msra.mxu0 %v1335
    %1640 = vmatprep.subr.mxu0 %v1340
    %1641 = vmatpush1.msra.mxu0 %v1339
    %1642 = vmatprep.subr.mxu0 %v1344
    %1643 = vmatpush1.msra.mxu0 %v1343
    %1644 = vmatprep.mubr.f32.mxu0 %v1088
    %1645 = vmatmul.mubr.f32.gmra.mrb[0].mxu0 %v1087
    %v1646 = vpop.f32.mrb[0].mxu0
    %v1647 = vadd.f32 %v1576, %v1646
    %v1648 = vpop.f32.mrb[0].mxu0
    %v1649 = vadd.f32 %v1578, %v1648
    %1650 = vdwg.mxu0
    %v1651 = vrot.slane %v1505, 4
    %v1652 = vadd.f32 %v1505, %v1651
    %v1653 = vrot.slane %v1652, 2
    %v1654 = vadd.f32 %v1652, %v1653
    %v1655 = vrot.slane %v1654, 1
    %v1656 = vadd.f32 %v1654, %v1655
    %v1657 = vrot.slane %v1507, 4
    %v1658 = vadd.f32 %v1507, %v1657
    %v1659 = vrot.slane %v1658, 2
    %v1660 = vadd.f32 %v1658, %v1659
    %v1661 = vrot.slane %v1660, 1
    %v1662 = vadd.f32 %v1660, %v1661
    %v1663 = vrot.slane %v1647, 4
    %v1664 = vadd.f32 %v1647, %v1663
    %v1665 = vrot.slane %v1664, 2
    %v1666 = vadd.f32 %v1664, %v1665
    %v1667 = vrot.slane %v1666, 1
    %v1668 = vadd.f32 %v1666, %v1667
    %v1669 = vrot.slane %v1649, 4
    %v1670 = vadd.f32 %v1649, %v1669
    %v1671 = vrot.slane %v1670, 2
    %v1672 = vadd.f32 %v1670, %v1671
    %v1673 = vrot.slane %v1672, 1
    %v1674 = vadd.f32 %v1672, %v1673
    %v1675 = vmul.f32 %v1656, %v354
    %v1676 = vmul.f32 %v1662, %v354
    %v1677 = vmul.f32 %v1668, %v354
    %v1678 = vmul.f32 %v1674, %v354
    %v1679 = vld [vmem:[%s7] sm:$0xff]
    %v1680 = vld [vmem:[%s7 + $0x8] sm:$0xff]
    %v1681 = vld [vmem:[%s7 + $0x10] sm:$0xff]
    %v1682 = vld [vmem:[%s7 + $0x18] sm:$0xff]
    %v1683 = vld [vmem:[%s7 + $0x20] sm:$0xff]
    %v1684 = vld [vmem:[%s7 + $0x28] sm:$0xff]
    %v1685 = vld [vmem:[%s7 + $0x30] sm:$0xff]
    %v1686 = vld [vmem:[%s7 + $0x38] sm:$0xff]
    %v1687 = vld [vmem:[%s7 + $0x40] sm:$0xff]
    %v1688 = vld [vmem:[%s7 + $0x48] sm:$0xff]
    %v1689 = vld [vmem:[%s7 + $0x50] sm:$0xff]
    %v1690 = vld [vmem:[%s7 + $0x58] sm:$0xff]
    %v1691 = vld [vmem:[%s7 + $0x60] sm:$0xff]
    %v1692 = vld [vmem:[%s7 + $0x68] sm:$0xff]
    %v1693 = vld [vmem:[%s7 + $0x70] sm:$0xff]
    %v1694 = vld [vmem:[%s7 + $0x78] sm:$0xff]
    %v1695 = vld [vmem:[%s7 + $0x80] sm:$0xff]
    %v1696 = vld [vmem:[%s7 + $0x88] sm:$0xff]
    %v1697 = vld [vmem:[%s7 + $0x90] sm:$0xff]
    %v1698 = vld [vmem:[%s7 + $0x98] sm:$0xff]
    %v1699 = vld [vmem:[%s7 + $0xa0] sm:$0xff]
    %v1700 = vld [vmem:[%s7 + $0xa8] sm:$0xff]
    %v1701 = vld [vmem:[%s7 + $0xb0] sm:$0xff]
    %v1702 = vld [vmem:[%s7 + $0xb8] sm:$0xff]
    %v1703 = vld [vmem:[%s7 + $0xc0] sm:$0xff]
    %v1704 = vld [vmem:[%s7 + $0xc8] sm:$0xff]
    %v1705 = vld [vmem:[%s7 + $0xd0] sm:$0xff]
    %v1706 = vld [vmem:[%s7 + $0xd8] sm:$0xff]
    %v1707 = vld [vmem:[%s7 + $0xe0] sm:$0xff]
    %v1708 = vld [vmem:[%s7 + $0xe8] sm:$0xff]
    %v1709 = vld [vmem:[%s7 + $0xf0] sm:$0xff]
    %v1710 = vld [vmem:[%s7 + $0xf8] sm:$0xff]
    %v1711 = vld [vmem:[%s7 + $0x100] sm:$0xff]
    %v1712 = vld [vmem:[%s7 + $0x108] sm:$0xff]
    %v1713 = vld [vmem:[%s7 + $0x110] sm:$0xff]
    %v1714 = vld [vmem:[%s7 + $0x118] sm:$0xff]
    %v1715 = vld [vmem:[%s7 + $0x120] sm:$0xff]
    %v1716 = vld [vmem:[%s7 + $0x128] sm:$0xff]
    %v1717 = vld [vmem:[%s7 + $0x130] sm:$0xff]
    %v1718 = vld [vmem:[%s7 + $0x138] sm:$0xff]
    %v1719 = vld [vmem:[%s7 + $0x140] sm:$0xff]
    %v1720 = vld [vmem:[%s7 + $0x148] sm:$0xff]
    %v1721 = vld [vmem:[%s7 + $0x150] sm:$0xff]
    %v1722 = vld [vmem:[%s7 + $0x158] sm:$0xff]
    %v1723 = vld [vmem:[%s7 + $0x160] sm:$0xff]
    %v1724 = vld [vmem:[%s7 + $0x168] sm:$0xff]
    %v1725 = vld [vmem:[%s7 + $0x170] sm:$0xff]
    %v1726 = vld [vmem:[%s7 + $0x178] sm:$0xff]
    %v1727 = vld [vmem:[%s7 + $0x180] sm:$0xff]
    %v1728 = vld [vmem:[%s7 + $0x188] sm:$0xff]
    %v1729 = vld [vmem:[%s7 + $0x190] sm:$0xff]
    %v1730 = vld [vmem:[%s7 + $0x198] sm:$0xff]
    %v1731 = vld [vmem:[%s7 + $0x1a0] sm:$0xff]
    %v1732 = vld [vmem:[%s7 + $0x1a8] sm:$0xff]
    %v1733 = vld [vmem:[%s7 + $0x1b0] sm:$0xff]
    %v1734 = vld [vmem:[%s7 + $0x1b8] sm:$0xff]
    %v1735 = vld [vmem:[%s7 + $0x1c0] sm:$0xff]
    %v1736 = vld [vmem:[%s7 + $0x1c8] sm:$0xff]
    %v1737 = vld [vmem:[%s7 + $0x1d0] sm:$0xff]
    %v1738 = vld [vmem:[%s7 + $0x1d8] sm:$0xff]
    %v1739 = vld [vmem:[%s7 + $0x1e0] sm:$0xff]
    %v1740 = vld [vmem:[%s7 + $0x1e8] sm:$0xff]
    %v1741 = vld [vmem:[%s7 + $0x1f0] sm:$0xff]
    %v1742 = vld [vmem:[%s7 + $0x1f8] sm:$0xff]
    %1743 = vmatprep.subr.mxu0 0.0
    %1744 = vmatpush1.msra.mxu0 %v1679
    %1745 = vmatprep.subr.mxu0 0.0
    %1746 = vmatpush1.msra.mxu0 %v1680
    %1747 = vmatprep.subr.mxu0 0.0
    %1748 = vmatpush1.msra.mxu0 %v1681
    %1749 = vmatprep.subr.mxu0 0.0
    %1750 = vmatpush1.msra.mxu0 %v1682
    %1751 = vmatprep.subr.mxu0 0.0
    %1752 = vmatpush1.msra.mxu0 %v1683
    %1753 = vmatprep.subr.mxu0 0.0
    %1754 = vmatpush1.msra.mxu0 %v1684
    %1755 = vmatprep.subr.mxu0 0.0
    %1756 = vmatpush1.msra.mxu0 %v1685
    %1757 = vmatprep.subr.mxu0 0.0
    %1758 = vmatpush1.msra.mxu0 %v1686
    %1759 = vmatprep.subr.mxu0 0.0
    %1760 = vmatpush1.msra.mxu0 %v1687
    %1761 = vmatprep.subr.mxu0 0.0
    %1762 = vmatpush1.msra.mxu0 %v1688
    %1763 = vmatprep.subr.mxu0 0.0
    %1764 = vmatpush1.msra.mxu0 %v1689
    %1765 = vmatprep.subr.mxu0 0.0
    %1766 = vmatpush1.msra.mxu0 %v1690
    %1767 = vmatprep.subr.mxu0 0.0
    %1768 = vmatpush1.msra.mxu0 %v1691
    %1769 = vmatprep.subr.mxu0 0.0
    %1770 = vmatpush1.msra.mxu0 %v1692
    %1771 = vmatprep.subr.mxu0 0.0
    %1772 = vmatpush1.msra.mxu0 %v1693
    %1773 = vmatprep.subr.mxu0 0.0
    %1774 = vmatpush1.msra.mxu0 %v1694
    %1775 = vmatprep.subr.mxu0 0.0
    %1776 = vmatpush1.msra.mxu0 %v1695
    %1777 = vmatprep.subr.mxu0 0.0
    %1778 = vmatpush1.msra.mxu0 %v1696
    %1779 = vmatprep.subr.mxu0 0.0
    %1780 = vmatpush1.msra.mxu0 %v1697
    %1781 = vmatprep.subr.mxu0 0.0
    %1782 = vmatpush1.msra.mxu0 %v1698
    %1783 = vmatprep.subr.mxu0 0.0
    %1784 = vmatpush1.msra.mxu0 %v1699
    %1785 = vmatprep.subr.mxu0 0.0
    %1786 = vmatpush1.msra.mxu0 %v1700
    %1787 = vmatprep.subr.mxu0 0.0
    %1788 = vmatpush1.msra.mxu0 %v1701
    %1789 = vmatprep.subr.mxu0 0.0
    %1790 = vmatpush1.msra.mxu0 %v1702
    %1791 = vmatprep.subr.mxu0 0.0
    %1792 = vmatpush1.msra.mxu0 %v1703
    %1793 = vmatprep.subr.mxu0 0.0
    %1794 = vmatpush1.msra.mxu0 %v1704
    %1795 = vmatprep.subr.mxu0 0.0
    %1796 = vmatpush1.msra.mxu0 %v1705
    %1797 = vmatprep.subr.mxu0 0.0
    %1798 = vmatpush1.msra.mxu0 %v1706
    %1799 = vmatprep.subr.mxu0 0.0
    %1800 = vmatpush1.msra.mxu0 %v1707
    %1801 = vmatprep.subr.mxu0 0.0
    %1802 = vmatpush1.msra.mxu0 %v1708
    %1803 = vmatprep.subr.mxu0 0.0
    %1804 = vmatpush1.msra.mxu0 %v1709
    %1805 = vmatprep.subr.mxu0 0.0
    %1806 = vmatpush1.msra.mxu0 %v1710
    %1807 = vmatprep.mubr.f32.mxu0 %v1676
    %1808 = vmatmul.mubr.f32.gmra.mrb[0].mxu0 %v1675
    %v1809 = vpop.f32.mrb[0].mxu0
    %v1810 = vadd.f32 0.0, %v1809
    %v1811 = vpop.f32.mrb[0].mxu0
    %1812 = vdwg.mxu0
    %1813 = vmatprep.subr.mxu0 0.0
    %1814 = vmatpush1.msra.mxu0 %v1711
    %1815 = vmatprep.subr.mxu0 0.0
    %1816 = vmatpush1.msra.mxu0 %v1712
    %1817 = vmatprep.subr.mxu0 0.0
    %1818 = vmatpush1.msra.mxu0 %v1713
    %1819 = vmatprep.subr.mxu0 0.0
    %1820 = vmatpush1.msra.mxu0 %v1714
    %1821 = vmatprep.subr.mxu0 0.0
    %1822 = vmatpush1.msra.mxu0 %v1715
    %1823 = vmatprep.subr.mxu0 0.0
    %1824 = vmatpush1.msra.mxu0 %v1716
    %1825 = vmatprep.subr.mxu0 0.0
    %1826 = vmatpush1.msra.mxu0 %v1717
    %1827 = vmatprep.subr.mxu0 0.0
    %1828 = vmatpush1.msra.mxu0 %v1718
    %1829 = vmatprep.subr.mxu0 0.0
    %1830 = vmatpush1.msra.mxu0 %v1719
    %1831 = vmatprep.subr.mxu0 0.0
    %1832 = vmatpush1.msra.mxu0 %v1720
    %1833 = vmatprep.subr.mxu0 0.0
    %1834 = vmatpush1.msra.mxu0 %v1721
    %1835 = vmatprep.subr.mxu0 0.0
    %1836 = vmatpush1.msra.mxu0 %v1722
    %1837 = vmatprep.subr.mxu0 0.0
    %1838 = vmatpush1.msra.mxu0 %v1723
    %1839 = vmatprep.subr.mxu0 0.0
    %1840 = vmatpush1.msra.mxu0 %v1724
    %1841 = vmatprep.subr.mxu0 0.0
    %1842 = vmatpush1.msra.mxu0 %v1725
    %1843 = vmatprep.subr.mxu0 0.0
    %1844 = vmatpush1.msra.mxu0 %v1726
    %1845 = vmatprep.subr.mxu0 0.0
    %1846 = vmatpush1.msra.mxu0 %v1727
    %1847 = vmatprep.subr.mxu0 0.0
    %1848 = vmatpush1.msra.mxu0 %v1728
    %1849 = vmatprep.subr.mxu0 0.0
    %1850 = vmatpush1.msra.mxu0 %v1729
    %1851 = vmatprep.subr.mxu0 0.0
    %1852 = vmatpush1.msra.mxu0 %v1730
    %1853 = vmatprep.subr.mxu0 0.0
    %1854 = vmatpush1.msra.mxu0 %v1731
    %1855 = vmatprep.subr.mxu0 0.0
    %1856 = vmatpush1.msra.mxu0 %v1732
    %1857 = vmatprep.subr.mxu0 0.0
    %1858 = vmatpush1.msra.mxu0 %v1733
    %1859 = vmatprep.subr.mxu0 0.0
    %1860 = vmatpush1.msra.mxu0 %v1734
    %1861 = vmatprep.subr.mxu0 0.0
    %1862 = vmatpush1.msra.mxu0 %v1735
    %1863 = vmatprep.subr.mxu0 0.0
    %1864 = vmatpush1.msra.mxu0 %v1736
    %1865 = vmatprep.subr.mxu0 0.0
    %1866 = vmatpush1.msra.mxu0 %v1737
    %1867 = vmatprep.subr.mxu0 0.0
    %1868 = vmatpush1.msra.mxu0 %v1738
    %1869 = vmatprep.subr.mxu0 0.0
    %1870 = vmatpush1.msra.mxu0 %v1739
    %1871 = vmatprep.subr.mxu0 0.0
    %1872 = vmatpush1.msra.mxu0 %v1740
    %1873 = vmatprep.subr.mxu0 0.0
    %1874 = vmatpush1.msra.mxu0 %v1741
    %1875 = vmatprep.subr.mxu0 0.0
    %1876 = vmatpush1.msra.mxu0 %v1742
    %1877 = vmatprep.mubr.f32.mxu0 %v1678
    %1878 = vmatmul.mubr.f32.gmra.mrb[0].mxu0 %v1677
    %v1879 = vpop.f32.mrb[0].mxu0
    %v1880 = vadd.f32 %v1810, %v1879
    %v1881 = vpop.f32.mrb[0].mxu0
    %1882 = vdwg.mxu0
    %v1883 = vld [vmem:[%s8] sm:$0xff]
    %v1884 = vld [vmem:[%s8 + $0x8] sm:$0xff]
    %v1885 = vld [vmem:[%s8 + $0x10] sm:$0xff]
    %v1886 = vld [vmem:[%s8 + $0x18] sm:$0xff]
    %v1887 = vld [vmem:[%s8 + $0x20] sm:$0xff]
    %v1888 = vld [vmem:[%s8 + $0x28] sm:$0xff]
    %v1889 = vld [vmem:[%s8 + $0x30] sm:$0xff]
    %v1890 = vld [vmem:[%s8 + $0x38] sm:$0xff]
    %v1891 = vld [vmem:[%s8 + $0x40] sm:$0xff]
    %v1892 = vld [vmem:[%s8 + $0x48] sm:$0xff]
    %v1893 = vld [vmem:[%s8 + $0x50] sm:$0xff]
    %v1894 = vld [vmem:[%s8 + $0x58] sm:$0xff]
    %v1895 = vld [vmem:[%s8 + $0x60] sm:$0xff]
    %v1896 = vld [vmem:[%s8 + $0x68] sm:$0xff]
    %v1897 = vld [vmem:[%s8 + $0x70] sm:$0xff]
    %v1898 = vld [vmem:[%s8 + $0x78] sm:$0xff]
    %v1899 = vld [vmem:[%s8 + $0x80] sm:$0xff]
    %v1900 = vld [vmem:[%s8 + $0x88] sm:$0xff]
    %v1901 = vld [vmem:[%s8 + $0x90] sm:$0xff]
    %v1902 = vld [vmem:[%s8 + $0x98] sm:$0xff]
    %v1903 = vld [vmem:[%s8 + $0xa0] sm:$0xff]
    %v1904 = vld [vmem:[%s8 + $0xa8] sm:$0xff]
    %v1905 = vld [vmem:[%s8 + $0xb0] sm:$0xff]
    %v1906 = vld [vmem:[%s8 + $0xb8] sm:$0xff]
    %v1907 = vld [vmem:[%s8 + $0xc0] sm:$0xff]
    %v1908 = vld [vmem:[%s8 + $0xc8] sm:$0xff]
    %v1909 = vld [vmem:[%s8 + $0xd0] sm:$0xff]
    %v1910 = vld [vmem:[%s8 + $0xd8] sm:$0xff]
    %v1911 = vld [vmem:[%s8 + $0xe0] sm:$0xff]
    %v1912 = vld [vmem:[%s8 + $0xe8] sm:$0xff]
    %v1913 = vld [vmem:[%s8 + $0xf0] sm:$0xff]
    %v1914 = vld [vmem:[%s8 + $0xf8] sm:$0xff]
    %vm1915 = vcmask 523264
    %v1917 = vsel %vm1915, %v1880, 0
    %1919 = vmatprep.subr.mxu0 %v1884
    %1920 = vmatpush1.msra.mxu0 %v1883
    %1921 = vmatprep.subr.mxu0 %v1888
    %1922 = vmatpush1.msra.mxu0 %v1887
    %1923 = vmatprep.subr.mxu0 %v1892
    %1924 = vmatpush1.msra.mxu0 %v1891
    %1925 = vmatprep.subr.mxu0 %v1896
    %1926 = vmatpush1.msra.mxu0 %v1895
    %1927 = vmatprep.subr.mxu0 %v1900
    %1928 = vmatpush1.msra.mxu0 %v1899
    %1929 = vmatprep.subr.mxu0 %v1904
    %1930 = vmatpush1.msra.mxu0 %v1903
    %1931 = vmatprep.subr.mxu0 %v1908
    %1932 = vmatpush1.msra.mxu0 %v1907
    %1933 = vmatprep.subr.mxu0 %v1912
    %1934 = vmatpush1.msra.mxu0 %v1911
    %1935 = vmatprep.subr.mxu0 0.0
    %1936 = vmatpush1.msra.mxu0 0.0
    %1937 = vmatprep.subr.mxu0 0.0
    %1938 = vmatpush1.msra.mxu0 0.0
    %1939 = vmatprep.subr.mxu0 0.0
    %1940 = vmatpush1.msra.mxu0 0.0
    %1941 = vmatprep.subr.mxu0 0.0
    %1942 = vmatpush1.msra.mxu0 0.0
    %1943 = vmatprep.subr.mxu0 0.0
    %1944 = vmatpush1.msra.mxu0 0.0
    %1945 = vmatprep.subr.mxu0 0.0
    %1946 = vmatpush1.msra.mxu0 0.0
    %1947 = vmatprep.subr.mxu0 0.0
    %1948 = vmatpush1.msra.mxu0 0.0
    %1949 = vmatprep.subr.mxu0 0.0
    %1950 = vmatpush1.msra.mxu0 0.0
    %1951 = vmatprep.subr.mxu0 0.0
    %1952 = vmatpush1.msra.mxu0 0.0
    %1953 = vmatprep.subr.mxu0 0.0
    %1954 = vmatpush1.msra.mxu0 0.0
    %1955 = vmatprep.subr.mxu0 0.0
    %1956 = vmatpush1.msra.mxu0 0.0
    %1957 = vmatprep.subr.mxu0 0.0
    %1958 = vmatpush1.msra.mxu0 0.0
    %1959 = vmatprep.subr.mxu0 0.0
    %1960 = vmatpush1.msra.mxu0 0.0
    %1961 = vmatprep.subr.mxu0 0.0
    %1962 = vmatpush1.msra.mxu0 0.0
    %1963 = vmatprep.subr.mxu0 0.0
    %1964 = vmatpush1.msra.mxu0 0.0
    %1965 = vmatprep.subr.mxu0 0.0
    %1966 = vmatpush1.msra.mxu0 0.0
    %1967 = vmatprep.subr.mxu0 0.0
    %1968 = vmatpush1.msra.mxu0 0.0
    %1969 = vmatprep.subr.mxu0 0.0
    %1970 = vmatpush1.msra.mxu0 0.0
    %1971 = vmatprep.subr.mxu0 0.0
    %1972 = vmatpush1.msra.mxu0 0.0
    %1973 = vmatprep.subr.mxu0 0.0
    %1974 = vmatpush1.msra.mxu0 0.0
    %1975 = vmatprep.subr.mxu0 0.0
    %1976 = vmatpush1.msra.mxu0 0.0
    %1977 = vmatprep.subr.mxu0 0.0
    %1978 = vmatpush1.msra.mxu0 0.0
    %1979 = vmatprep.subr.mxu0 0.0
    %1980 = vmatpush1.msra.mxu0 0.0
    %1981 = vmatprep.subr.mxu0 0.0
    %1982 = vmatpush1.msra.mxu0 0.0
    %1983 = vmatprep.mubr.f32.mxu0 0.0
    %1984 = vmatmul.mubr.f32.gmra.mrb[0].mxu0 %v1917
    %v1985 = vpop.f32.mrb[0].mxu0
    %v1986 = vadd.f32 0.0, %v1985
    %v1987 = vpop.f32.mrb[0].mxu0
    %v1988 = vadd.f32 0.0, %v1987
    %1989 = vdwg.mxu0
    %1990 = vmatprep.subr.mxu0 %v1886
    %1991 = vmatpush1.msra.mxu0 %v1885
    %1992 = vmatprep.subr.mxu0 %v1890
    %1993 = vmatpush1.msra.mxu0 %v1889
    %1994 = vmatprep.subr.mxu0 %v1894
    %1995 = vmatpush1.msra.mxu0 %v1893
    %1996 = vmatprep.subr.mxu0 %v1898
    %1997 = vmatpush1.msra.mxu0 %v1897
    %1998 = vmatprep.subr.mxu0 %v1902
    %1999 = vmatpush1.msra.mxu0 %v1901
    %2000 = vmatprep.subr.mxu0 %v1906
    %2001 = vmatpush1.msra.mxu0 %v1905
    %2002 = vmatprep.subr.mxu0 %v1910
    %2003 = vmatpush1.msra.mxu0 %v1909
    %2004 = vmatprep.subr.mxu0 %v1914
    %2005 = vmatpush1.msra.mxu0 %v1913
    %2006 = vmatprep.subr.mxu0 0.0
    %2007 = vmatpush1.msra.mxu0 0.0
    %2008 = vmatprep.subr.mxu0 0.0
    %2009 = vmatpush1.msra.mxu0 0.0
    %2010 = vmatprep.subr.mxu0 0.0
    %2011 = vmatpush1.msra.mxu0 0.0
    %2012 = vmatprep.subr.mxu0 0.0
    %2013 = vmatpush1.msra.mxu0 0.0
    %2014 = vmatprep.subr.mxu0 0.0
    %2015 = vmatpush1.msra.mxu0 0.0
    %2016 = vmatprep.subr.mxu0 0.0
    %2017 = vmatpush1.msra.mxu0 0.0
    %2018 = vmatprep.subr.mxu0 0.0
    %2019 = vmatpush1.msra.mxu0 0.0
    %2020 = vmatprep.subr.mxu0 0.0
    %2021 = vmatpush1.msra.mxu0 0.0
    %2022 = vmatprep.subr.mxu0 0.0
    %2023 = vmatpush1.msra.mxu0 0.0
    %2024 = vmatprep.subr.mxu0 0.0
    %2025 = vmatpush1.msra.mxu0 0.0
    %2026 = vmatprep.subr.mxu0 0.0
    %2027 = vmatpush1.msra.mxu0 0.0
    %2028 = vmatprep.subr.mxu0 0.0
    %2029 = vmatpush1.msra.mxu0 0.0
    %2030 = vmatprep.subr.mxu0 0.0
    %2031 = vmatpush1.msra.mxu0 0.0
    %2032 = vmatprep.subr.mxu0 0.0
    %2033 = vmatpush1.msra.mxu0 0.0
    %2034 = vmatprep.subr.mxu0 0.0
    %2035 = vmatpush1.msra.mxu0 0.0
    %2036 = vmatprep.subr.mxu0 0.0
    %2037 = vmatpush1.msra.mxu0 0.0
    %2038 = vmatprep.subr.mxu0 0.0
    %2039 = vmatpush1.msra.mxu0 0.0
    %2040 = vmatprep.subr.mxu0 0.0
    %2041 = vmatpush1.msra.mxu0 0.0
    %2042 = vmatprep.subr.mxu0 0.0
    %2043 = vmatpush1.msra.mxu0 0.0
    %2044 = vmatprep.subr.mxu0 0.0
    %2045 = vmatpush1.msra.mxu0 0.0
    %2046 = vmatprep.subr.mxu0 0.0
    %2047 = vmatpush1.msra.mxu0 0.0
    %2048 = vmatprep.subr.mxu0 0.0
    %2049 = vmatpush1.msra.mxu0 0.0
    %2050 = vmatprep.subr.mxu0 0.0
    %2051 = vmatpush1.msra.mxu0 0.0
    %2052 = vmatprep.subr.mxu0 0.0
    %2053 = vmatpush1.msra.mxu0 0.0
    %2054 = vmatprep.mubr.f32.mxu0 0.0
    %2055 = vmatmul.mubr.f32.gmra.mrb[0].mxu0 %v1917
    %v2056 = vpop.f32.mrb[0].mxu0
    %v2057 = vadd.f32 0.0, %v2056
    %v2058 = vpop.f32.mrb[0].mxu0
    %v2059 = vadd.f32 0.0, %v2058
    %2060 = vdwg.mxu0
    %v2061 = vlaneseq
    %v2062 = vshrl.u32 %v2061, 7
    %v2063 = vsub.s32 0, %v2062
    %v2064 = vrot.slane %v1986, %v2063
    %v2065 = vlaneseq
    %v2066 = vshrl.u32 %v2065, 7
    %v2067 = vsub.s32 0, %v2066
    %v2068 = vrot.slane %v1988, %v2067
    %v2069 = vlaneseq
    %v2070 = vshrl.u32 %v2069, 7
    %v2071 = vsub.s32 0, %v2070
    %v2072 = vrot.slane %v2057, %v2071
    %v2073 = vlaneseq
    %v2074 = vshrl.u32 %v2073, 7
    %v2075 = vsub.s32 0, %v2074
    %v2076 = vrot.slane %v2059, %v2075
    %v2077 = vsub.f32 %v1505, %v2064
    %v2078 = vsub.f32 %v1507, %v2068
    %v2079 = vsub.f32 %v1647, %v2072
    %v2080 = vsub.f32 %v1649, %v2076
    %v2081 = vmul.f32 %v2077, %v2077
    %v2082 = vmul.f32 %v2078, %v2078
    %v2083 = vmul.f32 %v2079, %v2079
    %v2084 = vmul.f32 %v2080, %v2080
    %v2085 = vrot.slane %v2081, 4
    %v2086 = vadd.f32 %v2081, %v2085
    %v2087 = vrot.slane %v2086, 2
    %v2088 = vadd.f32 %v2086, %v2087
    %v2089 = vrot.slane %v2088, 1
    %v2090 = vadd.f32 %v2088, %v2089
    %v2091 = vrot.slane %v2082, 4
    %v2092 = vadd.f32 %v2082, %v2091
    %v2093 = vrot.slane %v2092, 2
    %v2094 = vadd.f32 %v2092, %v2093
    %v2095 = vrot.slane %v2094, 1
    %v2096 = vadd.f32 %v2094, %v2095
    %v2097 = vrot.slane %v2083, 4
    %v2098 = vadd.f32 %v2083, %v2097
    %v2099 = vrot.slane %v2098, 2
    %v2100 = vadd.f32 %v2098, %v2099
    %v2101 = vrot.slane %v2100, 1
    %v2102 = vadd.f32 %v2100, %v2101
    %v2103 = vrot.slane %v2084, 4
    %v2104 = vadd.f32 %v2084, %v2103
    %v2105 = vrot.slane %v2104, 2
    %v2106 = vadd.f32 %v2104, %v2105
    %v2107 = vrot.slane %v2106, 1
    %v2108 = vadd.f32 %v2106, %v2107
    %v2109 = vmul.f32 %v2090, %v354
    %v2110 = vmul.f32 %v2096, %v354
    %v2111 = vmul.f32 %v2102, %v354
    %v2112 = vmul.f32 %v2108, %v354
    %2113 = vmatprep.subr.mxu0 0.0
    %2114 = vmatpush1.msra.mxu0 %v1679
    %2115 = vmatprep.subr.mxu0 0.0
    %2116 = vmatpush1.msra.mxu0 %v1680
    %2117 = vmatprep.subr.mxu0 0.0
    %2118 = vmatpush1.msra.mxu0 %v1681
    %2119 = vmatprep.subr.mxu0 0.0
    %2120 = vmatpush1.msra.mxu0 %v1682
    %2121 = vmatprep.subr.mxu0 0.0
    %2122 = vmatpush1.msra.mxu0 %v1683
    %2123 = vmatprep.subr.mxu0 0.0
    %2124 = vmatpush1.msra.mxu0 %v1684
    %2125 = vmatprep.subr.mxu0 0.0
    %2126 = vmatpush1.msra.mxu0 %v1685
    %2127 = vmatprep.subr.mxu0 0.0
    %2128 = vmatpush1.msra.mxu0 %v1686
    %2129 = vmatprep.subr.mxu0 0.0
    %2130 = vmatpush1.msra.mxu0 %v1687
    %2131 = vmatprep.subr.mxu0 0.0
    %2132 = vmatpush1.msra.mxu0 %v1688
    %2133 = vmatprep.subr.mxu0 0.0
    %2134 = vmatpush1.msra.mxu0 %v1689
    %2135 = vmatprep.subr.mxu0 0.0
    %2136 = vmatpush1.msra.mxu0 %v1690
    %2137 = vmatprep.subr.mxu0 0.0
    %2138 = vmatpush1.msra.mxu0 %v1691
    %2139 = vmatprep.subr.mxu0 0.0
    %2140 = vmatpush1.msra.mxu0 %v1692
    %2141 = vmatprep.subr.mxu0 0.0
    %2142 = vmatpush1.msra.mxu0 %v1693
    %2143 = vmatprep.subr.mxu0 0.0
    %2144 = vmatpush1.msra.mxu0 %v1694
    %2145 = vmatprep.subr.mxu0 0.0
    %2146 = vmatpush1.msra.mxu0 %v1695
    %2147 = vmatprep.subr.mxu0 0.0
    %2148 = vmatpush1.msra.mxu0 %v1696
    %2149 = vmatprep.subr.mxu0 0.0
    %2150 = vmatpush1.msra.mxu0 %v1697
    %2151 = vmatprep.subr.mxu0 0.0
    %2152 = vmatpush1.msra.mxu0 %v1698
    %2153 = vmatprep.subr.mxu0 0.0
    %2154 = vmatpush1.msra.mxu0 %v1699
    %2155 = vmatprep.subr.mxu0 0.0
    %2156 = vmatpush1.msra.mxu0 %v1700
    %2157 = vmatprep.subr.mxu0 0.0
    %2158 = vmatpush1.msra.mxu0 %v1701
    %2159 = vmatprep.subr.mxu0 0.0
    %2160 = vmatpush1.msra.mxu0 %v1702
    %2161 = vmatprep.subr.mxu0 0.0
    %2162 = vmatpush1.msra.mxu0 %v1703
    %2163 = vmatprep.subr.mxu0 0.0
    %2164 = vmatpush1.msra.mxu0 %v1704
    %2165 = vmatprep.subr.mxu0 0.0
    %2166 = vmatpush1.msra.mxu0 %v1705
    %2167 = vmatprep.subr.mxu0 0.0
    %2168 = vmatpush1.msra.mxu0 %v1706
    %2169 = vmatprep.subr.mxu0 0.0
    %2170 = vmatpush1.msra.mxu0 %v1707
    %2171 = vmatprep.subr.mxu0 0.0
    %2172 = vmatpush1.msra.mxu0 %v1708
    %2173 = vmatprep.subr.mxu0 0.0
    %2174 = vmatpush1.msra.mxu0 %v1709
    %2175 = vmatprep.subr.mxu0 0.0
    %2176 = vmatpush1.msra.mxu0 %v1710
    %2177 = vmatprep.mubr.f32.mxu0 %v2110
    %2178 = vmatmul.mubr.f32.gmra.mrb[0].mxu0 %v2109
    %v2179 = vpop.f32.mrb[0].mxu0
    %v2180 = vadd.f32 0.0, %v2179
    %v2181 = vpop.f32.mrb[0].mxu0
    %2182 = vdwg.mxu0
    %2183 = vmatprep.subr.mxu0 0.0
    %2184 = vmatpush1.msra.mxu0 %v1711
    %2185 = vmatprep.subr.mxu0 0.0
    %2186 = vmatpush1.msra.mxu0 %v1712
    %2187 = vmatprep.subr.mxu0 0.0
    %2188 = vmatpush1.msra.mxu0 %v1713
    %2189 = vmatprep.subr.mxu0 0.0
    %2190 = vmatpush1.msra.mxu0 %v1714
    %2191 = vmatprep.subr.mxu0 0.0
    %2192 = vmatpush1.msra.mxu0 %v1715
    %2193 = vmatprep.subr.mxu0 0.0
    %2194 = vmatpush1.msra.mxu0 %v1716
    %2195 = vmatprep.subr.mxu0 0.0
    %2196 = vmatpush1.msra.mxu0 %v1717
    %2197 = vmatprep.subr.mxu0 0.0
    %2198 = vmatpush1.msra.mxu0 %v1718
    %2199 = vmatprep.subr.mxu0 0.0
    %2200 = vmatpush1.msra.mxu0 %v1719
    %2201 = vmatprep.subr.mxu0 0.0
    %2202 = vmatpush1.msra.mxu0 %v1720
    %2203 = vmatprep.subr.mxu0 0.0
    %2204 = vmatpush1.msra.mxu0 %v1721
    %2205 = vmatprep.subr.mxu0 0.0
    %2206 = vmatpush1.msra.mxu0 %v1722
    %2207 = vmatprep.subr.mxu0 0.0
    %2208 = vmatpush1.msra.mxu0 %v1723
    %2209 = vmatprep.subr.mxu0 0.0
    %2210 = vmatpush1.msra.mxu0 %v1724
    %2211 = vmatprep.subr.mxu0 0.0
    %2212 = vmatpush1.msra.mxu0 %v1725
    %2213 = vmatprep.subr.mxu0 0.0
    %2214 = vmatpush1.msra.mxu0 %v1726
    %2215 = vmatprep.subr.mxu0 0.0
    %2216 = vmatpush1.msra.mxu0 %v1727
    %2217 = vmatprep.subr.mxu0 0.0
    %2218 = vmatpush1.msra.mxu0 %v1728
    %2219 = vmatprep.subr.mxu0 0.0
    %2220 = vmatpush1.msra.mxu0 %v1729
    %2221 = vmatprep.subr.mxu0 0.0
    %2222 = vmatpush1.msra.mxu0 %v1730
    %2223 = vmatprep.subr.mxu0 0.0
    %2224 = vmatpush1.msra.mxu0 %v1731
    %2225 = vmatprep.subr.mxu0 0.0
    %2226 = vmatpush1.msra.mxu0 %v1732
    %2227 = vmatprep.subr.mxu0 0.0
    %2228 = vmatpush1.msra.mxu0 %v1733
    %2229 = vmatprep.subr.mxu0 0.0
    %2230 = vmatpush1.msra.mxu0 %v1734
    %2231 = vmatprep.subr.mxu0 0.0
    %2232 = vmatpush1.msra.mxu0 %v1735
    %2233 = vmatprep.subr.mxu0 0.0
    %2234 = vmatpush1.msra.mxu0 %v1736
    %2235 = vmatprep.subr.mxu0 0.0
    %2236 = vmatpush1.msra.mxu0 %v1737
    %2237 = vmatprep.subr.mxu0 0.0
    %2238 = vmatpush1.msra.mxu0 %v1738
    %2239 = vmatprep.subr.mxu0 0.0
    %2240 = vmatpush1.msra.mxu0 %v1739
    %2241 = vmatprep.subr.mxu0 0.0
    %2242 = vmatpush1.msra.mxu0 %v1740
    %2243 = vmatprep.subr.mxu0 0.0
    %2244 = vmatpush1.msra.mxu0 %v1741
    %2245 = vmatprep.subr.mxu0 0.0
    %2246 = vmatpush1.msra.mxu0 %v1742
    %2247 = vmatprep.mubr.f32.mxu0 %v2112
    %2248 = vmatmul.mubr.f32.gmra.mrb[0].mxu0 %v2111
    %v2249 = vpop.f32.mrb[0].mxu0
    %v2250 = vadd.f32 %v2180, %v2249
    %v2251 = vpop.f32.mrb[0].mxu0
    %2252 = vdwg.mxu0
    %v2254 = vsel %vm1915, %v2250, 0
    %2256 = vmatprep.subr.mxu0 %v1884
    %2257 = vmatpush1.msra.mxu0 %v1883
    %2258 = vmatprep.subr.mxu0 %v1888
    %2259 = vmatpush1.msra.mxu0 %v1887
    %2260 = vmatprep.subr.mxu0 %v1892
    %2261 = vmatpush1.msra.mxu0 %v1891
    %2262 = vmatprep.subr.mxu0 %v1896
    %2263 = vmatpush1.msra.mxu0 %v1895
    %2264 = vmatprep.subr.mxu0 %v1900
    %2265 = vmatpush1.msra.mxu0 %v1899
    %2266 = vmatprep.subr.mxu0 %v1904
    %2267 = vmatpush1.msra.mxu0 %v1903
    %2268 = vmatprep.subr.mxu0 %v1908
    %2269 = vmatpush1.msra.mxu0 %v1907
    %2270 = vmatprep.subr.mxu0 %v1912
    %2271 = vmatpush1.msra.mxu0 %v1911
    %2272 = vmatprep.subr.mxu0 0.0
    %2273 = vmatpush1.msra.mxu0 0.0
    %2274 = vmatprep.subr.mxu0 0.0
    %2275 = vmatpush1.msra.mxu0 0.0
    %2276 = vmatprep.subr.mxu0 0.0
    %2277 = vmatpush1.msra.mxu0 0.0
    %2278 = vmatprep.subr.mxu0 0.0
    %2279 = vmatpush1.msra.mxu0 0.0
    %2280 = vmatprep.subr.mxu0 0.0
    %2281 = vmatpush1.msra.mxu0 0.0
    %2282 = vmatprep.subr.mxu0 0.0
    %2283 = vmatpush1.msra.mxu0 0.0
    %2284 = vmatprep.subr.mxu0 0.0
    %2285 = vmatpush1.msra.mxu0 0.0
    %2286 = vmatprep.subr.mxu0 0.0
    %2287 = vmatpush1.msra.mxu0 0.0
    %2288 = vmatprep.subr.mxu0 0.0
    %2289 = vmatpush1.msra.mxu0 0.0
    %2290 = vmatprep.subr.mxu0 0.0
    %2291 = vmatpush1.msra.mxu0 0.0
    %2292 = vmatprep.subr.mxu0 0.0
    %2293 = vmatpush1.msra.mxu0 0.0
    %2294 = vmatprep.subr.mxu0 0.0
    %2295 = vmatpush1.msra.mxu0 0.0
    %2296 = vmatprep.subr.mxu0 0.0
    %2297 = vmatpush1.msra.mxu0 0.0
    %2298 = vmatprep.subr.mxu0 0.0
    %2299 = vmatpush1.msra.mxu0 0.0
    %2300 = vmatprep.subr.mxu0 0.0
    %2301 = vmatpush1.msra.mxu0 0.0
    %2302 = vmatprep.subr.mxu0 0.0
    %2303 = vmatpush1.msra.mxu0 0.0
    %2304 = vmatprep.subr.mxu0 0.0
    %2305 = vmatpush1.msra.mxu0 0.0
    %2306 = vmatprep.subr.mxu0 0.0
    %2307 = vmatpush1.msra.mxu0 0.0
    %2308 = vmatprep.subr.mxu0 0.0
    %2309 = vmatpush1.msra.mxu0 0.0
    %2310 = vmatprep.subr.mxu0 0.0
    %2311 = vmatpush1.msra.mxu0 0.0
    %2312 = vmatprep.subr.mxu0 0.0
    %2313 = vmatpush1.msra.mxu0 0.0
    %2314 = vmatprep.subr.mxu0 0.0
    %2315 = vmatpush1.msra.mxu0 0.0
    %2316 = vmatprep.subr.mxu0 0.0
    %2317 = vmatpush1.msra.mxu0 0.0
    %2318 = vmatprep.subr.mxu0 0.0
    %2319 = vmatpush1.msra.mxu0 0.0
    %2320 = vmatprep.mubr.f32.mxu0 0.0
    %2321 = vmatmul.mubr.f32.gmra.mrb[0].mxu0 %v2254
    %v2322 = vpop.f32.mrb[0].mxu0
    %v2323 = vadd.f32 1e-05, %v2322
    %v2324 = vpop.f32.mrb[0].mxu0
    %v2325 = vadd.f32 1e-05, %v2324
    %2326 = vdwg.mxu0
    %2327 = vmatprep.subr.mxu0 %v1886
    %2328 = vmatpush1.msra.mxu0 %v1885
    %2329 = vmatprep.subr.mxu0 %v1890
    %2330 = vmatpush1.msra.mxu0 %v1889
    %2331 = vmatprep.subr.mxu0 %v1894
    %2332 = vmatpush1.msra.mxu0 %v1893
    %2333 = vmatprep.subr.mxu0 %v1898
    %2334 = vmatpush1.msra.mxu0 %v1897
    %2335 = vmatprep.subr.mxu0 %v1902
    %2336 = vmatpush1.msra.mxu0 %v1901
    %2337 = vmatprep.subr.mxu0 %v1906
    %2338 = vmatpush1.msra.mxu0 %v1905
    %2339 = vmatprep.subr.mxu0 %v1910
    %2340 = vmatpush1.msra.mxu0 %v1909
    %2341 = vmatprep.subr.mxu0 %v1914
    %2342 = vmatpush1.msra.mxu0 %v1913
    %2343 = vmatprep.subr.mxu0 0.0
    %2344 = vmatpush1.msra.mxu0 0.0
    %2345 = vmatprep.subr.mxu0 0.0
    %2346 = vmatpush1.msra.mxu0 0.0
    %2347 = vmatprep.subr.mxu0 0.0
    %2348 = vmatpush1.msra.mxu0 0.0
    %2349 = vmatprep.subr.mxu0 0.0
    %2350 = vmatpush1.msra.mxu0 0.0
    %2351 = vmatprep.subr.mxu0 0.0
    %2352 = vmatpush1.msra.mxu0 0.0
    %2353 = vmatprep.subr.mxu0 0.0
    %2354 = vmatpush1.msra.mxu0 0.0
    %2355 = vmatprep.subr.mxu0 0.0
    %2356 = vmatpush1.msra.mxu0 0.0
    %2357 = vmatprep.subr.mxu0 0.0
    %2358 = vmatpush1.msra.mxu0 0.0
    %2359 = vmatprep.subr.mxu0 0.0
    %2360 = vmatpush1.msra.mxu0 0.0
    %2361 = vmatprep.subr.mxu0 0.0
    %2362 = vmatpush1.msra.mxu0 0.0
    %2363 = vmatprep.subr.mxu0 0.0
    %2364 = vmatpush1.msra.mxu0 0.0
    %2365 = vmatprep.subr.mxu0 0.0
    %2366 = vmatpush1.msra.mxu0 0.0
    %2367 = vmatprep.subr.mxu0 0.0
    %2368 = vmatpush1.msra.mxu0 0.0
    %2369 = vmatprep.subr.mxu0 0.0
    %2370 = vmatpush1.msra.mxu0 0.0
    %2371 = vmatprep.subr.mxu0 0.0
    %2372 = vmatpush1.msra.mxu0 0.0
    %2373 = vmatprep.subr.mxu0 0.0
    %2374 = vmatpush1.msra.mxu0 0.0
    %2375 = vmatprep.subr.mxu0 0.0
    %2376 = vmatpush1.msra.mxu0 0.0
    %2377 = vmatprep.subr.mxu0 0.0
    %2378 = vmatpush1.msra.mxu0 0.0
    %2379 = vmatprep.subr.mxu0 0.0
    %2380 = vmatpush1.msra.mxu0 0.0
    %2381 = vmatprep.subr.mxu0 0.0
    %2382 = vmatpush1.msra.mxu0 0.0
    %2383 = vmatprep.subr.mxu0 0.0
    %2384 = vmatpush1.msra.mxu0 0.0
    %2385 = vmatprep.subr.mxu0 0.0
    %2386 = vmatpush1.msra.mxu0 0.0
    %2387 = vmatprep.subr.mxu0 0.0
    %2388 = vmatpush1.msra.mxu0 0.0
    %2389 = vmatprep.subr.mxu0 0.0
    %2390 = vmatpush1.msra.mxu0 0.0
    %2391 = vmatprep.mubr.f32.mxu0 0.0
    %2392 = vmatmul.mubr.f32.gmra.mrb[0].mxu0 %v2254
    %v2393 = vpop.f32.mrb[0].mxu0
    %v2394 = vadd.f32 1e-05, %v2393
    %v2395 = vpop.f32.mrb[0].mxu0
    %v2396 = vadd.f32 1e-05, %v2395
    %2397 = vdwg.mxu0
    %v2398 = vrsqrt.pop %v2323
    %v2399 = vrsqrt.pop %v2325
    %v2400 = vrsqrt.pop %v2394
    %v2401 = vrsqrt.pop %v2396
    %v2402 = vlaneseq
    %v2403 = vshrl.u32 %v2402, 7
    %v2404 = vsub.s32 0, %v2403
    %v2405 = vrot.slane %v2398, %v2404
    %v2406 = vlaneseq
    %v2407 = vshrl.u32 %v2406, 7
    %v2408 = vsub.s32 0, %v2407
    %v2409 = vrot.slane %v2399, %v2408
    %v2410 = vlaneseq
    %v2411 = vshrl.u32 %v2410, 7
    %v2412 = vsub.s32 0, %v2411
    %v2413 = vrot.slane %v2400, %v2412
    %v2414 = vlaneseq
    %v2415 = vshrl.u32 %v2414, 7
    %v2416 = vsub.s32 0, %v2415
    %v2417 = vrot.slane %v2401, %v2416
    %v2418 = vmul.f32 %v2077, %v2405
    %v2419 = vmul.f32 %v2078, %v2409
    %v2420 = vmul.f32 %v2079, %v2413
    %v2421 = vmul.f32 %v2080, %v2417
    %v2422 = vmax.f32 %v2418, 0.0
    %v2423 = vmax.f32 %v2419, 0.0
    %v2424 = vmax.f32 %v2420, 0.0
    %v2425 = vmax.f32 %v2421, 0.0
    %v2426 = vld [vmem:[#allocation7] sm:$0xff]
    %v2427 = vld [vmem:[#allocation7 + $0x8] sm:$0xff]
    %v2428 = vld [vmem:[#allocation7 + $0x10] sm:$0xff]
    %v2429 = vld [vmem:[#allocation7 + $0x18] sm:$0xff]
    %v2430 = vld [vmem:[#allocation7 + $0x20] sm:$0xff]
    %v2431 = vld [vmem:[#allocation7 + $0x28] sm:$0xff]
    %v2432 = vld [vmem:[#allocation7 + $0x30] sm:$0xff]
    %v2433 = vld [vmem:[#allocation7 + $0x38] sm:$0xff]
    %v2434 = vld [vmem:[#allocation7 + $0x40] sm:$0xff]
    %v2435 = vld [vmem:[#allocation7 + $0x48] sm:$0xff]
    %v2436 = vld [vmem:[#allocation7 + $0x50] sm:$0xff]
    %v2437 = vld [vmem:[#allocation7 + $0x58] sm:$0xff]
    %v2438 = vld [vmem:[#allocation7 + $0x60] sm:$0xff]
    %v2439 = vld [vmem:[#allocation7 + $0x68] sm:$0xff]
    %v2440 = vld [vmem:[#allocation7 + $0x70] sm:$0xff]
    %v2441 = vld [vmem:[#allocation7 + $0x78] sm:$0xff]
    %v2442 = vld [vmem:[#allocation7 + $0x80] sm:$0xff]
    %v2443 = vld [vmem:[#allocation7 + $0x88] sm:$0xff]
    %v2444 = vld [vmem:[#allocation7 + $0x90] sm:$0xff]
    %v2445 = vld [vmem:[#allocation7 + $0x98] sm:$0xff]
    %v2446 = vld [vmem:[#allocation7 + $0xa0] sm:$0xff]
    %v2447 = vld [vmem:[#allocation7 + $0xa8] sm:$0xff]
    %v2448 = vld [vmem:[#allocation7 + $0xb0] sm:$0xff]
    %v2449 = vld [vmem:[#allocation7 + $0xb8] sm:$0xff]
    %v2450 = vld [vmem:[#allocation7 + $0xc0] sm:$0xff]
    %v2451 = vld [vmem:[#allocation7 + $0xc8] sm:$0xff]
    %v2452 = vld [vmem:[#allocation7 + $0xd0] sm:$0xff]
    %v2453 = vld [vmem:[#allocation7 + $0xd8] sm:$0xff]
    %v2454 = vld [vmem:[#allocation7 + $0xe0] sm:$0xff]
    %v2455 = vld [vmem:[#allocation7 + $0xe8] sm:$0xff]
    %v2456 = vld [vmem:[#allocation7 + $0xf0] sm:$0xff]
    %v2457 = vld [vmem:[#allocation7 + $0xf8] sm:$0xff]
    %v2458 = vld [vmem:[#allocation7 + $0x100] sm:$0xff]
    %v2459 = vld [vmem:[#allocation7 + $0x108] sm:$0xff]
    %v2460 = vld [vmem:[#allocation7 + $0x110] sm:$0xff]
    %v2461 = vld [vmem:[#allocation7 + $0x118] sm:$0xff]
    %v2462 = vld [vmem:[#allocation7 + $0x120] sm:$0xff]
    %v2463 = vld [vmem:[#allocation7 + $0x128] sm:$0xff]
    %v2464 = vld [vmem:[#allocation7 + $0x130] sm:$0xff]
    %v2465 = vld [vmem:[#allocation7 + $0x138] sm:$0xff]
    %v2466 = vld [vmem:[#allocation7 + $0x140] sm:$0xff]
    %v2467 = vld [vmem:[#allocation7 + $0x148] sm:$0xff]
    %v2468 = vld [vmem:[#allocation7 + $0x150] sm:$0xff]
    %v2469 = vld [vmem:[#allocation7 + $0x158] sm:$0xff]
    %v2470 = vld [vmem:[#allocation7 + $0x160] sm:$0xff]
    %v2471 = vld [vmem:[#allocation7 + $0x168] sm:$0xff]
    %v2472 = vld [vmem:[#allocation7 + $0x170] sm:$0xff]
    %v2473 = vld [vmem:[#allocation7 + $0x178] sm:$0xff]
    %v2474 = vld [vmem:[#allocation7 + $0x180] sm:$0xff]
    %v2475 = vld [vmem:[#allocation7 + $0x188] sm:$0xff]
    %v2476 = vld [vmem:[#allocation7 + $0x190] sm:$0xff]
    %v2477 = vld [vmem:[#allocation7 + $0x198] sm:$0xff]
    %v2478 = vld [vmem:[#allocation7 + $0x1a0] sm:$0xff]
    %v2479 = vld [vmem:[#allocation7 + $0x1a8] sm:$0xff]
    %v2480 = vld [vmem:[#allocation7 + $0x1b0] sm:$0xff]
    %v2481 = vld [vmem:[#allocation7 + $0x1b8] sm:$0xff]
    %v2482 = vld [vmem:[#allocation7 + $0x1c0] sm:$0xff]
    %v2483 = vld [vmem:[#allocation7 + $0x1c8] sm:$0xff]
    %v2484 = vld [vmem:[#allocation7 + $0x1d0] sm:$0xff]
    %v2485 = vld [vmem:[#allocation7 + $0x1d8] sm:$0xff]
    %v2486 = vld [vmem:[#allocation7 + $0x1e0] sm:$0xff]
    %v2487 = vld [vmem:[#allocation7 + $0x1e8] sm:$0xff]
    %v2488 = vld [vmem:[#allocation7 + $0x1f0] sm:$0xff]
    %v2489 = vld [vmem:[#allocation7 + $0x1f8] sm:$0xff]
    %v2490 = vld [vmem:[#allocation7 + $0x200] sm:$0xff]
    %v2491 = vld [vmem:[#allocation7 + $0x208] sm:$0xff]
    %v2492 = vld [vmem:[#allocation7 + $0x210] sm:$0xff]
    %v2493 = vld [vmem:[#allocation7 + $0x218] sm:$0xff]
    %v2494 = vld [vmem:[#allocation7 + $0x220] sm:$0xff]
    %v2495 = vld [vmem:[#allocation7 + $0x228] sm:$0xff]
    %v2496 = vld [vmem:[#allocation7 + $0x230] sm:$0xff]
    %v2497 = vld [vmem:[#allocation7 + $0x238] sm:$0xff]
    %v2498 = vld [vmem:[#allocation7 + $0x240] sm:$0xff]
    %v2499 = vld [vmem:[#allocation7 + $0x248] sm:$0xff]
    %v2500 = vld [vmem:[#allocation7 + $0x250] sm:$0xff]
    %v2501 = vld [vmem:[#allocation7 + $0x258] sm:$0xff]
    %v2502 = vld [vmem:[#allocation7 + $0x260] sm:$0xff]
    %v2503 = vld [vmem:[#allocation7 + $0x268] sm:$0xff]
    %v2504 = vld [vmem:[#allocation7 + $0x270] sm:$0xff]
    %v2505 = vld [vmem:[#allocation7 + $0x278] sm:$0xff]
    %v2506 = vld [vmem:[#allocation7 + $0x280] sm:$0xff]
    %v2507 = vld [vmem:[#allocation7 + $0x288] sm:$0xff]
    %v2508 = vld [vmem:[#allocation7 + $0x290] sm:$0xff]
    %v2509 = vld [vmem:[#allocation7 + $0x298] sm:$0xff]
    %v2510 = vld [vmem:[#allocation7 + $0x2a0] sm:$0xff]
    %v2511 = vld [vmem:[#allocation7 + $0x2a8] sm:$0xff]
    %v2512 = vld [vmem:[#allocation7 + $0x2b0] sm:$0xff]
    %v2513 = vld [vmem:[#allocation7 + $0x2b8] sm:$0xff]
    %v2514 = vld [vmem:[#allocation7 + $0x2c0] sm:$0xff]
    %v2515 = vld [vmem:[#allocation7 + $0x2c8] sm:$0xff]
    %v2516 = vld [vmem:[#allocation7 + $0x2d0] sm:$0xff]
    %v2517 = vld [vmem:[#allocation7 + $0x2d8] sm:$0xff]
    %v2518 = vld [vmem:[#allocation7 + $0x2e0] sm:$0xff]
    %v2519 = vld [vmem:[#allocation7 + $0x2e8] sm:$0xff]
    %v2520 = vld [vmem:[#allocation7 + $0x2f0] sm:$0xff]
    %v2521 = vld [vmem:[#allocation7 + $0x2f8] sm:$0xff]
    %v2522 = vld [vmem:[#allocation7 + $0x300] sm:$0xff]
    %v2523 = vld [vmem:[#allocation7 + $0x308] sm:$0xff]
    %v2524 = vld [vmem:[#allocation7 + $0x310] sm:$0xff]
    %v2525 = vld [vmem:[#allocation7 + $0x318] sm:$0xff]
    %v2526 = vld [vmem:[#allocation7 + $0x320] sm:$0xff]
    %v2527 = vld [vmem:[#allocation7 + $0x328] sm:$0xff]
    %v2528 = vld [vmem:[#allocation7 + $0x330] sm:$0xff]
    %v2529 = vld [vmem:[#allocation7 + $0x338] sm:$0xff]
    %v2530 = vld [vmem:[#allocation7 + $0x340] sm:$0xff]
    %v2531 = vld [vmem:[#allocation7 + $0x348] sm:$0xff]
    %v2532 = vld [vmem:[#allocation7 + $0x350] sm:$0xff]
    %v2533 = vld [vmem:[#allocation7 + $0x358] sm:$0xff]
    %v2534 = vld [vmem:[#allocation7 + $0x360] sm:$0xff]
    %v2535 = vld [vmem:[#allocation7 + $0x368] sm:$0xff]
    %v2536 = vld [vmem:[#allocation7 + $0x370] sm:$0xff]
    %v2537 = vld [vmem:[#allocation7 + $0x378] sm:$0xff]
    %v2538 = vld [vmem:[#allocation7 + $0x380] sm:$0xff]
    %v2539 = vld [vmem:[#allocation7 + $0x388] sm:$0xff]
    %v2540 = vld [vmem:[#allocation7 + $0x390] sm:$0xff]
    %v2541 = vld [vmem:[#allocation7 + $0x398] sm:$0xff]
    %v2542 = vld [vmem:[#allocation7 + $0x3a0] sm:$0xff]
    %v2543 = vld [vmem:[#allocation7 + $0x3a8] sm:$0xff]
    %v2544 = vld [vmem:[#allocation7 + $0x3b0] sm:$0xff]
    %v2545 = vld [vmem:[#allocation7 + $0x3b8] sm:$0xff]
    %v2546 = vld [vmem:[#allocation7 + $0x3c0] sm:$0xff]
    %v2547 = vld [vmem:[#allocation7 + $0x3c8] sm:$0xff]
    %v2548 = vld [vmem:[#allocation7 + $0x3d0] sm:$0xff]
    %v2549 = vld [vmem:[#allocation7 + $0x3d8] sm:$0xff]
    %v2550 = vld [vmem:[#allocation7 + $0x3e0] sm:$0xff]
    %v2551 = vld [vmem:[#allocation7 + $0x3e8] sm:$0xff]
    %v2552 = vld [vmem:[#allocation7 + $0x3f0] sm:$0xff]
    %v2553 = vld [vmem:[#allocation7 + $0x3f8] sm:$0xff]
    %v2554 = vld [vmem:[#allocation7 + $0x400] sm:$0xff]
    %v2555 = vld [vmem:[#allocation7 + $0x408] sm:$0xff]
    %v2556 = vld [vmem:[#allocation7 + $0x410] sm:$0xff]
    %v2557 = vld [vmem:[#allocation7 + $0x418] sm:$0xff]
    %v2558 = vld [vmem:[#allocation7 + $0x420] sm:$0xff]
    %v2559 = vld [vmem:[#allocation7 + $0x428] sm:$0xff]
    %v2560 = vld [vmem:[#allocation7 + $0x430] sm:$0xff]
    %v2561 = vld [vmem:[#allocation7 + $0x438] sm:$0xff]
    %v2562 = vld [vmem:[#allocation7 + $0x440] sm:$0xff]
    %v2563 = vld [vmem:[#allocation7 + $0x448] sm:$0xff]
    %v2564 = vld [vmem:[#allocation7 + $0x450] sm:$0xff]
    %v2565 = vld [vmem:[#allocation7 + $0x458] sm:$0xff]
    %v2566 = vld [vmem:[#allocation7 + $0x460] sm:$0xff]
    %v2567 = vld [vmem:[#allocation7 + $0x468] sm:$0xff]
    %v2568 = vld [vmem:[#allocation7 + $0x470] sm:$0xff]
    %v2569 = vld [vmem:[#allocation7 + $0x478] sm:$0xff]
    %v2570 = vld [vmem:[#allocation7 + $0x480] sm:$0xff]
    %v2571 = vld [vmem:[#allocation7 + $0x488] sm:$0xff]
    %v2572 = vld [vmem:[#allocation7 + $0x490] sm:$0xff]
    %v2573 = vld [vmem:[#allocation7 + $0x498] sm:$0xff]
    %v2574 = vld [vmem:[#allocation7 + $0x4a0] sm:$0xff]
    %v2575 = vld [vmem:[#allocation7 + $0x4a8] sm:$0xff]
    %v2576 = vld [vmem:[#allocation7 + $0x4b0] sm:$0xff]
    %v2577 = vld [vmem:[#allocation7 + $0x4b8] sm:$0xff]
    %v2578 = vld [vmem:[#allocation7 + $0x4c0] sm:$0xff]
    %v2579 = vld [vmem:[#allocation7 + $0x4c8] sm:$0xff]
    %v2580 = vld [vmem:[#allocation7 + $0x4d0] sm:$0xff]
    %v2581 = vld [vmem:[#allocation7 + $0x4d8] sm:$0xff]
    %v2582 = vld [vmem:[#allocation7 + $0x4e0] sm:$0xff]
    %v2583 = vld [vmem:[#allocation7 + $0x4e8] sm:$0xff]
    %v2584 = vld [vmem:[#allocation7 + $0x4f0] sm:$0xff]
    %v2585 = vld [vmem:[#allocation7 + $0x4f8] sm:$0xff]
    %v2586 = vld [vmem:[#allocation7 + $0x500] sm:$0xff]
    %v2587 = vld [vmem:[#allocation7 + $0x508] sm:$0xff]
    %v2588 = vld [vmem:[#allocation7 + $0x510] sm:$0xff]
    %v2589 = vld [vmem:[#allocation7 + $0x518] sm:$0xff]
    %v2590 = vld [vmem:[#allocation7 + $0x520] sm:$0xff]
    %v2591 = vld [vmem:[#allocation7 + $0x528] sm:$0xff]
    %v2592 = vld [vmem:[#allocation7 + $0x530] sm:$0xff]
    %v2593 = vld [vmem:[#allocation7 + $0x538] sm:$0xff]
    %v2594 = vld [vmem:[#allocation7 + $0x540] sm:$0xff]
    %v2595 = vld [vmem:[#allocation7 + $0x548] sm:$0xff]
    %v2596 = vld [vmem:[#allocation7 + $0x550] sm:$0xff]
    %v2597 = vld [vmem:[#allocation7 + $0x558] sm:$0xff]
    %v2598 = vld [vmem:[#allocation7 + $0x560] sm:$0xff]
    %v2599 = vld [vmem:[#allocation7 + $0x568] sm:$0xff]
    %v2600 = vld [vmem:[#allocation7 + $0x570] sm:$0xff]
    %v2601 = vld [vmem:[#allocation7 + $0x578] sm:$0xff]
    %v2602 = vld [vmem:[#allocation7 + $0x580] sm:$0xff]
    %v2603 = vld [vmem:[#allocation7 + $0x588] sm:$0xff]
    %v2604 = vld [vmem:[#allocation7 + $0x590] sm:$0xff]
    %v2605 = vld [vmem:[#allocation7 + $0x598] sm:$0xff]
    %v2606 = vld [vmem:[#allocation7 + $0x5a0] sm:$0xff]
    %v2607 = vld [vmem:[#allocation7 + $0x5a8] sm:$0xff]
    %v2608 = vld [vmem:[#allocation7 + $0x5b0] sm:$0xff]
    %v2609 = vld [vmem:[#allocation7 + $0x5b8] sm:$0xff]
    %v2610 = vld [vmem:[#allocation7 + $0x5c0] sm:$0xff]
    %v2611 = vld [vmem:[#allocation7 + $0x5c8] sm:$0xff]
    %v2612 = vld [vmem:[#allocation7 + $0x5d0] sm:$0xff]
    %v2613 = vld [vmem:[#allocation7 + $0x5d8] sm:$0xff]
    %v2614 = vld [vmem:[#allocation7 + $0x5e0] sm:$0xff]
    %v2615 = vld [vmem:[#allocation7 + $0x5e8] sm:$0xff]
    %v2616 = vld [vmem:[#allocation7 + $0x5f0] sm:$0xff]
    %v2617 = vld [vmem:[#allocation7 + $0x5f8] sm:$0xff]
    %v2618 = vld [vmem:[#allocation7 + $0x600] sm:$0xff]
    %v2619 = vld [vmem:[#allocation7 + $0x608] sm:$0xff]
    %v2620 = vld [vmem:[#allocation7 + $0x610] sm:$0xff]
    %v2621 = vld [vmem:[#allocation7 + $0x618] sm:$0xff]
    %v2622 = vld [vmem:[#allocation7 + $0x620] sm:$0xff]
    %v2623 = vld [vmem:[#allocation7 + $0x628] sm:$0xff]
    %v2624 = vld [vmem:[#allocation7 + $0x630] sm:$0xff]
    %v2625 = vld [vmem:[#allocation7 + $0x638] sm:$0xff]
    %v2626 = vld [vmem:[#allocation7 + $0x640] sm:$0xff]
    %v2627 = vld [vmem:[#allocation7 + $0x648] sm:$0xff]
    %v2628 = vld [vmem:[#allocation7 + $0x650] sm:$0xff]
    %v2629 = vld [vmem:[#allocation7 + $0x658] sm:$0xff]
    %v2630 = vld [vmem:[#allocation7 + $0x660] sm:$0xff]
    %v2631 = vld [vmem:[#allocation7 + $0x668] sm:$0xff]
    %v2632 = vld [vmem:[#allocation7 + $0x670] sm:$0xff]
    %v2633 = vld [vmem:[#allocation7 + $0x678] sm:$0xff]
    %v2634 = vld [vmem:[#allocation7 + $0x680] sm:$0xff]
    %v2635 = vld [vmem:[#allocation7 + $0x688] sm:$0xff]
    %v2636 = vld [vmem:[#allocation7 + $0x690] sm:$0xff]
    %v2637 = vld [vmem:[#allocation7 + $0x698] sm:$0xff]
    %v2638 = vld [vmem:[#allocation7 + $0x6a0] sm:$0xff]
    %v2639 = vld [vmem:[#allocation7 + $0x6a8] sm:$0xff]
    %v2640 = vld [vmem:[#allocation7 + $0x6b0] sm:$0xff]
    %v2641 = vld [vmem:[#allocation7 + $0x6b8] sm:$0xff]
    %v2642 = vld [vmem:[#allocation7 + $0x6c0] sm:$0xff]
    %v2643 = vld [vmem:[#allocation7 + $0x6c8] sm:$0xff]
    %v2644 = vld [vmem:[#allocation7 + $0x6d0] sm:$0xff]
    %v2645 = vld [vmem:[#allocation7 + $0x6d8] sm:$0xff]
    %v2646 = vld [vmem:[#allocation7 + $0x6e0] sm:$0xff]
    %v2647 = vld [vmem:[#allocation7 + $0x6e8] sm:$0xff]
    %v2648 = vld [vmem:[#allocation7 + $0x6f0] sm:$0xff]
    %v2649 = vld [vmem:[#allocation7 + $0x6f8] sm:$0xff]
    %v2650 = vld [vmem:[#allocation7 + $0x700] sm:$0xff]
    %v2651 = vld [vmem:[#allocation7 + $0x708] sm:$0xff]
    %v2652 = vld [vmem:[#allocation7 + $0x710] sm:$0xff]
    %v2653 = vld [vmem:[#allocation7 + $0x718] sm:$0xff]
    %v2654 = vld [vmem:[#allocation7 + $0x720] sm:$0xff]
    %v2655 = vld [vmem:[#allocation7 + $0x728] sm:$0xff]
    %v2656 = vld [vmem:[#allocation7 + $0x730] sm:$0xff]
    %v2657 = vld [vmem:[#allocation7 + $0x738] sm:$0xff]
    %v2658 = vld [vmem:[#allocation7 + $0x740] sm:$0xff]
    %v2659 = vld [vmem:[#allocation7 + $0x748] sm:$0xff]
    %v2660 = vld [vmem:[#allocation7 + $0x750] sm:$0xff]
    %v2661 = vld [vmem:[#allocation7 + $0x758] sm:$0xff]
    %v2662 = vld [vmem:[#allocation7 + $0x760] sm:$0xff]
    %v2663 = vld [vmem:[#allocation7 + $0x768] sm:$0xff]
    %v2664 = vld [vmem:[#allocation7 + $0x770] sm:$0xff]
    %v2665 = vld [vmem:[#allocation7 + $0x778] sm:$0xff]
    %v2666 = vld [vmem:[#allocation7 + $0x780] sm:$0xff]
    %v2667 = vld [vmem:[#allocation7 + $0x788] sm:$0xff]
    %v2668 = vld [vmem:[#allocation7 + $0x790] sm:$0xff]
    %v2669 = vld [vmem:[#allocation7 + $0x798] sm:$0xff]
    %v2670 = vld [vmem:[#allocation7 + $0x7a0] sm:$0xff]
    %v2671 = vld [vmem:[#allocation7 + $0x7a8] sm:$0xff]
    %v2672 = vld [vmem:[#allocation7 + $0x7b0] sm:$0xff]
    %v2673 = vld [vmem:[#allocation7 + $0x7b8] sm:$0xff]
    %v2674 = vld [vmem:[#allocation7 + $0x7c0] sm:$0xff]
    %v2675 = vld [vmem:[#allocation7 + $0x7c8] sm:$0xff]
    %v2676 = vld [vmem:[#allocation7 + $0x7d0] sm:$0xff]
    %v2677 = vld [vmem:[#allocation7 + $0x7d8] sm:$0xff]
    %v2678 = vld [vmem:[#allocation7 + $0x7e0] sm:$0xff]
    %v2679 = vld [vmem:[#allocation7 + $0x7e8] sm:$0xff]
    %v2680 = vld [vmem:[#allocation7 + $0x7f0] sm:$0xff]
    %v2681 = vld [vmem:[#allocation7 + $0x7f8] sm:$0xff]
    %v2682 = vld [vmem:[%s10] sm:$0xf]
    %v2684 = vlaneseq
    %v2685 = vshrl.u32 %v2684, 7
    %v2686 = vsub.s32 0, %v2685
    %v2687 = vrot.slane %v2682, %v2686
    %v2688 = vlaneseq
    %v2689 = vshrl.u32 %v2688, 7
    %v2690 = vsub.s32 1, %v2689
    %v2691 = vrot.slane %v2682, %v2690
    %v2692 = vlaneseq
    %v2693 = vshrl.u32 %v2692, 7
    %v2694 = vsub.s32 2, %v2693
    %v2695 = vrot.slane %v2682, %v2694
    %v2696 = vlaneseq
    %v2697 = vshrl.u32 %v2696, 7
    %v2698 = vsub.s32 3, %v2697
    %v2699 = vrot.slane %v2682, %v2698
    %2704 = vmatprep.subr.mxu0 %v2427
    %2705 = vmatpush1.msra.mxu0 %v2426
    %2706 = vmatprep.subr.mxu0 %v2431
    %2707 = vmatpush1.msra.mxu0 %v2430
    %2708 = vmatprep.subr.mxu0 %v2435
    %2709 = vmatpush1.msra.mxu0 %v2434
    %2710 = vmatprep.subr.mxu0 %v2439
    %2711 = vmatpush1.msra.mxu0 %v2438
    %2712 = vmatprep.subr.mxu0 %v2443
    %2713 = vmatpush1.msra.mxu0 %v2442
    %2714 = vmatprep.subr.mxu0 %v2447
    %2715 = vmatpush1.msra.mxu0 %v2446
    %2716 = vmatprep.subr.mxu0 %v2451
    %2717 = vmatpush1.msra.mxu0 %v2450
    %2718 = vmatprep.subr.mxu0 %v2455
    %2719 = vmatpush1.msra.mxu0 %v2454
    %2720 = vmatprep.subr.mxu0 %v2459
    %2721 = vmatpush1.msra.mxu0 %v2458
    %2722 = vmatprep.subr.mxu0 %v2463
    %2723 = vmatpush1.msra.mxu0 %v2462
    %2724 = vmatprep.subr.mxu0 %v2467
    %2725 = vmatpush1.msra.mxu0 %v2466
    %2726 = vmatprep.subr.mxu0 %v2471
    %2727 = vmatpush1.msra.mxu0 %v2470
    %2728 = vmatprep.subr.mxu0 %v2475
    %2729 = vmatpush1.msra.mxu0 %v2474
    %2730 = vmatprep.subr.mxu0 %v2479
    %2731 = vmatpush1.msra.mxu0 %v2478
    %2732 = vmatprep.subr.mxu0 %v2483
    %2733 = vmatpush1.msra.mxu0 %v2482
    %2734 = vmatprep.subr.mxu0 %v2487
    %2735 = vmatpush1.msra.mxu0 %v2486
    %2736 = vmatprep.subr.mxu0 %v2491
    %2737 = vmatpush1.msra.mxu0 %v2490
    %2738 = vmatprep.subr.mxu0 %v2495
    %2739 = vmatpush1.msra.mxu0 %v2494
    %2740 = vmatprep.subr.mxu0 %v2499
    %2741 = vmatpush1.msra.mxu0 %v2498
    %2742 = vmatprep.subr.mxu0 %v2503
    %2743 = vmatpush1.msra.mxu0 %v2502
    %2744 = vmatprep.subr.mxu0 %v2507
    %2745 = vmatpush1.msra.mxu0 %v2506
    %2746 = vmatprep.subr.mxu0 %v2511
    %2747 = vmatpush1.msra.mxu0 %v2510
    %2748 = vmatprep.subr.mxu0 %v2515
    %2749 = vmatpush1.msra.mxu0 %v2514
    %2750 = vmatprep.subr.mxu0 %v2519
    %2751 = vmatpush1.msra.mxu0 %v2518
    %2752 = vmatprep.subr.mxu0 %v2523
    %2753 = vmatpush1.msra.mxu0 %v2522
    %2754 = vmatprep.subr.mxu0 %v2527
    %2755 = vmatpush1.msra.mxu0 %v2526
    %2756 = vmatprep.subr.mxu0 %v2531
    %2757 = vmatpush1.msra.mxu0 %v2530
    %2758 = vmatprep.subr.mxu0 %v2535
    %2759 = vmatpush1.msra.mxu0 %v2534
    %2760 = vmatprep.subr.mxu0 %v2539
    %2761 = vmatpush1.msra.mxu0 %v2538
    %2762 = vmatprep.subr.mxu0 %v2543
    %2763 = vmatpush1.msra.mxu0 %v2542
    %2764 = vmatprep.subr.mxu0 %v2547
    %2765 = vmatpush1.msra.mxu0 %v2546
    %2766 = vmatprep.subr.mxu0 %v2551
    %2767 = vmatpush1.msra.mxu0 %v2550
    %2768 = vmatprep.mubr.f32.mxu0 %v2423
    %2769 = vmatmul.mubr.f32.gmra.mrb[0].mxu0 %v2422
    %v2770 = vpop.f32.mrb[0].mxu0
    %v2771 = vadd.f32 %v2687, %v2770
    %v2772 = vpop.f32.mrb[0].mxu0
    %v2773 = vadd.f32 %v2691, %v2772
    %2774 = vdwg.mxu0
    %2775 = vmatprep.subr.mxu0 %v2555
    %2776 = vmatpush1.msra.mxu0 %v2554
    %2777 = vmatprep.subr.mxu0 %v2559
    %2778 = vmatpush1.msra.mxu0 %v2558
    %2779 = vmatprep.subr.mxu0 %v2563
    %2780 = vmatpush1.msra.mxu0 %v2562
    %2781 = vmatprep.subr.mxu0 %v2567
    %2782 = vmatpush1.msra.mxu0 %v2566
    %2783 = vmatprep.subr.mxu0 %v2571
    %2784 = vmatpush1.msra.mxu0 %v2570
    %2785 = vmatprep.subr.mxu0 %v2575
    %2786 = vmatpush1.msra.mxu0 %v2574
    %2787 = vmatprep.subr.mxu0 %v2579
    %2788 = vmatpush1.msra.mxu0 %v2578
    %2789 = vmatprep.subr.mxu0 %v2583
    %2790 = vmatpush1.msra.mxu0 %v2582
    %2791 = vmatprep.subr.mxu0 %v2587
    %2792 = vmatpush1.msra.mxu0 %v2586
    %2793 = vmatprep.subr.mxu0 %v2591
    %2794 = vmatpush1.msra.mxu0 %v2590
    %2795 = vmatprep.subr.mxu0 %v2595
    %2796 = vmatpush1.msra.mxu0 %v2594
    %2797 = vmatprep.subr.mxu0 %v2599
    %2798 = vmatpush1.msra.mxu0 %v2598
    %2799 = vmatprep.subr.mxu0 %v2603
    %2800 = vmatpush1.msra.mxu0 %v2602
    %2801 = vmatprep.subr.mxu0 %v2607
    %2802 = vmatpush1.msra.mxu0 %v2606
    %2803 = vmatprep.subr.mxu0 %v2611
    %2804 = vmatpush1.msra.mxu0 %v2610
    %2805 = vmatprep.subr.mxu0 %v2615
    %2806 = vmatpush1.msra.mxu0 %v2614
    %2807 = vmatprep.subr.mxu0 %v2619
    %2808 = vmatpush1.msra.mxu0 %v2618
    %2809 = vmatprep.subr.mxu0 %v2623
    %2810 = vmatpush1.msra.mxu0 %v2622
    %2811 = vmatprep.subr.mxu0 %v2627
    %2812 = vmatpush1.msra.mxu0 %v2626
    %2813 = vmatprep.subr.mxu0 %v2631
    %2814 = vmatpush1.msra.mxu0 %v2630
    %2815 = vmatprep.subr.mxu0 %v2635
    %2816 = vmatpush1.msra.mxu0 %v2634
    %2817 = vmatprep.subr.mxu0 %v2639
    %2818 = vmatpush1.msra.mxu0 %v2638
    %2819 = vmatprep.subr.mxu0 %v2643
    %2820 = vmatpush1.msra.mxu0 %v2642
    %2821 = vmatprep.subr.mxu0 %v2647
    %2822 = vmatpush1.msra.mxu0 %v2646
    %2823 = vmatprep.subr.mxu0 %v2651
    %2824 = vmatpush1.msra.mxu0 %v2650
    %2825 = vmatprep.subr.mxu0 %v2655
    %2826 = vmatpush1.msra.mxu0 %v2654
    %2827 = vmatprep.subr.mxu0 %v2659
    %2828 = vmatpush1.msra.mxu0 %v2658
    %2829 = vmatprep.subr.mxu0 %v2663
    %2830 = vmatpush1.msra.mxu0 %v2662
    %2831 = vmatprep.subr.mxu0 %v2667
    %2832 = vmatpush1.msra.mxu0 %v2666
    %2833 = vmatprep.subr.mxu0 %v2671
    %2834 = vmatpush1.msra.mxu0 %v2670
    %2835 = vmatprep.subr.mxu0 %v2675
    %2836 = vmatpush1.msra.mxu0 %v2674
    %2837 = vmatprep.subr.mxu0 %v2679
    %2838 = vmatpush1.msra.mxu0 %v2678
    %2839 = vmatprep.mubr.f32.mxu0 %v2425
    %2840 = vmatmul.mubr.f32.gmra.mrb[0].mxu0 %v2424
    %v2841 = vpop.f32.mrb[0].mxu0
    %v2842 = vadd.f32 %v2771, %v2841
    %v2843 = vpop.f32.mrb[0].mxu0
    %v2844 = vadd.f32 %v2773, %v2843
    %2845 = vdwg.mxu0
    %2846 = vmatprep.subr.mxu0 %v2429
    %2847 = vmatpush1.msra.mxu0 %v2428
    %2848 = vmatprep.subr.mxu0 %v2433
    %2849 = vmatpush1.msra.mxu0 %v2432
    %2850 = vmatprep.subr.mxu0 %v2437
    %2851 = vmatpush1.msra.mxu0 %v2436
    %2852 = vmatprep.subr.mxu0 %v2441
    %2853 = vmatpush1.msra.mxu0 %v2440
    %2854 = vmatprep.subr.mxu0 %v2445
    %2855 = vmatpush1.msra.mxu0 %v2444
    %2856 = vmatprep.subr.mxu0 %v2449
    %2857 = vmatpush1.msra.mxu0 %v2448
    %2858 = vmatprep.subr.mxu0 %v2453
    %2859 = vmatpush1.msra.mxu0 %v2452
    %2860 = vmatprep.subr.mxu0 %v2457
    %2861 = vmatpush1.msra.mxu0 %v2456
    %2862 = vmatprep.subr.mxu0 %v2461
    %2863 = vmatpush1.msra.mxu0 %v2460
    %2864 = vmatprep.subr.mxu0 %v2465
    %2865 = vmatpush1.msra.mxu0 %v2464
    %2866 = vmatprep.subr.mxu0 %v2469
    %2867 = vmatpush1.msra.mxu0 %v2468
    %2868 = vmatprep.subr.mxu0 %v2473
    %2869 = vmatpush1.msra.mxu0 %v2472
    %2870 = vmatprep.subr.mxu0 %v2477
    %2871 = vmatpush1.msra.mxu0 %v2476
    %2872 = vmatprep.subr.mxu0 %v2481
    %2873 = vmatpush1.msra.mxu0 %v2480
    %2874 = vmatprep.subr.mxu0 %v2485
    %2875 = vmatpush1.msra.mxu0 %v2484
    %2876 = vmatprep.subr.mxu0 %v2489
    %2877 = vmatpush1.msra.mxu0 %v2488
    %2878 = vmatprep.subr.mxu0 %v2493
    %2879 = vmatpush1.msra.mxu0 %v2492
    %2880 = vmatprep.subr.mxu0 %v2497
    %2881 = vmatpush1.msra.mxu0 %v2496
    %2882 = vmatprep.subr.mxu0 %v2501
    %2883 = vmatpush1.msra.mxu0 %v2500
    %2884 = vmatprep.subr.mxu0 %v2505
    %2885 = vmatpush1.msra.mxu0 %v2504
    %2886 = vmatprep.subr.mxu0 %v2509
    %2887 = vmatpush1.msra.mxu0 %v2508
    %2888 = vmatprep.subr.mxu0 %v2513
    %2889 = vmatpush1.msra.mxu0 %v2512
    %2890 = vmatprep.subr.mxu0 %v2517
    %2891 = vmatpush1.msra.mxu0 %v2516
    %2892 = vmatprep.subr.mxu0 %v2521
    %2893 = vmatpush1.msra.mxu0 %v2520
    %2894 = vmatprep.subr.mxu0 %v2525
    %2895 = vmatpush1.msra.mxu0 %v2524
    %2896 = vmatprep.subr.mxu0 %v2529
    %2897 = vmatpush1.msra.mxu0 %v2528
    %2898 = vmatprep.subr.mxu0 %v2533
    %2899 = vmatpush1.msra.mxu0 %v2532
    %2900 = vmatprep.subr.mxu0 %v2537
    %2901 = vmatpush1.msra.mxu0 %v2536
    %2902 = vmatprep.subr.mxu0 %v2541
    %2903 = vmatpush1.msra.mxu0 %v2540
    %2904 = vmatprep.subr.mxu0 %v2545
    %2905 = vmatpush1.msra.mxu0 %v2544
    %2906 = vmatprep.subr.mxu0 %v2549
    %2907 = vmatpush1.msra.mxu0 %v2548
    %2908 = vmatprep.subr.mxu0 %v2553
    %2909 = vmatpush1.msra.mxu0 %v2552
    %2910 = vmatprep.mubr.f32.mxu0 %v2423
    %2911 = vmatmul.mubr.f32.gmra.mrb[0].mxu0 %v2422
    %v2912 = vpop.f32.mrb[0].mxu0
    %v2913 = vadd.f32 %v2695, %v2912
    %v2914 = vpop.f32.mrb[0].mxu0
    %v2915 = vadd.f32 %v2699, %v2914
    %2916 = vdwg.mxu0
    %2917 = vmatprep.subr.mxu0 %v2557
    %2918 = vmatpush1.msra.mxu0 %v2556
    %2919 = vmatprep.subr.mxu0 %v2561
    %2920 = vmatpush1.msra.mxu0 %v2560
    %2921 = vmatprep.subr.mxu0 %v2565
    %2922 = vmatpush1.msra.mxu0 %v2564
    %2923 = vmatprep.subr.mxu0 %v2569
    %2924 = vmatpush1.msra.mxu0 %v2568
    %2925 = vmatprep.subr.mxu0 %v2573
    %2926 = vmatpush1.msra.mxu0 %v2572
    %2927 = vmatprep.subr.mxu0 %v2577
    %2928 = vmatpush1.msra.mxu0 %v2576
    %2929 = vmatprep.subr.mxu0 %v2581
    %2930 = vmatpush1.msra.mxu0 %v2580
    %2931 = vmatprep.subr.mxu0 %v2585
    %2932 = vmatpush1.msra.mxu0 %v2584
    %2933 = vmatprep.subr.mxu0 %v2589
    %2934 = vmatpush1.msra.mxu0 %v2588
    %2935 = vmatprep.subr.mxu0 %v2593
    %2936 = vmatpush1.msra.mxu0 %v2592
    %2937 = vmatprep.subr.mxu0 %v2597
    %2938 = vmatpush1.msra.mxu0 %v2596
    %2939 = vmatprep.subr.mxu0 %v2601
    %2940 = vmatpush1.msra.mxu0 %v2600
    %2941 = vmatprep.subr.mxu0 %v2605
    %2942 = vmatpush1.msra.mxu0 %v2604
    %2943 = vmatprep.subr.mxu0 %v2609
    %2944 = vmatpush1.msra.mxu0 %v2608
    %2945 = vmatprep.subr.mxu0 %v2613
    %2946 = vmatpush1.msra.mxu0 %v2612
    %2947 = vmatprep.subr.mxu0 %v2617
    %2948 = vmatpush1.msra.mxu0 %v2616
    %2949 = vmatprep.subr.mxu0 %v2621
    %2950 = vmatpush1.msra.mxu0 %v2620
    %2951 = vmatprep.subr.mxu0 %v2625
    %2952 = vmatpush1.msra.mxu0 %v2624
    %2953 = vmatprep.subr.mxu0 %v2629
    %2954 = vmatpush1.msra.mxu0 %v2628
    %2955 = vmatprep.subr.mxu0 %v2633
    %2956 = vmatpush1.msra.mxu0 %v2632
    %2957 = vmatprep.subr.mxu0 %v2637
    %2958 = vmatpush1.msra.mxu0 %v2636
    %2959 = vmatprep.subr.mxu0 %v2641
    %2960 = vmatpush1.msra.mxu0 %v2640
    %2961 = vmatprep.subr.mxu0 %v2645
    %2962 = vmatpush1.msra.mxu0 %v2644
    %2963 = vmatprep.subr.mxu0 %v2649
    %2964 = vmatpush1.msra.mxu0 %v2648
    %2965 = vmatprep.subr.mxu0 %v2653
    %2966 = vmatpush1.msra.mxu0 %v2652
    %2967 = vmatprep.subr.mxu0 %v2657
    %2968 = vmatpush1.msra.mxu0 %v2656
    %2969 = vmatprep.subr.mxu0 %v2661
    %2970 = vmatpush1.msra.mxu0 %v2660
    %2971 = vmatprep.subr.mxu0 %v2665
    %2972 = vmatpush1.msra.mxu0 %v2664
    %2973 = vmatprep.subr.mxu0 %v2669
    %2974 = vmatpush1.msra.mxu0 %v2668
    %2975 = vmatprep.subr.mxu0 %v2673
    %2976 = vmatpush1.msra.mxu0 %v2672
    %2977 = vmatprep.subr.mxu0 %v2677
    %2978 = vmatpush1.msra.mxu0 %v2676
    %2979 = vmatprep.subr.mxu0 %v2681
    %2980 = vmatpush1.msra.mxu0 %v2680
    %2981 = vmatprep.mubr.f32.mxu0 %v2425
    %2982 = vmatmul.mubr.f32.gmra.mrb[0].mxu0 %v2424
    %v2983 = vpop.f32.mrb[0].mxu0
    %v2984 = vadd.f32 %v2913, %v2983
    %v2985 = vpop.f32.mrb[0].mxu0
    %v2986 = vadd.f32 %v2915, %v2985
    %2987 = vdwg.mxu0
    %v2988 = vrot.slane %v2842, 4
    %v2989 = vadd.f32 %v2842, %v2988
    %v2990 = vrot.slane %v2989, 2
    %v2991 = vadd.f32 %v2989, %v2990
    %v2992 = vrot.slane %v2991, 1
    %v2993 = vadd.f32 %v2991, %v2992
    %v2994 = vrot.slane %v2844, 4
    %v2995 = vadd.f32 %v2844, %v2994
    %v2996 = vrot.slane %v2995, 2
    %v2997 = vadd.f32 %v2995, %v2996
    %v2998 = vrot.slane %v2997, 1
    %v2999 = vadd.f32 %v2997, %v2998
    %v3000 = vrot.slane %v2984, 4
    %v3001 = vadd.f32 %v2984, %v3000
    %v3002 = vrot.slane %v3001, 2
    %v3003 = vadd.f32 %v3001, %v3002
    %v3004 = vrot.slane %v3003, 1
    %v3005 = vadd.f32 %v3003, %v3004
    %v3006 = vrot.slane %v2986, 4
    %v3007 = vadd.f32 %v2986, %v3006
    %v3008 = vrot.slane %v3007, 2
    %v3009 = vadd.f32 %v3007, %v3008
    %v3010 = vrot.slane %v3009, 1
    %v3011 = vadd.f32 %v3009, %v3010
    %v3012 = vmul.f32 %v2993, %v354
    %v3013 = vmul.f32 %v2999, %v354
    %v3014 = vmul.f32 %v3005, %v354
    %v3015 = vmul.f32 %v3011, %v354
    %v3016 = vld [vmem:[%s11] sm:$0xff]
    %v3017 = vld [vmem:[%s11 + $0x8] sm:$0xff]
    %v3018 = vld [vmem:[%s11 + $0x10] sm:$0xff]
    %v3019 = vld [vmem:[%s11 + $0x18] sm:$0xff]
    %v3020 = vld [vmem:[%s11 + $0x20] sm:$0xff]
    %v3021 = vld [vmem:[%s11 + $0x28] sm:$0xff]
    %v3022 = vld [vmem:[%s11 + $0x30] sm:$0xff]
    %v3023 = vld [vmem:[%s11 + $0x38] sm:$0xff]
    %v3024 = vld [vmem:[%s11 + $0x40] sm:$0xff]
    %v3025 = vld [vmem:[%s11 + $0x48] sm:$0xff]
    %v3026 = vld [vmem:[%s11 + $0x50] sm:$0xff]
    %v3027 = vld [vmem:[%s11 + $0x58] sm:$0xff]
    %v3028 = vld [vmem:[%s11 + $0x60] sm:$0xff]
    %v3029 = vld [vmem:[%s11 + $0x68] sm:$0xff]
    %v3030 = vld [vmem:[%s11 + $0x70] sm:$0xff]
    %v3031 = vld [vmem:[%s11 + $0x78] sm:$0xff]
    %v3032 = vld [vmem:[%s11 + $0x80] sm:$0xff]
    %v3033 = vld [vmem:[%s11 + $0x88] sm:$0xff]
    %v3034 = vld [vmem:[%s11 + $0x90] sm:$0xff]
    %v3035 = vld [vmem:[%s11 + $0x98] sm:$0xff]
    %v3036 = vld [vmem:[%s11 + $0xa0] sm:$0xff]
    %v3037 = vld [vmem:[%s11 + $0xa8] sm:$0xff]
    %v3038 = vld [vmem:[%s11 + $0xb0] sm:$0xff]
    %v3039 = vld [vmem:[%s11 + $0xb8] sm:$0xff]
    %v3040 = vld [vmem:[%s11 + $0xc0] sm:$0xff]
    %v3041 = vld [vmem:[%s11 + $0xc8] sm:$0xff]
    %v3042 = vld [vmem:[%s11 + $0xd0] sm:$0xff]
    %v3043 = vld [vmem:[%s11 + $0xd8] sm:$0xff]
    %v3044 = vld [vmem:[%s11 + $0xe0] sm:$0xff]
    %v3045 = vld [vmem:[%s11 + $0xe8] sm:$0xff]
    %v3046 = vld [vmem:[%s11 + $0xf0] sm:$0xff]
    %v3047 = vld [vmem:[%s11 + $0xf8] sm:$0xff]
    %v3048 = vld [vmem:[%s11 + $0x100] sm:$0xff]
    %v3049 = vld [vmem:[%s11 + $0x108] sm:$0xff]
    %v3050 = vld [vmem:[%s11 + $0x110] sm:$0xff]
    %v3051 = vld [vmem:[%s11 + $0x118] sm:$0xff]
    %v3052 = vld [vmem:[%s11 + $0x120] sm:$0xff]
    %v3053 = vld [vmem:[%s11 + $0x128] sm:$0xff]
    %v3054 = vld [vmem:[%s11 + $0x130] sm:$0xff]
    %v3055 = vld [vmem:[%s11 + $0x138] sm:$0xff]
    %v3056 = vld [vmem:[%s11 + $0x140] sm:$0xff]
    %v3057 = vld [vmem:[%s11 + $0x148] sm:$0xff]
    %v3058 = vld [vmem:[%s11 + $0x150] sm:$0xff]
    %v3059 = vld [vmem:[%s11 + $0x158] sm:$0xff]
    %v3060 = vld [vmem:[%s11 + $0x160] sm:$0xff]
    %v3061 = vld [vmem:[%s11 + $0x168] sm:$0xff]
    %v3062 = vld [vmem:[%s11 + $0x170] sm:$0xff]
    %v3063 = vld [vmem:[%s11 + $0x178] sm:$0xff]
    %v3064 = vld [vmem:[%s11 + $0x180] sm:$0xff]
    %v3065 = vld [vmem:[%s11 + $0x188] sm:$0xff]
    %v3066 = vld [vmem:[%s11 + $0x190] sm:$0xff]
    %v3067 = vld [vmem:[%s11 + $0x198] sm:$0xff]
    %v3068 = vld [vmem:[%s11 + $0x1a0] sm:$0xff]
    %v3069 = vld [vmem:[%s11 + $0x1a8] sm:$0xff]
    %v3070 = vld [vmem:[%s11 + $0x1b0] sm:$0xff]
    %v3071 = vld [vmem:[%s11 + $0x1b8] sm:$0xff]
    %v3072 = vld [vmem:[%s11 + $0x1c0] sm:$0xff]
    %v3073 = vld [vmem:[%s11 + $0x1c8] sm:$0xff]
    %v3074 = vld [vmem:[%s11 + $0x1d0] sm:$0xff]
    %v3075 = vld [vmem:[%s11 + $0x1d8] sm:$0xff]
    %v3076 = vld [vmem:[%s11 + $0x1e0] sm:$0xff]
    %v3077 = vld [vmem:[%s11 + $0x1e8] sm:$0xff]
    %v3078 = vld [vmem:[%s11 + $0x1f0] sm:$0xff]
    %v3079 = vld [vmem:[%s11 + $0x1f8] sm:$0xff]
    %3080 = vmatprep.subr.mxu0 0.0
    %3081 = vmatpush1.msra.mxu0 %v3016
    %3082 = vmatprep.subr.mxu0 0.0
    %3083 = vmatpush1.msra.mxu0 %v3017
    %3084 = vmatprep.subr.mxu0 0.0
    %3085 = vmatpush1.msra.mxu0 %v3018
    %3086 = vmatprep.subr.mxu0 0.0
    %3087 = vmatpush1.msra.mxu0 %v3019
    %3088 = vmatprep.subr.mxu0 0.0
    %3089 = vmatpush1.msra.mxu0 %v3020
    %3090 = vmatprep.subr.mxu0 0.0
    %3091 = vmatpush1.msra.mxu0 %v3021
    %3092 = vmatprep.subr.mxu0 0.0
    %3093 = vmatpush1.msra.mxu0 %v3022
    %3094 = vmatprep.subr.mxu0 0.0
    %3095 = vmatpush1.msra.mxu0 %v3023
    %3096 = vmatprep.subr.mxu0 0.0
    %3097 = vmatpush1.msra.mxu0 %v3024
    %3098 = vmatprep.subr.mxu0 0.0
    %3099 = vmatpush1.msra.mxu0 %v3025
    %3100 = vmatprep.subr.mxu0 0.0
    %3101 = vmatpush1.msra.mxu0 %v3026
    %3102 = vmatprep.subr.mxu0 0.0
    %3103 = vmatpush1.msra.mxu0 %v3027
    %3104 = vmatprep.subr.mxu0 0.0
    %3105 = vmatpush1.msra.mxu0 %v3028
    %3106 = vmatprep.subr.mxu0 0.0
    %3107 = vmatpush1.msra.mxu0 %v3029
    %3108 = vmatprep.subr.mxu0 0.0
    %3109 = vmatpush1.msra.mxu0 %v3030
    %3110 = vmatprep.subr.mxu0 0.0
    %3111 = vmatpush1.msra.mxu0 %v3031
    %3112 = vmatprep.subr.mxu0 0.0
    %3113 = vmatpush1.msra.mxu0 %v3032
    %3114 = vmatprep.subr.mxu0 0.0
    %3115 = vmatpush1.msra.mxu0 %v3033
    %3116 = vmatprep.subr.mxu0 0.0
    %3117 = vmatpush1.msra.mxu0 %v3034
    %3118 = vmatprep.subr.mxu0 0.0
    %3119 = vmatpush1.msra.mxu0 %v3035
    %3120 = vmatprep.subr.mxu0 0.0
    %3121 = vmatpush1.msra.mxu0 %v3036
    %3122 = vmatprep.subr.mxu0 0.0
    %3123 = vmatpush1.msra.mxu0 %v3037
    %3124 = vmatprep.subr.mxu0 0.0
    %3125 = vmatpush1.msra.mxu0 %v3038
    %3126 = vmatprep.subr.mxu0 0.0
    %3127 = vmatpush1.msra.mxu0 %v3039
    %3128 = vmatprep.subr.mxu0 0.0
    %3129 = vmatpush1.msra.mxu0 %v3040
    %3130 = vmatprep.subr.mxu0 0.0
    %3131 = vmatpush1.msra.mxu0 %v3041
    %3132 = vmatprep.subr.mxu0 0.0
    %3133 = vmatpush1.msra.mxu0 %v3042
    %3134 = vmatprep.subr.mxu0 0.0
    %3135 = vmatpush1.msra.mxu0 %v3043
    %3136 = vmatprep.subr.mxu0 0.0
    %3137 = vmatpush1.msra.mxu0 %v3044
    %3138 = vmatprep.subr.mxu0 0.0
    %3139 = vmatpush1.msra.mxu0 %v3045
    %3140 = vmatprep.subr.mxu0 0.0
    %3141 = vmatpush1.msra.mxu0 %v3046
    %3142 = vmatprep.subr.mxu0 0.0
    %3143 = vmatpush1.msra.mxu0 %v3047
    %3144 = vmatprep.mubr.f32.mxu0 %v3013
    %3145 = vmatmul.mubr.f32.gmra.mrb[0].mxu0 %v3012
    %v3146 = vpop.f32.mrb[0].mxu0
    %v3147 = vadd.f32 0.0, %v3146
    %v3148 = vpop.f32.mrb[0].mxu0
    %3149 = vdwg.mxu0
    %3150 = vmatprep.subr.mxu0 0.0
    %3151 = vmatpush1.msra.mxu0 %v3048
    %3152 = vmatprep.subr.mxu0 0.0
    %3153 = vmatpush1.msra.mxu0 %v3049
    %3154 = vmatprep.subr.mxu0 0.0
    %3155 = vmatpush1.msra.mxu0 %v3050
    %3156 = vmatprep.subr.mxu0 0.0
    %3157 = vmatpush1.msra.mxu0 %v3051
    %3158 = vmatprep.subr.mxu0 0.0
    %3159 = vmatpush1.msra.mxu0 %v3052
    %3160 = vmatprep.subr.mxu0 0.0
    %3161 = vmatpush1.msra.mxu0 %v3053
    %3162 = vmatprep.subr.mxu0 0.0
    %3163 = vmatpush1.msra.mxu0 %v3054
    %3164 = vmatprep.subr.mxu0 0.0
    %3165 = vmatpush1.msra.mxu0 %v3055
    %3166 = vmatprep.subr.mxu0 0.0
    %3167 = vmatpush1.msra.mxu0 %v3056
    %3168 = vmatprep.subr.mxu0 0.0
    %3169 = vmatpush1.msra.mxu0 %v3057
    %3170 = vmatprep.subr.mxu0 0.0
    %3171 = vmatpush1.msra.mxu0 %v3058
    %3172 = vmatprep.subr.mxu0 0.0
    %3173 = vmatpush1.msra.mxu0 %v3059
    %3174 = vmatprep.subr.mxu0 0.0
    %3175 = vmatpush1.msra.mxu0 %v3060
    %3176 = vmatprep.subr.mxu0 0.0
    %3177 = vmatpush1.msra.mxu0 %v3061
    %3178 = vmatprep.subr.mxu0 0.0
    %3179 = vmatpush1.msra.mxu0 %v3062
    %3180 = vmatprep.subr.mxu0 0.0
    %3181 = vmatpush1.msra.mxu0 %v3063
    %3182 = vmatprep.subr.mxu0 0.0
    %3183 = vmatpush1.msra.mxu0 %v3064
    %3184 = vmatprep.subr.mxu0 0.0
    %3185 = vmatpush1.msra.mxu0 %v3065
    %3186 = vmatprep.subr.mxu0 0.0
    %3187 = vmatpush1.msra.mxu0 %v3066
    %3188 = vmatprep.subr.mxu0 0.0
    %3189 = vmatpush1.msra.mxu0 %v3067
    %3190 = vmatprep.subr.mxu0 0.0
    %3191 = vmatpush1.msra.mxu0 %v3068
    %3192 = vmatprep.subr.mxu0 0.0
    %3193 = vmatpush1.msra.mxu0 %v3069
    %3194 = vmatprep.subr.mxu0 0.0
    %3195 = vmatpush1.msra.mxu0 %v3070
    %3196 = vmatprep.subr.mxu0 0.0
    %3197 = vmatpush1.msra.mxu0 %v3071
    %3198 = vmatprep.subr.mxu0 0.0
    %3199 = vmatpush1.msra.mxu0 %v3072
    %3200 = vmatprep.subr.mxu0 0.0
    %3201 = vmatpush1.msra.mxu0 %v3073
    %3202 = vmatprep.subr.mxu0 0.0
    %3203 = vmatpush1.msra.mxu0 %v3074
    %3204 = vmatprep.subr.mxu0 0.0
    %3205 = vmatpush1.msra.mxu0 %v3075
    %3206 = vmatprep.subr.mxu0 0.0
    %3207 = vmatpush1.msra.mxu0 %v3076
    %3208 = vmatprep.subr.mxu0 0.0
    %3209 = vmatpush1.msra.mxu0 %v3077
    %3210 = vmatprep.subr.mxu0 0.0
    %3211 = vmatpush1.msra.mxu0 %v3078
    %3212 = vmatprep.subr.mxu0 0.0
    %3213 = vmatpush1.msra.mxu0 %v3079
    %3214 = vmatprep.mubr.f32.mxu0 %v3015
    %3215 = vmatmul.mubr.f32.gmra.mrb[0].mxu0 %v3014
    %v3216 = vpop.f32.mrb[0].mxu0
    %v3217 = vadd.f32 %v3147, %v3216
    %v3218 = vpop.f32.mrb[0].mxu0
    %3219 = vdwg.mxu0
    %v3220 = vld [vmem:[#allocation8] sm:$0xff]
    %v3221 = vld [vmem:[#allocation8 + $0x8] sm:$0xff]
    %v3222 = vld [vmem:[#allocation8 + $0x10] sm:$0xff]
    %v3223 = vld [vmem:[#allocation8 + $0x18] sm:$0xff]
    %v3224 = vld [vmem:[#allocation8 + $0x20] sm:$0xff]
    %v3225 = vld [vmem:[#allocation8 + $0x28] sm:$0xff]
    %v3226 = vld [vmem:[#allocation8 + $0x30] sm:$0xff]
    %v3227 = vld [vmem:[#allocation8 + $0x38] sm:$0xff]
    %v3228 = vld [vmem:[#allocation8 + $0x40] sm:$0xff]
    %v3229 = vld [vmem:[#allocation8 + $0x48] sm:$0xff]
    %v3230 = vld [vmem:[#allocation8 + $0x50] sm:$0xff]
    %v3231 = vld [vmem:[#allocation8 + $0x58] sm:$0xff]
    %v3232 = vld [vmem:[#allocation8 + $0x60] sm:$0xff]
    %v3233 = vld [vmem:[#allocation8 + $0x68] sm:$0xff]
    %v3234 = vld [vmem:[#allocation8 + $0x70] sm:$0xff]
    %v3235 = vld [vmem:[#allocation8 + $0x78] sm:$0xff]
    %v3236 = vld [vmem:[#allocation8 + $0x80] sm:$0xff]
    %v3237 = vld [vmem:[#allocation8 + $0x88] sm:$0xff]
    %v3238 = vld [vmem:[#allocation8 + $0x90] sm:$0xff]
    %v3239 = vld [vmem:[#allocation8 + $0x98] sm:$0xff]
    %v3240 = vld [vmem:[#allocation8 + $0xa0] sm:$0xff]
    %v3241 = vld [vmem:[#allocation8 + $0xa8] sm:$0xff]
    %v3242 = vld [vmem:[#allocation8 + $0xb0] sm:$0xff]
    %v3243 = vld [vmem:[#allocation8 + $0xb8] sm:$0xff]
    %v3244 = vld [vmem:[#allocation8 + $0xc0] sm:$0xff]
    %v3245 = vld [vmem:[#allocation8 + $0xc8] sm:$0xff]
    %v3246 = vld [vmem:[#allocation8 + $0xd0] sm:$0xff]
    %v3247 = vld [vmem:[#allocation8 + $0xd8] sm:$0xff]
    %v3248 = vld [vmem:[#allocation8 + $0xe0] sm:$0xff]
    %v3249 = vld [vmem:[#allocation8 + $0xe8] sm:$0xff]
    %v3250 = vld [vmem:[#allocation8 + $0xf0] sm:$0xff]
    %v3251 = vld [vmem:[#allocation8 + $0xf8] sm:$0xff]
    %v3252 = vld [vmem:[#allocation8 + $0x100] sm:$0xff]
    %v3253 = vld [vmem:[#allocation8 + $0x108] sm:$0xff]
    %v3254 = vld [vmem:[#allocation8 + $0x110] sm:$0xff]
    %v3255 = vld [vmem:[#allocation8 + $0x118] sm:$0xff]
    %v3256 = vld [vmem:[#allocation8 + $0x120] sm:$0xff]
    %v3257 = vld [vmem:[#allocation8 + $0x128] sm:$0xff]
    %v3258 = vld [vmem:[#allocation8 + $0x130] sm:$0xff]
    %v3259 = vld [vmem:[#allocation8 + $0x138] sm:$0xff]
    %v3260 = vld [vmem:[#allocation8 + $0x140] sm:$0xff]
    %v3261 = vld [vmem:[#allocation8 + $0x148] sm:$0xff]
    %v3262 = vld [vmem:[#allocation8 + $0x150] sm:$0xff]
    %v3263 = vld [vmem:[#allocation8 + $0x158] sm:$0xff]
    %v3264 = vld [vmem:[#allocation8 + $0x160] sm:$0xff]
    %v3265 = vld [vmem:[#allocation8 + $0x168] sm:$0xff]
    %v3266 = vld [vmem:[#allocation8 + $0x170] sm:$0xff]
    %v3267 = vld [vmem:[#allocation8 + $0x178] sm:$0xff]
    %v3268 = vld [vmem:[#allocation8 + $0x180] sm:$0xff]
    %v3269 = vld [vmem:[#allocation8 + $0x188] sm:$0xff]
    %v3270 = vld [vmem:[#allocation8 + $0x190] sm:$0xff]
    %v3271 = vld [vmem:[#allocation8 + $0x198] sm:$0xff]
    %v3272 = vld [vmem:[#allocation8 + $0x1a0] sm:$0xff]
    %v3273 = vld [vmem:[#allocation8 + $0x1a8] sm:$0xff]
    %v3274 = vld [vmem:[#allocation8 + $0x1b0] sm:$0xff]
    %v3275 = vld [vmem:[#allocation8 + $0x1b8] sm:$0xff]
    %v3276 = vld [vmem:[#allocation8 + $0x1c0] sm:$0xff]
    %v3277 = vld [vmem:[#allocation8 + $0x1c8] sm:$0xff]
    %v3278 = vld [vmem:[#allocation8 + $0x1d0] sm:$0xff]
    %v3279 = vld [vmem:[#allocation8 + $0x1d8] sm:$0xff]
    %v3280 = vld [vmem:[#allocation8 + $0x1e0] sm:$0xff]
    %v3281 = vld [vmem:[#allocation8 + $0x1e8] sm:$0xff]
    %v3282 = vld [vmem:[#allocation8 + $0x1f0] sm:$0xff]
    %v3283 = vld [vmem:[#allocation8 + $0x1f8] sm:$0xff]
    %3284 = vmatprep.subr.mxu0 %v3221
    %3285 = vmatpush1.msra.mxu0 %v3220
    %3286 = vmatprep.subr.mxu0 %v3225
    %3287 = vmatpush1.msra.mxu0 %v3224
    %3288 = vmatprep.subr.mxu0 %v3229
    %3289 = vmatpush1.msra.mxu0 %v3228
    %3290 = vmatprep.subr.mxu0 %v3233
    %3291 = vmatpush1.msra.mxu0 %v3232
    %3292 = vmatprep.subr.mxu0 %v3237
    %3293 = vmatpush1.msra.mxu0 %v3236
    %3294 = vmatprep.subr.mxu0 %v3241
    %3295 = vmatpush1.msra.mxu0 %v3240
    %3296 = vmatprep.subr.mxu0 %v3245
    %3297 = vmatpush1.msra.mxu0 %v3244
    %3298 = vmatprep.subr.mxu0 %v3249
    %3299 = vmatpush1.msra.mxu0 %v3248
    %3300 = vmatprep.subr.mxu0 %v3253
    %3301 = vmatpush1.msra.mxu0 %v3252
    %3302 = vmatprep.subr.mxu0 %v3257
    %3303 = vmatpush1.msra.mxu0 %v3256
    %3304 = vmatprep.subr.mxu0 %v3261
    %3305 = vmatpush1.msra.mxu0 %v3260
    %3306 = vmatprep.subr.mxu0 %v3265
    %3307 = vmatpush1.msra.mxu0 %v3264
    %3308 = vmatprep.subr.mxu0 %v3269
    %3309 = vmatpush1.msra.mxu0 %v3268
    %3310 = vmatprep.subr.mxu0 %v3273
    %3311 = vmatpush1.msra.mxu0 %v3272
    %3312 = vmatprep.subr.mxu0 %v3277
    %3313 = vmatpush1.msra.mxu0 %v3276
    %3314 = vmatprep.subr.mxu0 %v3281
    %3315 = vmatpush1.msra.mxu0 %v3280
    %3316 = vmatprep.subr.mxu0 0.0
    %3317 = vmatpush1.msra.mxu0 0.0
    %3318 = vmatprep.subr.mxu0 0.0
    %3319 = vmatpush1.msra.mxu0 0.0
    %3320 = vmatprep.subr.mxu0 0.0
    %3321 = vmatpush1.msra.mxu0 0.0
    %3322 = vmatprep.subr.mxu0 0.0
    %3323 = vmatpush1.msra.mxu0 0.0
    %3324 = vmatprep.subr.mxu0 0.0
    %3325 = vmatpush1.msra.mxu0 0.0
    %3326 = vmatprep.subr.mxu0 0.0
    %3327 = vmatpush1.msra.mxu0 0.0
    %3328 = vmatprep.subr.mxu0 0.0
    %3329 = vmatpush1.msra.mxu0 0.0
    %3330 = vmatprep.subr.mxu0 0.0
    %3331 = vmatpush1.msra.mxu0 0.0
    %3332 = vmatprep.subr.mxu0 0.0
    %3333 = vmatpush1.msra.mxu0 0.0
    %3334 = vmatprep.subr.mxu0 0.0
    %3335 = vmatpush1.msra.mxu0 0.0
    %3336 = vmatprep.subr.mxu0 0.0
    %3337 = vmatpush1.msra.mxu0 0.0
    %3338 = vmatprep.subr.mxu0 0.0
    %3339 = vmatpush1.msra.mxu0 0.0
    %3340 = vmatprep.subr.mxu0 0.0
    %3341 = vmatpush1.msra.mxu0 0.0
    %3342 = vmatprep.subr.mxu0 0.0
    %3343 = vmatpush1.msra.mxu0 0.0
    %3344 = vmatprep.subr.mxu0 0.0
    %3345 = vmatpush1.msra.mxu0 0.0
    %3346 = vmatprep.subr.mxu0 0.0
    %3347 = vmatpush1.msra.mxu0 0.0
    %3348 = vmatprep.mubr.f32.mxu0 0.0
    %3349 = vmatmul.mubr.f32.gmra.mrb[0].mxu0 %v3217
    %v3350 = vpop.f32.mrb[0].mxu0
    %v3351 = vadd.f32 0.0, %v3350
    %v3352 = vpop.f32.mrb[0].mxu0
    %v3353 = vadd.f32 0.0, %v3352
    %3354 = vdwg.mxu0
    %3355 = vmatprep.subr.mxu0 %v3223
    %3356 = vmatpush1.msra.mxu0 %v3222
    %3357 = vmatprep.subr.mxu0 %v3227
    %3358 = vmatpush1.msra.mxu0 %v3226
    %3359 = vmatprep.subr.mxu0 %v3231
    %3360 = vmatpush1.msra.mxu0 %v3230
    %3361 = vmatprep.subr.mxu0 %v3235
    %3362 = vmatpush1.msra.mxu0 %v3234
    %3363 = vmatprep.subr.mxu0 %v3239
    %3364 = vmatpush1.msra.mxu0 %v3238
    %3365 = vmatprep.subr.mxu0 %v3243
    %3366 = vmatpush1.msra.mxu0 %v3242
    %3367 = vmatprep.subr.mxu0 %v3247
    %3368 = vmatpush1.msra.mxu0 %v3246
    %3369 = vmatprep.subr.mxu0 %v3251
    %3370 = vmatpush1.msra.mxu0 %v3250
    %3371 = vmatprep.subr.mxu0 %v3255
    %3372 = vmatpush1.msra.mxu0 %v3254
    %3373 = vmatprep.subr.mxu0 %v3259
    %3374 = vmatpush1.msra.mxu0 %v3258
    %3375 = vmatprep.subr.mxu0 %v3263
    %3376 = vmatpush1.msra.mxu0 %v3262
    %3377 = vmatprep.subr.mxu0 %v3267
    %3378 = vmatpush1.msra.mxu0 %v3266
    %3379 = vmatprep.subr.mxu0 %v3271
    %3380 = vmatpush1.msra.mxu0 %v3270
    %3381 = vmatprep.subr.mxu0 %v3275
    %3382 = vmatpush1.msra.mxu0 %v3274
    %3383 = vmatprep.subr.mxu0 %v3279
    %3384 = vmatpush1.msra.mxu0 %v3278
    %3385 = vmatprep.subr.mxu0 %v3283
    %3386 = vmatpush1.msra.mxu0 %v3282
    %3387 = vmatprep.subr.mxu0 0.0
    %3388 = vmatpush1.msra.mxu0 0.0
    %3389 = vmatprep.subr.mxu0 0.0
    %3390 = vmatpush1.msra.mxu0 0.0
    %3391 = vmatprep.subr.mxu0 0.0
    %3392 = vmatpush1.msra.mxu0 0.0
    %3393 = vmatprep.subr.mxu0 0.0
    %3394 = vmatpush1.msra.mxu0 0.0
    %3395 = vmatprep.subr.mxu0 0.0
    %3396 = vmatpush1.msra.mxu0 0.0
    %3397 = vmatprep.subr.mxu0 0.0
    %3398 = vmatpush1.msra.mxu0 0.0
    %3399 = vmatprep.subr.mxu0 0.0
    %3400 = vmatpush1.msra.mxu0 0.0
    %3401 = vmatprep.subr.mxu0 0.0
    %3402 = vmatpush1.msra.mxu0 0.0
    %3403 = vmatprep.subr.mxu0 0.0
    %3404 = vmatpush1.msra.mxu0 0.0
    %3405 = vmatprep.subr.mxu0 0.0
    %3406 = vmatpush1.msra.mxu0 0.0
    %3407 = vmatprep.subr.mxu0 0.0
    %3408 = vmatpush1.msra.mxu0 0.0
    %3409 = vmatprep.subr.mxu0 0.0
    %3410 = vmatpush1.msra.mxu0 0.0
    %3411 = vmatprep.subr.mxu0 0.0
    %3412 = vmatpush1.msra.mxu0 0.0
    %3413 = vmatprep.subr.mxu0 0.0
    %3414 = vmatpush1.msra.mxu0 0.0
    %3415 = vmatprep.subr.mxu0 0.0
    %3416 = vmatpush1.msra.mxu0 0.0
    %3417 = vmatprep.subr.mxu0 0.0
    %3418 = vmatpush1.msra.mxu0 0.0
    %3419 = vmatprep.mubr.f32.mxu0 0.0
    %3420 = vmatmul.mubr.f32.gmra.mrb[0].mxu0 %v3217
    %v3421 = vpop.f32.mrb[0].mxu0
    %v3422 = vadd.f32 0.0, %v3421
    %v3423 = vpop.f32.mrb[0].mxu0
    %v3424 = vadd.f32 0.0, %v3423
    %3425 = vdwg.mxu0
    %v3426 = vlaneseq
    %v3427 = vshrl.u32 %v3426, 7
    %v3428 = vsub.s32 0, %v3427
    %v3429 = vrot.slane %v3351, %v3428
    %v3430 = vlaneseq
    %v3431 = vshrl.u32 %v3430, 7
    %v3432 = vsub.s32 0, %v3431
    %v3433 = vrot.slane %v3353, %v3432
    %v3434 = vlaneseq
    %v3435 = vshrl.u32 %v3434, 7
    %v3436 = vsub.s32 0, %v3435
    %v3437 = vrot.slane %v3422, %v3436
    %v3438 = vlaneseq
    %v3439 = vshrl.u32 %v3438, 7
    %v3440 = vsub.s32 0, %v3439
    %v3441 = vrot.slane %v3424, %v3440
    %v3442 = vsub.f32 %v2842, %v3429
    %v3443 = vsub.f32 %v2844, %v3433
    %v3444 = vsub.f32 %v2984, %v3437
    %v3445 = vsub.f32 %v2986, %v3441
    %v3446 = vmul.f32 %v3442, %v3442
    %v3447 = vmul.f32 %v3443, %v3443
    %v3448 = vmul.f32 %v3444, %v3444
    %v3449 = vmul.f32 %v3445, %v3445
    %v3450 = vrot.slane %v3446, 4
    %v3451 = vadd.f32 %v3446, %v3450
    %v3452 = vrot.slane %v3451, 2
    %v3453 = vadd.f32 %v3451, %v3452
    %v3454 = vrot.slane %v3453, 1
    %v3455 = vadd.f32 %v3453, %v3454
    %v3456 = vrot.slane %v3447, 4
    %v3457 = vadd.f32 %v3447, %v3456
    %v3458 = vrot.slane %v3457, 2
    %v3459 = vadd.f32 %v3457, %v3458
    %v3460 = vrot.slane %v3459, 1
    %v3461 = vadd.f32 %v3459, %v3460
    %v3462 = vrot.slane %v3448, 4
    %v3463 = vadd.f32 %v3448, %v3462
    %v3464 = vrot.slane %v3463, 2
    %v3465 = vadd.f32 %v3463, %v3464
    %v3466 = vrot.slane %v3465, 1
    %v3467 = vadd.f32 %v3465, %v3466
    %v3468 = vrot.slane %v3449, 4
    %v3469 = vadd.f32 %v3449, %v3468
    %v3470 = vrot.slane %v3469, 2
    %v3471 = vadd.f32 %v3469, %v3470
    %v3472 = vrot.slane %v3471, 1
    %v3473 = vadd.f32 %v3471, %v3472
    %v3474 = vmul.f32 %v3455, %v354
    %v3475 = vmul.f32 %v3461, %v354
    %v3476 = vmul.f32 %v3467, %v354
    %v3477 = vmul.f32 %v3473, %v354
    %3478 = vmatprep.subr.mxu0 0.0
    %3479 = vmatpush1.msra.mxu0 %v3016
    %3480 = vmatprep.subr.mxu0 0.0
    %3481 = vmatpush1.msra.mxu0 %v3017
    %3482 = vmatprep.subr.mxu0 0.0
    %3483 = vmatpush1.msra.mxu0 %v3018
    %3484 = vmatprep.subr.mxu0 0.0
    %3485 = vmatpush1.msra.mxu0 %v3019
    %3486 = vmatprep.subr.mxu0 0.0
    %3487 = vmatpush1.msra.mxu0 %v3020
    %3488 = vmatprep.subr.mxu0 0.0
    %3489 = vmatpush1.msra.mxu0 %v3021
    %3490 = vmatprep.subr.mxu0 0.0
    %3491 = vmatpush1.msra.mxu0 %v3022
    %3492 = vmatprep.subr.mxu0 0.0
    %3493 = vmatpush1.msra.mxu0 %v3023
    %3494 = vmatprep.subr.mxu0 0.0
    %3495 = vmatpush1.msra.mxu0 %v3024
    %3496 = vmatprep.subr.mxu0 0.0
    %3497 = vmatpush1.msra.mxu0 %v3025
    %3498 = vmatprep.subr.mxu0 0.0
    %3499 = vmatpush1.msra.mxu0 %v3026
    %3500 = vmatprep.subr.mxu0 0.0
    %3501 = vmatpush1.msra.mxu0 %v3027
    %3502 = vmatprep.subr.mxu0 0.0
    %3503 = vmatpush1.msra.mxu0 %v3028
    %3504 = vmatprep.subr.mxu0 0.0
    %3505 = vmatpush1.msra.mxu0 %v3029
    %3506 = vmatprep.subr.mxu0 0.0
    %3507 = vmatpush1.msra.mxu0 %v3030
    %3508 = vmatprep.subr.mxu0 0.0
    %3509 = vmatpush1.msra.mxu0 %v3031
    %3510 = vmatprep.subr.mxu0 0.0
    %3511 = vmatpush1.msra.mxu0 %v3032
    %3512 = vmatprep.subr.mxu0 0.0
    %3513 = vmatpush1.msra.mxu0 %v3033
    %3514 = vmatprep.subr.mxu0 0.0
    %3515 = vmatpush1.msra.mxu0 %v3034
    %3516 = vmatprep.subr.mxu0 0.0
    %3517 = vmatpush1.msra.mxu0 %v3035
    %3518 = vmatprep.subr.mxu0 0.0
    %3519 = vmatpush1.msra.mxu0 %v3036
    %3520 = vmatprep.subr.mxu0 0.0
    %3521 = vmatpush1.msra.mxu0 %v3037
    %3522 = vmatprep.subr.mxu0 0.0
    %3523 = vmatpush1.msra.mxu0 %v3038
    %3524 = vmatprep.subr.mxu0 0.0
    %3525 = vmatpush1.msra.mxu0 %v3039
    %3526 = vmatprep.subr.mxu0 0.0
    %3527 = vmatpush1.msra.mxu0 %v3040
    %3528 = vmatprep.subr.mxu0 0.0
    %3529 = vmatpush1.msra.mxu0 %v3041
    %3530 = vmatprep.subr.mxu0 0.0
    %3531 = vmatpush1.msra.mxu0 %v3042
    %3532 = vmatprep.subr.mxu0 0.0
    %3533 = vmatpush1.msra.mxu0 %v3043
    %3534 = vmatprep.subr.mxu0 0.0
    %3535 = vmatpush1.msra.mxu0 %v3044
    %3536 = vmatprep.subr.mxu0 0.0
    %3537 = vmatpush1.msra.mxu0 %v3045
    %3538 = vmatprep.subr.mxu0 0.0
    %3539 = vmatpush1.msra.mxu0 %v3046
    %3540 = vmatprep.subr.mxu0 0.0
    %3541 = vmatpush1.msra.mxu0 %v3047
    %3542 = vmatprep.mubr.f32.mxu0 %v3475
    %3543 = vmatmul.mubr.f32.gmra.mrb[0].mxu0 %v3474
    %v3544 = vpop.f32.mrb[0].mxu0
    %v3545 = vadd.f32 0.0, %v3544
    %v3546 = vpop.f32.mrb[0].mxu0
    %3547 = vdwg.mxu0
    %3548 = vmatprep.subr.mxu0 0.0
    %3549 = vmatpush1.msra.mxu0 %v3048
    %3550 = vmatprep.subr.mxu0 0.0
    %3551 = vmatpush1.msra.mxu0 %v3049
    %3552 = vmatprep.subr.mxu0 0.0
    %3553 = vmatpush1.msra.mxu0 %v3050
    %3554 = vmatprep.subr.mxu0 0.0
    %3555 = vmatpush1.msra.mxu0 %v3051
    %3556 = vmatprep.subr.mxu0 0.0
    %3557 = vmatpush1.msra.mxu0 %v3052
    %3558 = vmatprep.subr.mxu0 0.0
    %3559 = vmatpush1.msra.mxu0 %v3053
    %3560 = vmatprep.subr.mxu0 0.0
    %3561 = vmatpush1.msra.mxu0 %v3054
    %3562 = vmatprep.subr.mxu0 0.0
    %3563 = vmatpush1.msra.mxu0 %v3055
    %3564 = vmatprep.subr.mxu0 0.0
    %3565 = vmatpush1.msra.mxu0 %v3056
    %3566 = vmatprep.subr.mxu0 0.0
    %3567 = vmatpush1.msra.mxu0 %v3057
    %3568 = vmatprep.subr.mxu0 0.0
    %3569 = vmatpush1.msra.mxu0 %v3058
    %3570 = vmatprep.subr.mxu0 0.0
    %3571 = vmatpush1.msra.mxu0 %v3059
    %3572 = vmatprep.subr.mxu0 0.0
    %3573 = vmatpush1.msra.mxu0 %v3060
    %3574 = vmatprep.subr.mxu0 0.0
    %3575 = vmatpush1.msra.mxu0 %v3061
    %3576 = vmatprep.subr.mxu0 0.0
    %3577 = vmatpush1.msra.mxu0 %v3062
    %3578 = vmatprep.subr.mxu0 0.0
    %3579 = vmatpush1.msra.mxu0 %v3063
    %3580 = vmatprep.subr.mxu0 0.0
    %3581 = vmatpush1.msra.mxu0 %v3064
    %3582 = vmatprep.subr.mxu0 0.0
    %3583 = vmatpush1.msra.mxu0 %v3065
    %3584 = vmatprep.subr.mxu0 0.0
    %3585 = vmatpush1.msra.mxu0 %v3066
    %3586 = vmatprep.subr.mxu0 0.0
    %3587 = vmatpush1.msra.mxu0 %v3067
    %3588 = vmatprep.subr.mxu0 0.0
    %3589 = vmatpush1.msra.mxu0 %v3068
    %3590 = vmatprep.subr.mxu0 0.0
    %3591 = vmatpush1.msra.mxu0 %v3069
    %3592 = vmatprep.subr.mxu0 0.0
    %3593 = vmatpush1.msra.mxu0 %v3070
    %3594 = vmatprep.subr.mxu0 0.0
    %3595 = vmatpush1.msra.mxu0 %v3071
    %3596 = vmatprep.subr.mxu0 0.0
    %3597 = vmatpush1.msra.mxu0 %v3072
    %3598 = vmatprep.subr.mxu0 0.0
    %3599 = vmatpush1.msra.mxu0 %v3073
    %3600 = vmatprep.subr.mxu0 0.0
    %3601 = vmatpush1.msra.mxu0 %v3074
    %3602 = vmatprep.subr.mxu0 0.0
    %3603 = vmatpush1.msra.mxu0 %v3075
    %3604 = vmatprep.subr.mxu0 0.0
    %3605 = vmatpush1.msra.mxu0 %v3076
    %3606 = vmatprep.subr.mxu0 0.0
    %3607 = vmatpush1.msra.mxu0 %v3077
    %3608 = vmatprep.subr.mxu0 0.0
    %3609 = vmatpush1.msra.mxu0 %v3078
    %3610 = vmatprep.subr.mxu0 0.0
    %3611 = vmatpush1.msra.mxu0 %v3079
    %3612 = vmatprep.mubr.f32.mxu0 %v3477
    %3613 = vmatmul.mubr.f32.gmra.mrb[0].mxu0 %v3476
    %v3614 = vpop.f32.mrb[0].mxu0
    %v3615 = vadd.f32 %v3545, %v3614
    %v3616 = vpop.f32.mrb[0].mxu0
    %3617 = vdwg.mxu0
    %3618 = vmatprep.subr.mxu0 %v3221
    %3619 = vmatpush1.msra.mxu0 %v3220
    %3620 = vmatprep.subr.mxu0 %v3225
    %3621 = vmatpush1.msra.mxu0 %v3224
    %3622 = vmatprep.subr.mxu0 %v3229
    %3623 = vmatpush1.msra.mxu0 %v3228
    %3624 = vmatprep.subr.mxu0 %v3233
    %3625 = vmatpush1.msra.mxu0 %v3232
    %3626 = vmatprep.subr.mxu0 %v3237
    %3627 = vmatpush1.msra.mxu0 %v3236
    %3628 = vmatprep.subr.mxu0 %v3241
    %3629 = vmatpush1.msra.mxu0 %v3240
    %3630 = vmatprep.subr.mxu0 %v3245
    %3631 = vmatpush1.msra.mxu0 %v3244
    %3632 = vmatprep.subr.mxu0 %v3249
    %3633 = vmatpush1.msra.mxu0 %v3248
    %3634 = vmatprep.subr.mxu0 %v3253
    %3635 = vmatpush1.msra.mxu0 %v3252
    %3636 = vmatprep.subr.mxu0 %v3257
    %3637 = vmatpush1.msra.mxu0 %v3256
    %3638 = vmatprep.subr.mxu0 %v3261
    %3639 = vmatpush1.msra.mxu0 %v3260
    %3640 = vmatprep.subr.mxu0 %v3265
    %3641 = vmatpush1.msra.mxu0 %v3264
    %3642 = vmatprep.subr.mxu0 %v3269
    %3643 = vmatpush1.msra.mxu0 %v3268
    %3644 = vmatprep.subr.mxu0 %v3273
    %3645 = vmatpush1.msra.mxu0 %v3272
    %3646 = vmatprep.subr.mxu0 %v3277
    %3647 = vmatpush1.msra.mxu0 %v3276
    %3648 = vmatprep.subr.mxu0 %v3281
    %3649 = vmatpush1.msra.mxu0 %v3280
    %3650 = vmatprep.subr.mxu0 0.0
    %3651 = vmatpush1.msra.mxu0 0.0
    %3652 = vmatprep.subr.mxu0 0.0
    %3653 = vmatpush1.msra.mxu0 0.0
    %3654 = vmatprep.subr.mxu0 0.0
    %3655 = vmatpush1.msra.mxu0 0.0
    %3656 = vmatprep.subr.mxu0 0.0
    %3657 = vmatpush1.msra.mxu0 0.0
    %3658 = vmatprep.subr.mxu0 0.0
    %3659 = vmatpush1.msra.mxu0 0.0
    %3660 = vmatprep.subr.mxu0 0.0
    %3661 = vmatpush1.msra.mxu0 0.0
    %3662 = vmatprep.subr.mxu0 0.0
    %3663 = vmatpush1.msra.mxu0 0.0
    %3664 = vmatprep.subr.mxu0 0.0
    %3665 = vmatpush1.msra.mxu0 0.0
    %3666 = vmatprep.subr.mxu0 0.0
    %3667 = vmatpush1.msra.mxu0 0.0
    %3668 = vmatprep.subr.mxu0 0.0
    %3669 = vmatpush1.msra.mxu0 0.0
    %3670 = vmatprep.subr.mxu0 0.0
    %3671 = vmatpush1.msra.mxu0 0.0
    %3672 = vmatprep.subr.mxu0 0.0
    %3673 = vmatpush1.msra.mxu0 0.0
    %3674 = vmatprep.subr.mxu0 0.0
    %3675 = vmatpush1.msra.mxu0 0.0
    %3676 = vmatprep.subr.mxu0 0.0
    %3677 = vmatpush1.msra.mxu0 0.0
    %3678 = vmatprep.subr.mxu0 0.0
    %3679 = vmatpush1.msra.mxu0 0.0
    %3680 = vmatprep.subr.mxu0 0.0
    %3681 = vmatpush1.msra.mxu0 0.0
    %3682 = vmatprep.mubr.f32.mxu0 0.0
    %3683 = vmatmul.mubr.f32.gmra.mrb[0].mxu0 %v3615
    %v3684 = vpop.f32.mrb[0].mxu0
    %v3685 = vadd.f32 1e-05, %v3684
    %v3686 = vpop.f32.mrb[0].mxu0
    %v3687 = vadd.f32 1e-05, %v3686
    %3688 = vdwg.mxu0
    %3689 = vmatprep.subr.mxu0 %v3223
    %3690 = vmatpush1.msra.mxu0 %v3222
    %3691 = vmatprep.subr.mxu0 %v3227
    %3692 = vmatpush1.msra.mxu0 %v3226
    %3693 = vmatprep.subr.mxu0 %v3231
    %3694 = vmatpush1.msra.mxu0 %v3230
    %3695 = vmatprep.subr.mxu0 %v3235
    %3696 = vmatpush1.msra.mxu0 %v3234
    %3697 = vmatprep.subr.mxu0 %v3239
    %3698 = vmatpush1.msra.mxu0 %v3238
    %3699 = vmatprep.subr.mxu0 %v3243
    %3700 = vmatpush1.msra.mxu0 %v3242
    %3701 = vmatprep.subr.mxu0 %v3247
    %3702 = vmatpush1.msra.mxu0 %v3246
    %3703 = vmatprep.subr.mxu0 %v3251
    %3704 = vmatpush1.msra.mxu0 %v3250
    %3705 = vmatprep.subr.mxu0 %v3255
    %3706 = vmatpush1.msra.mxu0 %v3254
    %3707 = vmatprep.subr.mxu0 %v3259
    %3708 = vmatpush1.msra.mxu0 %v3258
    %3709 = vmatprep.subr.mxu0 %v3263
    %3710 = vmatpush1.msra.mxu0 %v3262
    %3711 = vmatprep.subr.mxu0 %v3267
    %3712 = vmatpush1.msra.mxu0 %v3266
    %3713 = vmatprep.subr.mxu0 %v3271
    %3714 = vmatpush1.msra.mxu0 %v3270
    %3715 = vmatprep.subr.mxu0 %v3275
    %3716 = vmatpush1.msra.mxu0 %v3274
    %3717 = vmatprep.subr.mxu0 %v3279
    %3718 = vmatpush1.msra.mxu0 %v3278
    %3719 = vmatprep.subr.mxu0 %v3283
    %3720 = vmatpush1.msra.mxu0 %v3282
    %3721 = vmatprep.subr.mxu0 0.0
    %3722 = vmatpush1.msra.mxu0 0.0
    %3723 = vmatprep.subr.mxu0 0.0
    %3724 = vmatpush1.msra.mxu0 0.0
    %3725 = vmatprep.subr.mxu0 0.0
    %3726 = vmatpush1.msra.mxu0 0.0
    %3727 = vmatprep.subr.mxu0 0.0
    %3728 = vmatpush1.msra.mxu0 0.0
    %3729 = vmatprep.subr.mxu0 0.0
    %3730 = vmatpush1.msra.mxu0 0.0
    %3731 = vmatprep.subr.mxu0 0.0
    %3732 = vmatpush1.msra.mxu0 0.0
    %3733 = vmatprep.subr.mxu0 0.0
    %3734 = vmatpush1.msra.mxu0 0.0
    %3735 = vmatprep.subr.mxu0 0.0
    %3736 = vmatpush1.msra.mxu0 0.0
    %3737 = vmatprep.subr.mxu0 0.0
    %3738 = vmatpush1.msra.mxu0 0.0
    %3739 = vmatprep.subr.mxu0 0.0
    %3740 = vmatpush1.msra.mxu0 0.0
    %3741 = vmatprep.subr.mxu0 0.0
    %3742 = vmatpush1.msra.mxu0 0.0
    %3743 = vmatprep.subr.mxu0 0.0
    %3744 = vmatpush1.msra.mxu0 0.0
    %3745 = vmatprep.subr.mxu0 0.0
    %3746 = vmatpush1.msra.mxu0 0.0
    %3747 = vmatprep.subr.mxu0 0.0
    %3748 = vmatpush1.msra.mxu0 0.0
    %3749 = vmatprep.subr.mxu0 0.0
    %3750 = vmatpush1.msra.mxu0 0.0
    %3751 = vmatprep.subr.mxu0 0.0
    %3752 = vmatpush1.msra.mxu0 0.0
    %3753 = vmatprep.mubr.f32.mxu0 0.0
    %3754 = vmatmul.mubr.f32.gmra.mrb[0].mxu0 %v3615
    %v3755 = vpop.f32.mrb[0].mxu0
    %v3756 = vadd.f32 1e-05, %v3755
    %v3757 = vpop.f32.mrb[0].mxu0
    %v3758 = vadd.f32 1e-05, %v3757
    %3759 = vdwg.mxu0
    %v3760 = vrsqrt.pop %v3685
    %v3761 = vrsqrt.pop %v3687
    %v3762 = vrsqrt.pop %v3756
    %v3763 = vrsqrt.pop %v3758
    %v3764 = vlaneseq
    %v3765 = vshrl.u32 %v3764, 7
    %v3766 = vsub.s32 0, %v3765
    %v3767 = vrot.slane %v3760, %v3766
    %v3768 = vlaneseq
    %v3769 = vshrl.u32 %v3768, 7
    %v3770 = vsub.s32 0, %v3769
    %v3771 = vrot.slane %v3761, %v3770
    %v3772 = vlaneseq
    %v3773 = vshrl.u32 %v3772, 7
    %v3774 = vsub.s32 0, %v3773
    %v3775 = vrot.slane %v3762, %v3774
    %v3776 = vlaneseq
    %v3777 = vshrl.u32 %v3776, 7
    %v3778 = vsub.s32 0, %v3777
    %v3779 = vrot.slane %v3763, %v3778
    %v3780 = vmul.f32 %v3442, %v3767
    %v3781 = vmul.f32 %v3443, %v3771
    %v3782 = vmul.f32 %v3444, %v3775
    %v3783 = vmul.f32 %v3445, %v3779
    %v3784 = vmax.f32 %v3780, 0.0
    %v3785 = vmax.f32 %v3781, 0.0
    %v3786 = vmax.f32 %v3782, 0.0
    %v3787 = vmax.f32 %v3783, 0.0
    %v3788 = vld [vmem:[#allocation10] sm:$0xff]
    %v3789 = vld [vmem:[#allocation10 + $0x8] sm:$0xff]
    %v3790 = vld [vmem:[#allocation10 + $0x10] sm:$0xff]
    %v3791 = vld [vmem:[#allocation10 + $0x18] sm:$0xff]
    %v3792 = vld [vmem:[#allocation10 + $0x20] sm:$0xff]
    %v3793 = vld [vmem:[#allocation10 + $0x28] sm:$0xff]
    %v3794 = vld [vmem:[#allocation10 + $0x30] sm:$0xff]
    %v3795 = vld [vmem:[#allocation10 + $0x38] sm:$0xff]
    %v3796 = vld [vmem:[#allocation10 + $0x40] sm:$0xff]
    %v3797 = vld [vmem:[#allocation10 + $0x48] sm:$0xff]
    %v3798 = vld [vmem:[#allocation10 + $0x50] sm:$0xff]
    %v3799 = vld [vmem:[#allocation10 + $0x58] sm:$0xff]
    %v3800 = vld [vmem:[#allocation10 + $0x60] sm:$0xff]
    %v3801 = vld [vmem:[#allocation10 + $0x68] sm:$0xff]
    %v3802 = vld [vmem:[#allocation10 + $0x70] sm:$0xff]
    %v3803 = vld [vmem:[#allocation10 + $0x78] sm:$0xff]
    %v3804 = vld [vmem:[#allocation10 + $0x80] sm:$0xff]
    %v3805 = vld [vmem:[#allocation10 + $0x88] sm:$0xff]
    %v3806 = vld [vmem:[#allocation10 + $0x90] sm:$0xff]
    %v3807 = vld [vmem:[#allocation10 + $0x98] sm:$0xff]
    %v3808 = vld [vmem:[#allocation10 + $0xa0] sm:$0xff]
    %v3809 = vld [vmem:[#allocation10 + $0xa8] sm:$0xff]
    %v3810 = vld [vmem:[#allocation10 + $0xb0] sm:$0xff]
    %v3811 = vld [vmem:[#allocation10 + $0xb8] sm:$0xff]
    %v3812 = vld [vmem:[#allocation10 + $0xc0] sm:$0xff]
    %v3813 = vld [vmem:[#allocation10 + $0xc8] sm:$0xff]
    %v3814 = vld [vmem:[#allocation10 + $0xd0] sm:$0xff]
    %v3815 = vld [vmem:[#allocation10 + $0xd8] sm:$0xff]
    %v3816 = vld [vmem:[#allocation10 + $0xe0] sm:$0xff]
    %v3817 = vld [vmem:[#allocation10 + $0xe8] sm:$0xff]
    %v3818 = vld [vmem:[#allocation10 + $0xf0] sm:$0xff]
    %v3819 = vld [vmem:[#allocation10 + $0xf8] sm:$0xff]
    %v3820 = vld [vmem:[#allocation10 + $0x100] sm:$0xff]
    %v3821 = vld [vmem:[#allocation10 + $0x108] sm:$0xff]
    %v3822 = vld [vmem:[#allocation10 + $0x110] sm:$0xff]
    %v3823 = vld [vmem:[#allocation10 + $0x118] sm:$0xff]
    %v3824 = vld [vmem:[#allocation10 + $0x120] sm:$0xff]
    %v3825 = vld [vmem:[#allocation10 + $0x128] sm:$0xff]
    %v3826 = vld [vmem:[#allocation10 + $0x130] sm:$0xff]
    %v3827 = vld [vmem:[#allocation10 + $0x138] sm:$0xff]
    %v3828 = vld [vmem:[#allocation10 + $0x140] sm:$0xff]
    %v3829 = vld [vmem:[#allocation10 + $0x148] sm:$0xff]
    %v3830 = vld [vmem:[#allocation10 + $0x150] sm:$0xff]
    %v3831 = vld [vmem:[#allocation10 + $0x158] sm:$0xff]
    %v3832 = vld [vmem:[#allocation10 + $0x160] sm:$0xff]
    %v3833 = vld [vmem:[#allocation10 + $0x168] sm:$0xff]
    %v3834 = vld [vmem:[#allocation10 + $0x170] sm:$0xff]
    %v3835 = vld [vmem:[#allocation10 + $0x178] sm:$0xff]
    %v3836 = vld [vmem:[#allocation10 + $0x180] sm:$0xff]
    %v3837 = vld [vmem:[#allocation10 + $0x188] sm:$0xff]
    %v3838 = vld [vmem:[#allocation10 + $0x190] sm:$0xff]
    %v3839 = vld [vmem:[#allocation10 + $0x198] sm:$0xff]
    %v3840 = vld [vmem:[#allocation10 + $0x1a0] sm:$0xff]
    %v3841 = vld [vmem:[#allocation10 + $0x1a8] sm:$0xff]
    %v3842 = vld [vmem:[#allocation10 + $0x1b0] sm:$0xff]
    %v3843 = vld [vmem:[#allocation10 + $0x1b8] sm:$0xff]
    %v3844 = vld [vmem:[#allocation10 + $0x1c0] sm:$0xff]
    %v3845 = vld [vmem:[#allocation10 + $0x1c8] sm:$0xff]
    %v3846 = vld [vmem:[#allocation10 + $0x1d0] sm:$0xff]
    %v3847 = vld [vmem:[#allocation10 + $0x1d8] sm:$0xff]
    %v3848 = vld [vmem:[#allocation10 + $0x1e0] sm:$0xff]
    %v3849 = vld [vmem:[#allocation10 + $0x1e8] sm:$0xff]
    %v3850 = vld [vmem:[#allocation10 + $0x1f0] sm:$0xff]
    %v3851 = vld [vmem:[#allocation10 + $0x1f8] sm:$0xff]
    %v3852 = vld [vmem:[#allocation10 + $0x200] sm:$0xff]
    %v3853 = vld [vmem:[#allocation10 + $0x208] sm:$0xff]
    %v3854 = vld [vmem:[#allocation10 + $0x210] sm:$0xff]
    %v3855 = vld [vmem:[#allocation10 + $0x218] sm:$0xff]
    %v3856 = vld [vmem:[#allocation10 + $0x220] sm:$0xff]
    %v3857 = vld [vmem:[#allocation10 + $0x228] sm:$0xff]
    %v3858 = vld [vmem:[#allocation10 + $0x230] sm:$0xff]
    %v3859 = vld [vmem:[#allocation10 + $0x238] sm:$0xff]
    %v3860 = vld [vmem:[#allocation10 + $0x240] sm:$0xff]
    %v3861 = vld [vmem:[#allocation10 + $0x248] sm:$0xff]
    %v3862 = vld [vmem:[#allocation10 + $0x250] sm:$0xff]
    %v3863 = vld [vmem:[#allocation10 + $0x258] sm:$0xff]
    %v3864 = vld [vmem:[#allocation10 + $0x260] sm:$0xff]
    %v3865 = vld [vmem:[#allocation10 + $0x268] sm:$0xff]
    %v3866 = vld [vmem:[#allocation10 + $0x270] sm:$0xff]
    %v3867 = vld [vmem:[#allocation10 + $0x278] sm:$0xff]
    %v3868 = vld [vmem:[#allocation10 + $0x280] sm:$0xff]
    %v3869 = vld [vmem:[#allocation10 + $0x288] sm:$0xff]
    %v3870 = vld [vmem:[#allocation10 + $0x290] sm:$0xff]
    %v3871 = vld [vmem:[#allocation10 + $0x298] sm:$0xff]
    %v3872 = vld [vmem:[#allocation10 + $0x2a0] sm:$0xff]
    %v3873 = vld [vmem:[#allocation10 + $0x2a8] sm:$0xff]
    %v3874 = vld [vmem:[#allocation10 + $0x2b0] sm:$0xff]
    %v3875 = vld [vmem:[#allocation10 + $0x2b8] sm:$0xff]
    %v3876 = vld [vmem:[#allocation10 + $0x2c0] sm:$0xff]
    %v3877 = vld [vmem:[#allocation10 + $0x2c8] sm:$0xff]
    %v3878 = vld [vmem:[#allocation10 + $0x2d0] sm:$0xff]
    %v3879 = vld [vmem:[#allocation10 + $0x2d8] sm:$0xff]
    %v3880 = vld [vmem:[#allocation10 + $0x2e0] sm:$0xff]
    %v3881 = vld [vmem:[#allocation10 + $0x2e8] sm:$0xff]
    %v3882 = vld [vmem:[#allocation10 + $0x2f0] sm:$0xff]
    %v3883 = vld [vmem:[#allocation10 + $0x2f8] sm:$0xff]
    %v3884 = vld [vmem:[#allocation10 + $0x300] sm:$0xff]
    %v3885 = vld [vmem:[#allocation10 + $0x308] sm:$0xff]
    %v3886 = vld [vmem:[#allocation10 + $0x310] sm:$0xff]
    %v3887 = vld [vmem:[#allocation10 + $0x318] sm:$0xff]
    %v3888 = vld [vmem:[#allocation10 + $0x320] sm:$0xff]
    %v3889 = vld [vmem:[#allocation10 + $0x328] sm:$0xff]
    %v3890 = vld [vmem:[#allocation10 + $0x330] sm:$0xff]
    %v3891 = vld [vmem:[#allocation10 + $0x338] sm:$0xff]
    %v3892 = vld [vmem:[#allocation10 + $0x340] sm:$0xff]
    %v3893 = vld [vmem:[#allocation10 + $0x348] sm:$0xff]
    %v3894 = vld [vmem:[#allocation10 + $0x350] sm:$0xff]
    %v3895 = vld [vmem:[#allocation10 + $0x358] sm:$0xff]
    %v3896 = vld [vmem:[#allocation10 + $0x360] sm:$0xff]
    %v3897 = vld [vmem:[#allocation10 + $0x368] sm:$0xff]
    %v3898 = vld [vmem:[#allocation10 + $0x370] sm:$0xff]
    %v3899 = vld [vmem:[#allocation10 + $0x378] sm:$0xff]
    %v3900 = vld [vmem:[#allocation10 + $0x380] sm:$0xff]
    %v3901 = vld [vmem:[#allocation10 + $0x388] sm:$0xff]
    %v3902 = vld [vmem:[#allocation10 + $0x390] sm:$0xff]
    %v3903 = vld [vmem:[#allocation10 + $0x398] sm:$0xff]
    %v3904 = vld [vmem:[#allocation10 + $0x3a0] sm:$0xff]
    %v3905 = vld [vmem:[#allocation10 + $0x3a8] sm:$0xff]
    %v3906 = vld [vmem:[#allocation10 + $0x3b0] sm:$0xff]
    %v3907 = vld [vmem:[#allocation10 + $0x3b8] sm:$0xff]
    %v3908 = vld [vmem:[#allocation10 + $0x3c0] sm:$0xff]
    %v3909 = vld [vmem:[#allocation10 + $0x3c8] sm:$0xff]
    %v3910 = vld [vmem:[#allocation10 + $0x3d0] sm:$0xff]
    %v3911 = vld [vmem:[#allocation10 + $0x3d8] sm:$0xff]
    %v3912 = vld [vmem:[#allocation10 + $0x3e0] sm:$0xff]
    %v3913 = vld [vmem:[#allocation10 + $0x3e8] sm:$0xff]
    %v3914 = vld [vmem:[#allocation10 + $0x3f0] sm:$0xff]
    %v3915 = vld [vmem:[#allocation10 + $0x3f8] sm:$0xff]
    %v3916 = vld [vmem:[#allocation10 + $0x400] sm:$0xff]
    %v3917 = vld [vmem:[#allocation10 + $0x408] sm:$0xff]
    %v3918 = vld [vmem:[#allocation10 + $0x410] sm:$0xff]
    %v3919 = vld [vmem:[#allocation10 + $0x418] sm:$0xff]
    %v3920 = vld [vmem:[#allocation10 + $0x420] sm:$0xff]
    %v3921 = vld [vmem:[#allocation10 + $0x428] sm:$0xff]
    %v3922 = vld [vmem:[#allocation10 + $0x430] sm:$0xff]
    %v3923 = vld [vmem:[#allocation10 + $0x438] sm:$0xff]
    %v3924 = vld [vmem:[#allocation10 + $0x440] sm:$0xff]
    %v3925 = vld [vmem:[#allocation10 + $0x448] sm:$0xff]
    %v3926 = vld [vmem:[#allocation10 + $0x450] sm:$0xff]
    %v3927 = vld [vmem:[#allocation10 + $0x458] sm:$0xff]
    %v3928 = vld [vmem:[#allocation10 + $0x460] sm:$0xff]
    %v3929 = vld [vmem:[#allocation10 + $0x468] sm:$0xff]
    %v3930 = vld [vmem:[#allocation10 + $0x470] sm:$0xff]
    %v3931 = vld [vmem:[#allocation10 + $0x478] sm:$0xff]
    %v3932 = vld [vmem:[#allocation10 + $0x480] sm:$0xff]
    %v3933 = vld [vmem:[#allocation10 + $0x488] sm:$0xff]
    %v3934 = vld [vmem:[#allocation10 + $0x490] sm:$0xff]
    %v3935 = vld [vmem:[#allocation10 + $0x498] sm:$0xff]
    %v3936 = vld [vmem:[#allocation10 + $0x4a0] sm:$0xff]
    %v3937 = vld [vmem:[#allocation10 + $0x4a8] sm:$0xff]
    %v3938 = vld [vmem:[#allocation10 + $0x4b0] sm:$0xff]
    %v3939 = vld [vmem:[#allocation10 + $0x4b8] sm:$0xff]
    %v3940 = vld [vmem:[#allocation10 + $0x4c0] sm:$0xff]
    %v3941 = vld [vmem:[#allocation10 + $0x4c8] sm:$0xff]
    %v3942 = vld [vmem:[#allocation10 + $0x4d0] sm:$0xff]
    %v3943 = vld [vmem:[#allocation10 + $0x4d8] sm:$0xff]
    %v3944 = vld [vmem:[#allocation10 + $0x4e0] sm:$0xff]
    %v3945 = vld [vmem:[#allocation10 + $0x4e8] sm:$0xff]
    %v3946 = vld [vmem:[#allocation10 + $0x4f0] sm:$0xff]
    %v3947 = vld [vmem:[#allocation10 + $0x4f8] sm:$0xff]
    %v3948 = vld [vmem:[#allocation10 + $0x500] sm:$0xff]
    %v3949 = vld [vmem:[#allocation10 + $0x508] sm:$0xff]
    %v3950 = vld [vmem:[#allocation10 + $0x510] sm:$0xff]
    %v3951 = vld [vmem:[#allocation10 + $0x518] sm:$0xff]
    %v3952 = vld [vmem:[#allocation10 + $0x520] sm:$0xff]
    %v3953 = vld [vmem:[#allocation10 + $0x528] sm:$0xff]
    %v3954 = vld [vmem:[#allocation10 + $0x530] sm:$0xff]
    %v3955 = vld [vmem:[#allocation10 + $0x538] sm:$0xff]
    %v3956 = vld [vmem:[#allocation10 + $0x540] sm:$0xff]
    %v3957 = vld [vmem:[#allocation10 + $0x548] sm:$0xff]
    %v3958 = vld [vmem:[#allocation10 + $0x550] sm:$0xff]
    %v3959 = vld [vmem:[#allocation10 + $0x558] sm:$0xff]
    %v3960 = vld [vmem:[#allocation10 + $0x560] sm:$0xff]
    %v3961 = vld [vmem:[#allocation10 + $0x568] sm:$0xff]
    %v3962 = vld [vmem:[#allocation10 + $0x570] sm:$0xff]
    %v3963 = vld [vmem:[#allocation10 + $0x578] sm:$0xff]
    %v3964 = vld [vmem:[#allocation10 + $0x580] sm:$0xff]
    %v3965 = vld [vmem:[#allocation10 + $0x588] sm:$0xff]
    %v3966 = vld [vmem:[#allocation10 + $0x590] sm:$0xff]
    %v3967 = vld [vmem:[#allocation10 + $0x598] sm:$0xff]
    %v3968 = vld [vmem:[#allocation10 + $0x5a0] sm:$0xff]
    %v3969 = vld [vmem:[#allocation10 + $0x5a8] sm:$0xff]
    %v3970 = vld [vmem:[#allocation10 + $0x5b0] sm:$0xff]
    %v3971 = vld [vmem:[#allocation10 + $0x5b8] sm:$0xff]
    %v3972 = vld [vmem:[#allocation10 + $0x5c0] sm:$0xff]
    %v3973 = vld [vmem:[#allocation10 + $0x5c8] sm:$0xff]
    %v3974 = vld [vmem:[#allocation10 + $0x5d0] sm:$0xff]
    %v3975 = vld [vmem:[#allocation10 + $0x5d8] sm:$0xff]
    %v3976 = vld [vmem:[#allocation10 + $0x5e0] sm:$0xff]
    %v3977 = vld [vmem:[#allocation10 + $0x5e8] sm:$0xff]
    %v3978 = vld [vmem:[#allocation10 + $0x5f0] sm:$0xff]
    %v3979 = vld [vmem:[#allocation10 + $0x5f8] sm:$0xff]
    %v3980 = vld [vmem:[#allocation10 + $0x600] sm:$0xff]
    %v3981 = vld [vmem:[#allocation10 + $0x608] sm:$0xff]
    %v3982 = vld [vmem:[#allocation10 + $0x610] sm:$0xff]
    %v3983 = vld [vmem:[#allocation10 + $0x618] sm:$0xff]
    %v3984 = vld [vmem:[#allocation10 + $0x620] sm:$0xff]
    %v3985 = vld [vmem:[#allocation10 + $0x628] sm:$0xff]
    %v3986 = vld [vmem:[#allocation10 + $0x630] sm:$0xff]
    %v3987 = vld [vmem:[#allocation10 + $0x638] sm:$0xff]
    %v3988 = vld [vmem:[#allocation10 + $0x640] sm:$0xff]
    %v3989 = vld [vmem:[#allocation10 + $0x648] sm:$0xff]
    %v3990 = vld [vmem:[#allocation10 + $0x650] sm:$0xff]
    %v3991 = vld [vmem:[#allocation10 + $0x658] sm:$0xff]
    %v3992 = vld [vmem:[#allocation10 + $0x660] sm:$0xff]
    %v3993 = vld [vmem:[#allocation10 + $0x668] sm:$0xff]
    %v3994 = vld [vmem:[#allocation10 + $0x670] sm:$0xff]
    %v3995 = vld [vmem:[#allocation10 + $0x678] sm:$0xff]
    %v3996 = vld [vmem:[#allocation10 + $0x680] sm:$0xff]
    %v3997 = vld [vmem:[#allocation10 + $0x688] sm:$0xff]
    %v3998 = vld [vmem:[#allocation10 + $0x690] sm:$0xff]
    %v3999 = vld [vmem:[#allocation10 + $0x698] sm:$0xff]
    %v4000 = vld [vmem:[#allocation10 + $0x6a0] sm:$0xff]
    %v4001 = vld [vmem:[#allocation10 + $0x6a8] sm:$0xff]
    %v4002 = vld [vmem:[#allocation10 + $0x6b0] sm:$0xff]
    %v4003 = vld [vmem:[#allocation10 + $0x6b8] sm:$0xff]
    %v4004 = vld [vmem:[#allocation10 + $0x6c0] sm:$0xff]
    %v4005 = vld [vmem:[#allocation10 + $0x6c8] sm:$0xff]
    %v4006 = vld [vmem:[#allocation10 + $0x6d0] sm:$0xff]
    %v4007 = vld [vmem:[#allocation10 + $0x6d8] sm:$0xff]
    %v4008 = vld [vmem:[#allocation10 + $0x6e0] sm:$0xff]
    %v4009 = vld [vmem:[#allocation10 + $0x6e8] sm:$0xff]
    %v4010 = vld [vmem:[#allocation10 + $0x6f0] sm:$0xff]
    %v4011 = vld [vmem:[#allocation10 + $0x6f8] sm:$0xff]
    %v4012 = vld [vmem:[#allocation10 + $0x700] sm:$0xff]
    %v4013 = vld [vmem:[#allocation10 + $0x708] sm:$0xff]
    %v4014 = vld [vmem:[#allocation10 + $0x710] sm:$0xff]
    %v4015 = vld [vmem:[#allocation10 + $0x718] sm:$0xff]
    %v4016 = vld [vmem:[#allocation10 + $0x720] sm:$0xff]
    %v4017 = vld [vmem:[#allocation10 + $0x728] sm:$0xff]
    %v4018 = vld [vmem:[#allocation10 + $0x730] sm:$0xff]
    %v4019 = vld [vmem:[#allocation10 + $0x738] sm:$0xff]
    %v4020 = vld [vmem:[#allocation10 + $0x740] sm:$0xff]
    %v4021 = vld [vmem:[#allocation10 + $0x748] sm:$0xff]
    %v4022 = vld [vmem:[#allocation10 + $0x750] sm:$0xff]
    %v4023 = vld [vmem:[#allocation10 + $0x758] sm:$0xff]
    %v4024 = vld [vmem:[#allocation10 + $0x760] sm:$0xff]
    %v4025 = vld [vmem:[#allocation10 + $0x768] sm:$0xff]
    %v4026 = vld [vmem:[#allocation10 + $0x770] sm:$0xff]
    %v4027 = vld [vmem:[#allocation10 + $0x778] sm:$0xff]
    %v4028 = vld [vmem:[#allocation10 + $0x780] sm:$0xff]
    %v4029 = vld [vmem:[#allocation10 + $0x788] sm:$0xff]
    %v4030 = vld [vmem:[#allocation10 + $0x790] sm:$0xff]
    %v4031 = vld [vmem:[#allocation10 + $0x798] sm:$0xff]
    %v4032 = vld [vmem:[#allocation10 + $0x7a0] sm:$0xff]
    %v4033 = vld [vmem:[#allocation10 + $0x7a8] sm:$0xff]
    %v4034 = vld [vmem:[#allocation10 + $0x7b0] sm:$0xff]
    %v4035 = vld [vmem:[#allocation10 + $0x7b8] sm:$0xff]
    %v4036 = vld [vmem:[#allocation10 + $0x7c0] sm:$0xff]
    %v4037 = vld [vmem:[#allocation10 + $0x7c8] sm:$0xff]
    %v4038 = vld [vmem:[#allocation10 + $0x7d0] sm:$0xff]
    %v4039 = vld [vmem:[#allocation10 + $0x7d8] sm:$0xff]
    %v4040 = vld [vmem:[#allocation10 + $0x7e0] sm:$0xff]
    %v4041 = vld [vmem:[#allocation10 + $0x7e8] sm:$0xff]
    %v4042 = vld [vmem:[#allocation10 + $0x7f0] sm:$0xff]
    %v4043 = vld [vmem:[#allocation10 + $0x7f8] sm:$0xff]
    %v4044 = vld [vmem:[%s14] sm:$0xf]
    %v4046 = vlaneseq
    %v4047 = vshrl.u32 %v4046, 7
    %v4048 = vsub.s32 0, %v4047
    %v4049 = vrot.slane %v4044, %v4048
    %v4050 = vlaneseq
    %v4051 = vshrl.u32 %v4050, 7
    %v4052 = vsub.s32 1, %v4051
    %v4053 = vrot.slane %v4044, %v4052
    %v4054 = vlaneseq
    %v4055 = vshrl.u32 %v4054, 7
    %v4056 = vsub.s32 2, %v4055
    %v4057 = vrot.slane %v4044, %v4056
    %v4058 = vlaneseq
    %v4059 = vshrl.u32 %v4058, 7
    %v4060 = vsub.s32 3, %v4059
    %v4061 = vrot.slane %v4044, %v4060
    %4066 = vmatprep.subr.mxu0 %v3789
    %4067 = vmatpush1.msra.mxu0 %v3788
    %4068 = vmatprep.subr.mxu0 %v3793
    %4069 = vmatpush1.msra.mxu0 %v3792
    %4070 = vmatprep.subr.mxu0 %v3797
    %4071 = vmatpush1.msra.mxu0 %v3796
    %4072 = vmatprep.subr.mxu0 %v3801
    %4073 = vmatpush1.msra.mxu0 %v3800
    %4074 = vmatprep.subr.mxu0 %v3805
    %4075 = vmatpush1.msra.mxu0 %v3804
    %4076 = vmatprep.subr.mxu0 %v3809
    %4077 = vmatpush1.msra.mxu0 %v3808
    %4078 = vmatprep.subr.mxu0 %v3813
    %4079 = vmatpush1.msra.mxu0 %v3812
    %4080 = vmatprep.subr.mxu0 %v3817
    %4081 = vmatpush1.msra.mxu0 %v3816
    %4082 = vmatprep.subr.mxu0 %v3821
    %4083 = vmatpush1.msra.mxu0 %v3820
    %4084 = vmatprep.subr.mxu0 %v3825
    %4085 = vmatpush1.msra.mxu0 %v3824
    %4086 = vmatprep.subr.mxu0 %v3829
    %4087 = vmatpush1.msra.mxu0 %v3828
    %4088 = vmatprep.subr.mxu0 %v3833
    %4089 = vmatpush1.msra.mxu0 %v3832
    %4090 = vmatprep.subr.mxu0 %v3837
    %4091 = vmatpush1.msra.mxu0 %v3836
    %4092 = vmatprep.subr.mxu0 %v3841
    %4093 = vmatpush1.msra.mxu0 %v3840
    %4094 = vmatprep.subr.mxu0 %v3845
    %4095 = vmatpush1.msra.mxu0 %v3844
    %4096 = vmatprep.subr.mxu0 %v3849
    %4097 = vmatpush1.msra.mxu0 %v3848
    %4098 = vmatprep.subr.mxu0 %v3853
    %4099 = vmatpush1.msra.mxu0 %v3852
    %4100 = vmatprep.subr.mxu0 %v3857
    %4101 = vmatpush1.msra.mxu0 %v3856
    %4102 = vmatprep.subr.mxu0 %v3861
    %4103 = vmatpush1.msra.mxu0 %v3860
    %4104 = vmatprep.subr.mxu0 %v3865
    %4105 = vmatpush1.msra.mxu0 %v3864
    %4106 = vmatprep.subr.mxu0 %v3869
    %4107 = vmatpush1.msra.mxu0 %v3868
    %4108 = vmatprep.subr.mxu0 %v3873
    %4109 = vmatpush1.msra.mxu0 %v3872
    %4110 = vmatprep.subr.mxu0 %v3877
    %4111 = vmatpush1.msra.mxu0 %v3876
    %4112 = vmatprep.subr.mxu0 %v3881
    %4113 = vmatpush1.msra.mxu0 %v3880
    %4114 = vmatprep.subr.mxu0 %v3885
    %4115 = vmatpush1.msra.mxu0 %v3884
    %4116 = vmatprep.subr.mxu0 %v3889
    %4117 = vmatpush1.msra.mxu0 %v3888
    %4118 = vmatprep.subr.mxu0 %v3893
    %4119 = vmatpush1.msra.mxu0 %v3892
    %4120 = vmatprep.subr.mxu0 %v3897
    %4121 = vmatpush1.msra.mxu0 %v3896
    %4122 = vmatprep.subr.mxu0 %v3901
    %4123 = vmatpush1.msra.mxu0 %v3900
    %4124 = vmatprep.subr.mxu0 %v3905
    %4125 = vmatpush1.msra.mxu0 %v3904
    %4126 = vmatprep.subr.mxu0 %v3909
    %4127 = vmatpush1.msra.mxu0 %v3908
    %4128 = vmatprep.subr.mxu0 %v3913
    %4129 = vmatpush1.msra.mxu0 %v3912
    %4130 = vmatprep.mubr.f32.mxu0 %v3785
    %4131 = vmatmul.mubr.f32.gmra.mrb[0].mxu0 %v3784
    %v4132 = vpop.f32.mrb[0].mxu0
    %v4133 = vadd.f32 %v4049, %v4132
    %v4134 = vpop.f32.mrb[0].mxu0
    %v4135 = vadd.f32 %v4053, %v4134
    %4136 = vdwg.mxu0
    %4137 = vmatprep.subr.mxu0 %v3917
    %4138 = vmatpush1.msra.mxu0 %v3916
    %4139 = vmatprep.subr.mxu0 %v3921
    %4140 = vmatpush1.msra.mxu0 %v3920
    %4141 = vmatprep.subr.mxu0 %v3925
    %4142 = vmatpush1.msra.mxu0 %v3924
    %4143 = vmatprep.subr.mxu0 %v3929
    %4144 = vmatpush1.msra.mxu0 %v3928
    %4145 = vmatprep.subr.mxu0 %v3933
    %4146 = vmatpush1.msra.mxu0 %v3932
    %4147 = vmatprep.subr.mxu0 %v3937
    %4148 = vmatpush1.msra.mxu0 %v3936
    %4149 = vmatprep.subr.mxu0 %v3941
    %4150 = vmatpush1.msra.mxu0 %v3940
    %4151 = vmatprep.subr.mxu0 %v3945
    %4152 = vmatpush1.msra.mxu0 %v3944
    %4153 = vmatprep.subr.mxu0 %v3949
    %4154 = vmatpush1.msra.mxu0 %v3948
    %4155 = vmatprep.subr.mxu0 %v3953
    %4156 = vmatpush1.msra.mxu0 %v3952
    %4157 = vmatprep.subr.mxu0 %v3957
    %4158 = vmatpush1.msra.mxu0 %v3956
    %4159 = vmatprep.subr.mxu0 %v3961
    %4160 = vmatpush1.msra.mxu0 %v3960
    %4161 = vmatprep.subr.mxu0 %v3965
    %4162 = vmatpush1.msra.mxu0 %v3964
    %4163 = vmatprep.subr.mxu0 %v3969
    %4164 = vmatpush1.msra.mxu0 %v3968
    %4165 = vmatprep.subr.mxu0 %v3973
    %4166 = vmatpush1.msra.mxu0 %v3972
    %4167 = vmatprep.subr.mxu0 %v3977
    %4168 = vmatpush1.msra.mxu0 %v3976
    %4169 = vmatprep.subr.mxu0 %v3981
    %4170 = vmatpush1.msra.mxu0 %v3980
    %4171 = vmatprep.subr.mxu0 %v3985
    %4172 = vmatpush1.msra.mxu0 %v3984
    %4173 = vmatprep.subr.mxu0 %v3989
    %4174 = vmatpush1.msra.mxu0 %v3988
    %4175 = vmatprep.subr.mxu0 %v3993
    %4176 = vmatpush1.msra.mxu0 %v3992
    %4177 = vmatprep.subr.mxu0 %v3997
    %4178 = vmatpush1.msra.mxu0 %v3996
    %4179 = vmatprep.subr.mxu0 %v4001
    %4180 = vmatpush1.msra.mxu0 %v4000
    %4181 = vmatprep.subr.mxu0 %v4005
    %4182 = vmatpush1.msra.mxu0 %v4004
    %4183 = vmatprep.subr.mxu0 %v4009
    %4184 = vmatpush1.msra.mxu0 %v4008
    %4185 = vmatprep.subr.mxu0 %v4013
    %4186 = vmatpush1.msra.mxu0 %v4012
    %4187 = vmatprep.subr.mxu0 %v4017
    %4188 = vmatpush1.msra.mxu0 %v4016
    %4189 = vmatprep.subr.mxu0 %v4021
    %4190 = vmatpush1.msra.mxu0 %v4020
    %4191 = vmatprep.subr.mxu0 %v4025
    %4192 = vmatpush1.msra.mxu0 %v4024
    %4193 = vmatprep.subr.mxu0 %v4029
    %4194 = vmatpush1.msra.mxu0 %v4028
    %4195 = vmatprep.subr.mxu0 %v4033
    %4196 = vmatpush1.msra.mxu0 %v4032
    %4197 = vmatprep.subr.mxu0 %v4037
    %4198 = vmatpush1.msra.mxu0 %v4036
    %4199 = vmatprep.subr.mxu0 %v4041
    %4200 = vmatpush1.msra.mxu0 %v4040
    %4201 = vmatprep.mubr.f32.mxu0 %v3787
    %4202 = vmatmul.mubr.f32.gmra.mrb[0].mxu0 %v3786
    %v4203 = vpop.f32.mrb[0].mxu0
    %v4204 = vadd.f32 %v4133, %v4203
    %v4205 = vpop.f32.mrb[0].mxu0
    %v4206 = vadd.f32 %v4135, %v4205
    %4207 = vdwg.mxu0
    %4208 = vmatprep.subr.mxu0 %v3791
    %4209 = vmatpush1.msra.mxu0 %v3790
    %4210 = vmatprep.subr.mxu0 %v3795
    %4211 = vmatpush1.msra.mxu0 %v3794
    %4212 = vmatprep.subr.mxu0 %v3799
    %4213 = vmatpush1.msra.mxu0 %v3798
    %4214 = vmatprep.subr.mxu0 %v3803
    %4215 = vmatpush1.msra.mxu0 %v3802
    %4216 = vmatprep.subr.mxu0 %v3807
    %4217 = vmatpush1.msra.mxu0 %v3806
    %4218 = vmatprep.subr.mxu0 %v3811
    %4219 = vmatpush1.msra.mxu0 %v3810
    %4220 = vmatprep.subr.mxu0 %v3815
    %4221 = vmatpush1.msra.mxu0 %v3814
    %4222 = vmatprep.subr.mxu0 %v3819
    %4223 = vmatpush1.msra.mxu0 %v3818
    %4224 = vmatprep.subr.mxu0 %v3823
    %4225 = vmatpush1.msra.mxu0 %v3822
    %4226 = vmatprep.subr.mxu0 %v3827
    %4227 = vmatpush1.msra.mxu0 %v3826
    %4228 = vmatprep.subr.mxu0 %v3831
    %4229 = vmatpush1.msra.mxu0 %v3830
    %4230 = vmatprep.subr.mxu0 %v3835
    %4231 = vmatpush1.msra.mxu0 %v3834
    %4232 = vmatprep.subr.mxu0 %v3839
    %4233 = vmatpush1.msra.mxu0 %v3838
    %4234 = vmatprep.subr.mxu0 %v3843
    %4235 = vmatpush1.msra.mxu0 %v3842
    %4236 = vmatprep.subr.mxu0 %v3847
    %4237 = vmatpush1.msra.mxu0 %v3846
    %4238 = vmatprep.subr.mxu0 %v3851
    %4239 = vmatpush1.msra.mxu0 %v3850
    %4240 = vmatprep.subr.mxu0 %v3855
    %4241 = vmatpush1.msra.mxu0 %v3854
    %4242 = vmatprep.subr.mxu0 %v3859
    %4243 = vmatpush1.msra.mxu0 %v3858
    %4244 = vmatprep.subr.mxu0 %v3863
    %4245 = vmatpush1.msra.mxu0 %v3862
    %4246 = vmatprep.subr.mxu0 %v3867
    %4247 = vmatpush1.msra.mxu0 %v3866
    %4248 = vmatprep.subr.mxu0 %v3871
    %4249 = vmatpush1.msra.mxu0 %v3870
    %4250 = vmatprep.subr.mxu0 %v3875
    %4251 = vmatpush1.msra.mxu0 %v3874
    %4252 = vmatprep.subr.mxu0 %v3879
    %4253 = vmatpush1.msra.mxu0 %v3878
    %4254 = vmatprep.subr.mxu0 %v3883
    %4255 = vmatpush1.msra.mxu0 %v3882
    %4256 = vmatprep.subr.mxu0 %v3887
    %4257 = vmatpush1.msra.mxu0 %v3886
    %4258 = vmatprep.subr.mxu0 %v3891
    %4259 = vmatpush1.msra.mxu0 %v3890
    %4260 = vmatprep.subr.mxu0 %v3895
    %4261 = vmatpush1.msra.mxu0 %v3894
    %4262 = vmatprep.subr.mxu0 %v3899
    %4263 = vmatpush1.msra.mxu0 %v3898
    %4264 = vmatprep.subr.mxu0 %v3903
    %4265 = vmatpush1.msra.mxu0 %v3902
    %4266 = vmatprep.subr.mxu0 %v3907
    %4267 = vmatpush1.msra.mxu0 %v3906
    %4268 = vmatprep.subr.mxu0 %v3911
    %4269 = vmatpush1.msra.mxu0 %v3910
    %4270 = vmatprep.subr.mxu0 %v3915
    %4271 = vmatpush1.msra.mxu0 %v3914
    %4272 = vmatprep.mubr.f32.mxu0 %v3785
    %4273 = vmatmul.mubr.f32.gmra.mrb[0].mxu0 %v3784
    %v4274 = vpop.f32.mrb[0].mxu0
    %v4275 = vadd.f32 %v4057, %v4274
    %v4276 = vpop.f32.mrb[0].mxu0
    %v4277 = vadd.f32 %v4061, %v4276
    %4278 = vdwg.mxu0
    %4279 = vmatprep.subr.mxu0 %v3919
    %4280 = vmatpush1.msra.mxu0 %v3918
    %4281 = vmatprep.subr.mxu0 %v3923
    %4282 = vmatpush1.msra.mxu0 %v3922
    %4283 = vmatprep.subr.mxu0 %v3927
    %4284 = vmatpush1.msra.mxu0 %v3926
    %4285 = vmatprep.subr.mxu0 %v3931
    %4286 = vmatpush1.msra.mxu0 %v3930
    %4287 = vmatprep.subr.mxu0 %v3935
    %4288 = vmatpush1.msra.mxu0 %v3934
    %4289 = vmatprep.subr.mxu0 %v3939
    %4290 = vmatpush1.msra.mxu0 %v3938
    %4291 = vmatprep.subr.mxu0 %v3943
    %4292 = vmatpush1.msra.mxu0 %v3942
    %4293 = vmatprep.subr.mxu0 %v3947
    %4294 = vmatpush1.msra.mxu0 %v3946
    %4295 = vmatprep.subr.mxu0 %v3951
    %4296 = vmatpush1.msra.mxu0 %v3950
    %4297 = vmatprep.subr.mxu0 %v3955
    %4298 = vmatpush1.msra.mxu0 %v3954
    %4299 = vmatprep.subr.mxu0 %v3959
    %4300 = vmatpush1.msra.mxu0 %v3958
    %4301 = vmatprep.subr.mxu0 %v3963
    %4302 = vmatpush1.msra.mxu0 %v3962
    %4303 = vmatprep.subr.mxu0 %v3967
    %4304 = vmatpush1.msra.mxu0 %v3966
    %4305 = vmatprep.subr.mxu0 %v3971
    %4306 = vmatpush1.msra.mxu0 %v3970
    %4307 = vmatprep.subr.mxu0 %v3975
    %4308 = vmatpush1.msra.mxu0 %v3974
    %4309 = vmatprep.subr.mxu0 %v3979
    %4310 = vmatpush1.msra.mxu0 %v3978
    %4311 = vmatprep.subr.mxu0 %v3983
    %4312 = vmatpush1.msra.mxu0 %v3982
    %4313 = vmatprep.subr.mxu0 %v3987
    %4314 = vmatpush1.msra.mxu0 %v3986
    %4315 = vmatprep.subr.mxu0 %v3991
    %4316 = vmatpush1.msra.mxu0 %v3990
    %4317 = vmatprep.subr.mxu0 %v3995
    %4318 = vmatpush1.msra.mxu0 %v3994
    %4319 = vmatprep.subr.mxu0 %v3999
    %4320 = vmatpush1.msra.mxu0 %v3998
    %4321 = vmatprep.subr.mxu0 %v4003
    %4322 = vmatpush1.msra.mxu0 %v4002
    %4323 = vmatprep.subr.mxu0 %v4007
    %4324 = vmatpush1.msra.mxu0 %v4006
    %4325 = vmatprep.subr.mxu0 %v4011
    %4326 = vmatpush1.msra.mxu0 %v4010
    %4327 = vmatprep.subr.mxu0 %v4015
    %4328 = vmatpush1.msra.mxu0 %v4014
    %4329 = vmatprep.subr.mxu0 %v4019
    %4330 = vmatpush1.msra.mxu0 %v4018
    %4331 = vmatprep.subr.mxu0 %v4023
    %4332 = vmatpush1.msra.mxu0 %v4022
    %4333 = vmatprep.subr.mxu0 %v4027
    %4334 = vmatpush1.msra.mxu0 %v4026
    %4335 = vmatprep.subr.mxu0 %v4031
    %4336 = vmatpush1.msra.mxu0 %v4030
    %4337 = vmatprep.subr.mxu0 %v4035
    %4338 = vmatpush1.msra.mxu0 %v4034
    %4339 = vmatprep.subr.mxu0 %v4039
    %4340 = vmatpush1.msra.mxu0 %v4038
    %4341 = vmatprep.subr.mxu0 %v4043
    %4342 = vmatpush1.msra.mxu0 %v4042
    %4343 = vmatprep.mubr.f32.mxu0 %v3787
    %4344 = vmatmul.mubr.f32.gmra.mrb[0].mxu0 %v3786
    %v4345 = vpop.f32.mrb[0].mxu0
    %v4346 = vadd.f32 %v4275, %v4345
    %v4347 = vpop.f32.mrb[0].mxu0
    %v4348 = vadd.f32 %v4277, %v4347
    %4349 = vdwg.mxu0
    %v4350 = vrot.slane %v4204, 4
    %v4351 = vadd.f32 %v4204, %v4350
    %v4352 = vrot.slane %v4351, 2
    %v4353 = vadd.f32 %v4351, %v4352
    %v4354 = vrot.slane %v4353, 1
    %v4355 = vadd.f32 %v4353, %v4354
    %v4356 = vrot.slane %v4206, 4
    %v4357 = vadd.f32 %v4206, %v4356
    %v4358 = vrot.slane %v4357, 2
    %v4359 = vadd.f32 %v4357, %v4358
    %v4360 = vrot.slane %v4359, 1
    %v4361 = vadd.f32 %v4359, %v4360
    %v4362 = vrot.slane %v4346, 4
    %v4363 = vadd.f32 %v4346, %v4362
    %v4364 = vrot.slane %v4363, 2
    %v4365 = vadd.f32 %v4363, %v4364
    %v4366 = vrot.slane %v4365, 1
    %v4367 = vadd.f32 %v4365, %v4366
    %v4368 = vrot.slane %v4348, 4
    %v4369 = vadd.f32 %v4348, %v4368
    %v4370 = vrot.slane %v4369, 2
    %v4371 = vadd.f32 %v4369, %v4370
    %v4372 = vrot.slane %v4371, 1
    %v4373 = vadd.f32 %v4371, %v4372
    %v4374 = vmul.f32 %v4355, %v354
    %v4375 = vmul.f32 %v4361, %v354
    %v4376 = vmul.f32 %v4367, %v354
    %v4377 = vmul.f32 %v4373, %v354
    %v4378 = vld [vmem:[%s15] sm:$0xff]
    %v4379 = vld [vmem:[%s15 + $0x8] sm:$0xff]
    %v4380 = vld [vmem:[%s15 + $0x10] sm:$0xff]
    %v4381 = vld [vmem:[%s15 + $0x18] sm:$0xff]
    %v4382 = vld [vmem:[%s15 + $0x20] sm:$0xff]
    %v4383 = vld [vmem:[%s15 + $0x28] sm:$0xff]
    %v4384 = vld [vmem:[%s15 + $0x30] sm:$0xff]
    %v4385 = vld [vmem:[%s15 + $0x38] sm:$0xff]
    %v4386 = vld [vmem:[%s15 + $0x40] sm:$0xff]
    %v4387 = vld [vmem:[%s15 + $0x48] sm:$0xff]
    %v4388 = vld [vmem:[%s15 + $0x50] sm:$0xff]
    %v4389 = vld [vmem:[%s15 + $0x58] sm:$0xff]
    %v4390 = vld [vmem:[%s15 + $0x60] sm:$0xff]
    %v4391 = vld [vmem:[%s15 + $0x68] sm:$0xff]
    %v4392 = vld [vmem:[%s15 + $0x70] sm:$0xff]
    %v4393 = vld [vmem:[%s15 + $0x78] sm:$0xff]
    %v4394 = vld [vmem:[%s15 + $0x80] sm:$0xff]
    %v4395 = vld [vmem:[%s15 + $0x88] sm:$0xff]
    %v4396 = vld [vmem:[%s15 + $0x90] sm:$0xff]
    %v4397 = vld [vmem:[%s15 + $0x98] sm:$0xff]
    %v4398 = vld [vmem:[%s15 + $0xa0] sm:$0xff]
    %v4399 = vld [vmem:[%s15 + $0xa8] sm:$0xff]
    %v4400 = vld [vmem:[%s15 + $0xb0] sm:$0xff]
    %v4401 = vld [vmem:[%s15 + $0xb8] sm:$0xff]
    %v4402 = vld [vmem:[%s15 + $0xc0] sm:$0xff]
    %v4403 = vld [vmem:[%s15 + $0xc8] sm:$0xff]
    %v4404 = vld [vmem:[%s15 + $0xd0] sm:$0xff]
    %v4405 = vld [vmem:[%s15 + $0xd8] sm:$0xff]
    %v4406 = vld [vmem:[%s15 + $0xe0] sm:$0xff]
    %v4407 = vld [vmem:[%s15 + $0xe8] sm:$0xff]
    %v4408 = vld [vmem:[%s15 + $0xf0] sm:$0xff]
    %v4409 = vld [vmem:[%s15 + $0xf8] sm:$0xff]
    %v4410 = vld [vmem:[%s15 + $0x100] sm:$0xff]
    %v4411 = vld [vmem:[%s15 + $0x108] sm:$0xff]
    %v4412 = vld [vmem:[%s15 + $0x110] sm:$0xff]
    %v4413 = vld [vmem:[%s15 + $0x118] sm:$0xff]
    %v4414 = vld [vmem:[%s15 + $0x120] sm:$0xff]
    %v4415 = vld [vmem:[%s15 + $0x128] sm:$0xff]
    %v4416 = vld [vmem:[%s15 + $0x130] sm:$0xff]
    %v4417 = vld [vmem:[%s15 + $0x138] sm:$0xff]
    %v4418 = vld [vmem:[%s15 + $0x140] sm:$0xff]
    %v4419 = vld [vmem:[%s15 + $0x148] sm:$0xff]
    %v4420 = vld [vmem:[%s15 + $0x150] sm:$0xff]
    %v4421 = vld [vmem:[%s15 + $0x158] sm:$0xff]
    %v4422 = vld [vmem:[%s15 + $0x160] sm:$0xff]
    %v4423 = vld [vmem:[%s15 + $0x168] sm:$0xff]
    %v4424 = vld [vmem:[%s15 + $0x170] sm:$0xff]
    %v4425 = vld [vmem:[%s15 + $0x178] sm:$0xff]
    %v4426 = vld [vmem:[%s15 + $0x180] sm:$0xff]
    %v4427 = vld [vmem:[%s15 + $0x188] sm:$0xff]
    %v4428 = vld [vmem:[%s15 + $0x190] sm:$0xff]
    %v4429 = vld [vmem:[%s15 + $0x198] sm:$0xff]
    %v4430 = vld [vmem:[%s15 + $0x1a0] sm:$0xff]
    %v4431 = vld [vmem:[%s15 + $0x1a8] sm:$0xff]
    %v4432 = vld [vmem:[%s15 + $0x1b0] sm:$0xff]
    %v4433 = vld [vmem:[%s15 + $0x1b8] sm:$0xff]
    %v4434 = vld [vmem:[%s15 + $0x1c0] sm:$0xff]
    %v4435 = vld [vmem:[%s15 + $0x1c8] sm:$0xff]
    %v4436 = vld [vmem:[%s15 + $0x1d0] sm:$0xff]
    %v4437 = vld [vmem:[%s15 + $0x1d8] sm:$0xff]
    %v4438 = vld [vmem:[%s15 + $0x1e0] sm:$0xff]
    %v4439 = vld [vmem:[%s15 + $0x1e8] sm:$0xff]
    %v4440 = vld [vmem:[%s15 + $0x1f0] sm:$0xff]
    %v4441 = vld [vmem:[%s15 + $0x1f8] sm:$0xff]
    %v4442 = vld [vmem:[%s15 + $0x200] sm:$0xff]
    %v4443 = vld [vmem:[%s15 + $0x208] sm:$0xff]
    %v4444 = vld [vmem:[%s15 + $0x210] sm:$0xff]
    %v4445 = vld [vmem:[%s15 + $0x218] sm:$0xff]
    %v4446 = vld [vmem:[%s15 + $0x220] sm:$0xff]
    %v4447 = vld [vmem:[%s15 + $0x228] sm:$0xff]
    %v4448 = vld [vmem:[%s15 + $0x230] sm:$0xff]
    %v4449 = vld [vmem:[%s15 + $0x238] sm:$0xff]
    %v4450 = vld [vmem:[%s15 + $0x240] sm:$0xff]
    %v4451 = vld [vmem:[%s15 + $0x248] sm:$0xff]
    %v4452 = vld [vmem:[%s15 + $0x250] sm:$0xff]
    %v4453 = vld [vmem:[%s15 + $0x258] sm:$0xff]
    %v4454 = vld [vmem:[%s15 + $0x260] sm:$0xff]
    %v4455 = vld [vmem:[%s15 + $0x268] sm:$0xff]
    %v4456 = vld [vmem:[%s15 + $0x270] sm:$0xff]
    %v4457 = vld [vmem:[%s15 + $0x278] sm:$0xff]
    %v4458 = vld [vmem:[%s15 + $0x280] sm:$0xff]
    %v4459 = vld [vmem:[%s15 + $0x288] sm:$0xff]
    %v4460 = vld [vmem:[%s15 + $0x290] sm:$0xff]
    %v4461 = vld [vmem:[%s15 + $0x298] sm:$0xff]
    %v4462 = vld [vmem:[%s15 + $0x2a0] sm:$0xff]
    %v4463 = vld [vmem:[%s15 + $0x2a8] sm:$0xff]
    %v4464 = vld [vmem:[%s15 + $0x2b0] sm:$0xff]
    %v4465 = vld [vmem:[%s15 + $0x2b8] sm:$0xff]
    %v4466 = vld [vmem:[%s15 + $0x2c0] sm:$0xff]
    %v4467 = vld [vmem:[%s15 + $0x2c8] sm:$0xff]
    %v4468 = vld [vmem:[%s15 + $0x2d0] sm:$0xff]
    %v4469 = vld [vmem:[%s15 + $0x2d8] sm:$0xff]
    %v4470 = vld [vmem:[%s15 + $0x2e0] sm:$0xff]
    %v4471 = vld [vmem:[%s15 + $0x2e8] sm:$0xff]
    %v4472 = vld [vmem:[%s15 + $0x2f0] sm:$0xff]
    %v4473 = vld [vmem:[%s15 + $0x2f8] sm:$0xff]
    %v4474 = vld [vmem:[%s15 + $0x300] sm:$0xff]
    %v4475 = vld [vmem:[%s15 + $0x308] sm:$0xff]
    %v4476 = vld [vmem:[%s15 + $0x310] sm:$0xff]
    %v4477 = vld [vmem:[%s15 + $0x318] sm:$0xff]
    %v4478 = vld [vmem:[%s15 + $0x320] sm:$0xff]
    %v4479 = vld [vmem:[%s15 + $0x328] sm:$0xff]
    %v4480 = vld [vmem:[%s15 + $0x330] sm:$0xff]
    %v4481 = vld [vmem:[%s15 + $0x338] sm:$0xff]
    %v4482 = vld [vmem:[%s15 + $0x340] sm:$0xff]
    %v4483 = vld [vmem:[%s15 + $0x348] sm:$0xff]
    %v4484 = vld [vmem:[%s15 + $0x350] sm:$0xff]
    %v4485 = vld [vmem:[%s15 + $0x358] sm:$0xff]
    %v4486 = vld [vmem:[%s15 + $0x360] sm:$0xff]
    %v4487 = vld [vmem:[%s15 + $0x368] sm:$0xff]
    %v4488 = vld [vmem:[%s15 + $0x370] sm:$0xff]
    %v4489 = vld [vmem:[%s15 + $0x378] sm:$0xff]
    %v4490 = vld [vmem:[%s15 + $0x380] sm:$0xff]
    %v4491 = vld [vmem:[%s15 + $0x388] sm:$0xff]
    %v4492 = vld [vmem:[%s15 + $0x390] sm:$0xff]
    %v4493 = vld [vmem:[%s15 + $0x398] sm:$0xff]
    %v4494 = vld [vmem:[%s15 + $0x3a0] sm:$0xff]
    %v4495 = vld [vmem:[%s15 + $0x3a8] sm:$0xff]
    %v4496 = vld [vmem:[%s15 + $0x3b0] sm:$0xff]
    %v4497 = vld [vmem:[%s15 + $0x3b8] sm:$0xff]
    %v4498 = vld [vmem:[%s15 + $0x3c0] sm:$0xff]
    %v4499 = vld [vmem:[%s15 + $0x3c8] sm:$0xff]
    %v4500 = vld [vmem:[%s15 + $0x3d0] sm:$0xff]
    %v4501 = vld [vmem:[%s15 + $0x3d8] sm:$0xff]
    %v4502 = vld [vmem:[%s15 + $0x3e0] sm:$0xff]
    %v4503 = vld [vmem:[%s15 + $0x3e8] sm:$0xff]
    %v4504 = vld [vmem:[%s15 + $0x3f0] sm:$0xff]
    %v4505 = vld [vmem:[%s15 + $0x3f8] sm:$0xff]
    %4506 = vmatprep.subr.mxu0 %v4379
    %4507 = vmatpush1.msra.mxu0 %v4378
    %4508 = vmatprep.subr.mxu0 %v4381
    %4509 = vmatpush1.msra.mxu0 %v4380
    %4510 = vmatprep.subr.mxu0 %v4383
    %4511 = vmatpush1.msra.mxu0 %v4382
    %4512 = vmatprep.subr.mxu0 %v4385
    %4513 = vmatpush1.msra.mxu0 %v4384
    %4514 = vmatprep.subr.mxu0 %v4387
    %4515 = vmatpush1.msra.mxu0 %v4386
    %4516 = vmatprep.subr.mxu0 %v4389
    %4517 = vmatpush1.msra.mxu0 %v4388
    %4518 = vmatprep.subr.mxu0 %v4391
    %4519 = vmatpush1.msra.mxu0 %v4390
    %4520 = vmatprep.subr.mxu0 %v4393
    %4521 = vmatpush1.msra.mxu0 %v4392
    %4522 = vmatprep.subr.mxu0 %v4395
    %4523 = vmatpush1.msra.mxu0 %v4394
    %4524 = vmatprep.subr.mxu0 %v4397
    %4525 = vmatpush1.msra.mxu0 %v4396
    %4526 = vmatprep.subr.mxu0 %v4399
    %4527 = vmatpush1.msra.mxu0 %v4398
    %4528 = vmatprep.subr.mxu0 %v4401
    %4529 = vmatpush1.msra.mxu0 %v4400
    %4530 = vmatprep.subr.mxu0 %v4403
    %4531 = vmatpush1.msra.mxu0 %v4402
    %4532 = vmatprep.subr.mxu0 %v4405
    %4533 = vmatpush1.msra.mxu0 %v4404
    %4534 = vmatprep.subr.mxu0 %v4407
    %4535 = vmatpush1.msra.mxu0 %v4406
    %4536 = vmatprep.subr.mxu0 %v4409
    %4537 = vmatpush1.msra.mxu0 %v4408
    %4538 = vmatprep.subr.mxu0 %v4411
    %4539 = vmatpush1.msra.mxu0 %v4410
    %4540 = vmatprep.subr.mxu0 %v4413
    %4541 = vmatpush1.msra.mxu0 %v4412
    %4542 = vmatprep.subr.mxu0 %v4415
    %4543 = vmatpush1.msra.mxu0 %v4414
    %4544 = vmatprep.subr.mxu0 %v4417
    %4545 = vmatpush1.msra.mxu0 %v4416
    %4546 = vmatprep.subr.mxu0 %v4419
    %4547 = vmatpush1.msra.mxu0 %v4418
    %4548 = vmatprep.subr.mxu0 %v4421
    %4549 = vmatpush1.msra.mxu0 %v4420
    %4550 = vmatprep.subr.mxu0 %v4423
    %4551 = vmatpush1.msra.mxu0 %v4422
    %4552 = vmatprep.subr.mxu0 %v4425
    %4553 = vmatpush1.msra.mxu0 %v4424
    %4554 = vmatprep.subr.mxu0 %v4427
    %4555 = vmatpush1.msra.mxu0 %v4426
    %4556 = vmatprep.subr.mxu0 %v4429
    %4557 = vmatpush1.msra.mxu0 %v4428
    %4558 = vmatprep.subr.mxu0 %v4431
    %4559 = vmatpush1.msra.mxu0 %v4430
    %4560 = vmatprep.subr.mxu0 %v4433
    %4561 = vmatpush1.msra.mxu0 %v4432
    %4562 = vmatprep.subr.mxu0 %v4435
    %4563 = vmatpush1.msra.mxu0 %v4434
    %4564 = vmatprep.subr.mxu0 %v4437
    %4565 = vmatpush1.msra.mxu0 %v4436
    %4566 = vmatprep.subr.mxu0 %v4439
    %4567 = vmatpush1.msra.mxu0 %v4438
    %4568 = vmatprep.subr.mxu0 %v4441
    %4569 = vmatpush1.msra.mxu0 %v4440
    %4570 = vmatprep.mubr.f32.mxu0 %v4375
    %4571 = vmatmul.mubr.f32.gmra.mrb[0].mxu0 %v4374
    %v4572 = vpop.f32.mrb[0].mxu0
    %v4573 = vadd.f32 0.0, %v4572
    %v4574 = vpop.f32.mrb[0].mxu0
    %v4575 = vadd.f32 0.0, %v4574
    %4576 = vdwg.mxu0
    %4577 = vmatprep.subr.mxu0 %v4443
    %4578 = vmatpush1.msra.mxu0 %v4442
    %4579 = vmatprep.subr.mxu0 %v4445
    %4580 = vmatpush1.msra.mxu0 %v4444
    %4581 = vmatprep.subr.mxu0 %v4447
    %4582 = vmatpush1.msra.mxu0 %v4446
    %4583 = vmatprep.subr.mxu0 %v4449
    %4584 = vmatpush1.msra.mxu0 %v4448
    %4585 = vmatprep.subr.mxu0 %v4451
    %4586 = vmatpush1.msra.mxu0 %v4450
    %4587 = vmatprep.subr.mxu0 %v4453
    %4588 = vmatpush1.msra.mxu0 %v4452
    %4589 = vmatprep.subr.mxu0 %v4455
    %4590 = vmatpush1.msra.mxu0 %v4454
    %4591 = vmatprep.subr.mxu0 %v4457
    %4592 = vmatpush1.msra.mxu0 %v4456
    %4593 = vmatprep.subr.mxu0 %v4459
    %4594 = vmatpush1.msra.mxu0 %v4458
    %4595 = vmatprep.subr.mxu0 %v4461
    %4596 = vmatpush1.msra.mxu0 %v4460
    %4597 = vmatprep.subr.mxu0 %v4463
    %4598 = vmatpush1.msra.mxu0 %v4462
    %4599 = vmatprep.subr.mxu0 %v4465
    %4600 = vmatpush1.msra.mxu0 %v4464
    %4601 = vmatprep.subr.mxu0 %v4467
    %4602 = vmatpush1.msra.mxu0 %v4466
    %4603 = vmatprep.subr.mxu0 %v4469
    %4604 = vmatpush1.msra.mxu0 %v4468
    %4605 = vmatprep.subr.mxu0 %v4471
    %4606 = vmatpush1.msra.mxu0 %v4470
    %4607 = vmatprep.subr.mxu0 %v4473
    %4608 = vmatpush1.msra.mxu0 %v4472
    %4609 = vmatprep.subr.mxu0 %v4475
    %4610 = vmatpush1.msra.mxu0 %v4474
    %4611 = vmatprep.subr.mxu0 %v4477
    %4612 = vmatpush1.msra.mxu0 %v4476
    %4613 = vmatprep.subr.mxu0 %v4479
    %4614 = vmatpush1.msra.mxu0 %v4478
    %4615 = vmatprep.subr.mxu0 %v4481
    %4616 = vmatpush1.msra.mxu0 %v4480
    %4617 = vmatprep.subr.mxu0 %v4483
    %4618 = vmatpush1.msra.mxu0 %v4482
    %4619 = vmatprep.subr.mxu0 %v4485
    %4620 = vmatpush1.msra.mxu0 %v4484
    %4621 = vmatprep.subr.mxu0 %v4487
    %4622 = vmatpush1.msra.mxu0 %v4486
    %4623 = vmatprep.subr.mxu0 %v4489
    %4624 = vmatpush1.msra.mxu0 %v4488
    %4625 = vmatprep.subr.mxu0 %v4491
    %4626 = vmatpush1.msra.mxu0 %v4490
    %4627 = vmatprep.subr.mxu0 %v4493
    %4628 = vmatpush1.msra.mxu0 %v4492
    %4629 = vmatprep.subr.mxu0 %v4495
    %4630 = vmatpush1.msra.mxu0 %v4494
    %4631 = vmatprep.subr.mxu0 %v4497
    %4632 = vmatpush1.msra.mxu0 %v4496
    %4633 = vmatprep.subr.mxu0 %v4499
    %4634 = vmatpush1.msra.mxu0 %v4498
    %4635 = vmatprep.subr.mxu0 %v4501
    %4636 = vmatpush1.msra.mxu0 %v4500
    %4637 = vmatprep.subr.mxu0 %v4503
    %4638 = vmatpush1.msra.mxu0 %v4502
    %4639 = vmatprep.subr.mxu0 %v4505
    %4640 = vmatpush1.msra.mxu0 %v4504
    %4641 = vmatprep.mubr.f32.mxu0 %v4377
    %4642 = vmatmul.mubr.f32.gmra.mrb[0].mxu0 %v4376
    %v4643 = vpop.f32.mrb[0].mxu0
    %v4644 = vadd.f32 %v4573, %v4643
    %v4645 = vpop.f32.mrb[0].mxu0
    %v4646 = vadd.f32 %v4575, %v4645
    %4647 = vdwg.mxu0
    %v4648 = vld [vmem:[#allocation11] sm:$0xff]
    %v4649 = vld [vmem:[#allocation11 + $0x8] sm:$0xff]
    %v4650 = vld [vmem:[#allocation11 + $0x10] sm:$0xff]
    %v4651 = vld [vmem:[#allocation11 + $0x18] sm:$0xff]
    %v4652 = vld [vmem:[#allocation11 + $0x20] sm:$0xff]
    %v4653 = vld [vmem:[#allocation11 + $0x28] sm:$0xff]
    %v4654 = vld [vmem:[#allocation11 + $0x30] sm:$0xff]
    %v4655 = vld [vmem:[#allocation11 + $0x38] sm:$0xff]
    %v4656 = vld [vmem:[#allocation11 + $0x40] sm:$0xff]
    %v4657 = vld [vmem:[#allocation11 + $0x48] sm:$0xff]
    %v4658 = vld [vmem:[#allocation11 + $0x50] sm:$0xff]
    %v4659 = vld [vmem:[#allocation11 + $0x58] sm:$0xff]
    %v4660 = vld [vmem:[#allocation11 + $0x60] sm:$0xff]
    %v4661 = vld [vmem:[#allocation11 + $0x68] sm:$0xff]
    %v4662 = vld [vmem:[#allocation11 + $0x70] sm:$0xff]
    %v4663 = vld [vmem:[#allocation11 + $0x78] sm:$0xff]
    %v4664 = vld [vmem:[#allocation11 + $0x80] sm:$0xff]
    %v4665 = vld [vmem:[#allocation11 + $0x88] sm:$0xff]
    %v4666 = vld [vmem:[#allocation11 + $0x90] sm:$0xff]
    %v4667 = vld [vmem:[#allocation11 + $0x98] sm:$0xff]
    %v4668 = vld [vmem:[#allocation11 + $0xa0] sm:$0xff]
    %v4669 = vld [vmem:[#allocation11 + $0xa8] sm:$0xff]
    %v4670 = vld [vmem:[#allocation11 + $0xb0] sm:$0xff]
    %v4671 = vld [vmem:[#allocation11 + $0xb8] sm:$0xff]
    %v4672 = vld [vmem:[#allocation11 + $0xc0] sm:$0xff]
    %v4673 = vld [vmem:[#allocation11 + $0xc8] sm:$0xff]
    %v4674 = vld [vmem:[#allocation11 + $0xd0] sm:$0xff]
    %v4675 = vld [vmem:[#allocation11 + $0xd8] sm:$0xff]
    %v4676 = vld [vmem:[#allocation11 + $0xe0] sm:$0xff]
    %v4677 = vld [vmem:[#allocation11 + $0xe8] sm:$0xff]
    %v4678 = vld [vmem:[#allocation11 + $0xf0] sm:$0xff]
    %v4679 = vld [vmem:[#allocation11 + $0xf8] sm:$0xff]
    %v4680 = vld [vmem:[#allocation11 + $0x100] sm:$0xff]
    %v4681 = vld [vmem:[#allocation11 + $0x108] sm:$0xff]
    %v4682 = vld [vmem:[#allocation11 + $0x110] sm:$0xff]
    %v4683 = vld [vmem:[#allocation11 + $0x118] sm:$0xff]
    %v4684 = vld [vmem:[#allocation11 + $0x120] sm:$0xff]
    %v4685 = vld [vmem:[#allocation11 + $0x128] sm:$0xff]
    %v4686 = vld [vmem:[#allocation11 + $0x130] sm:$0xff]
    %v4687 = vld [vmem:[#allocation11 + $0x138] sm:$0xff]
    %v4688 = vld [vmem:[#allocation11 + $0x140] sm:$0xff]
    %v4689 = vld [vmem:[#allocation11 + $0x148] sm:$0xff]
    %v4690 = vld [vmem:[#allocation11 + $0x150] sm:$0xff]
    %v4691 = vld [vmem:[#allocation11 + $0x158] sm:$0xff]
    %v4692 = vld [vmem:[#allocation11 + $0x160] sm:$0xff]
    %v4693 = vld [vmem:[#allocation11 + $0x168] sm:$0xff]
    %v4694 = vld [vmem:[#allocation11 + $0x170] sm:$0xff]
    %v4695 = vld [vmem:[#allocation11 + $0x178] sm:$0xff]
    %v4696 = vld [vmem:[#allocation11 + $0x180] sm:$0xff]
    %v4697 = vld [vmem:[#allocation11 + $0x188] sm:$0xff]
    %v4698 = vld [vmem:[#allocation11 + $0x190] sm:$0xff]
    %v4699 = vld [vmem:[#allocation11 + $0x198] sm:$0xff]
    %v4700 = vld [vmem:[#allocation11 + $0x1a0] sm:$0xff]
    %v4701 = vld [vmem:[#allocation11 + $0x1a8] sm:$0xff]
    %v4702 = vld [vmem:[#allocation11 + $0x1b0] sm:$0xff]
    %v4703 = vld [vmem:[#allocation11 + $0x1b8] sm:$0xff]
    %v4704 = vld [vmem:[#allocation11 + $0x1c0] sm:$0xff]
    %v4705 = vld [vmem:[#allocation11 + $0x1c8] sm:$0xff]
    %v4706 = vld [vmem:[#allocation11 + $0x1d0] sm:$0xff]
    %v4707 = vld [vmem:[#allocation11 + $0x1d8] sm:$0xff]
    %v4708 = vld [vmem:[#allocation11 + $0x1e0] sm:$0xff]
    %v4709 = vld [vmem:[#allocation11 + $0x1e8] sm:$0xff]
    %v4710 = vld [vmem:[#allocation11 + $0x1f0] sm:$0xff]
    %v4711 = vld [vmem:[#allocation11 + $0x1f8] sm:$0xff]
    %v4712 = vld [vmem:[#allocation11 + $0x200] sm:$0xff]
    %v4713 = vld [vmem:[#allocation11 + $0x208] sm:$0xff]
    %v4714 = vld [vmem:[#allocation11 + $0x210] sm:$0xff]
    %v4715 = vld [vmem:[#allocation11 + $0x218] sm:$0xff]
    %v4716 = vld [vmem:[#allocation11 + $0x220] sm:$0xff]
    %v4717 = vld [vmem:[#allocation11 + $0x228] sm:$0xff]
    %v4718 = vld [vmem:[#allocation11 + $0x230] sm:$0xff]
    %v4719 = vld [vmem:[#allocation11 + $0x238] sm:$0xff]
    %v4720 = vld [vmem:[#allocation11 + $0x240] sm:$0xff]
    %v4721 = vld [vmem:[#allocation11 + $0x248] sm:$0xff]
    %v4722 = vld [vmem:[#allocation11 + $0x250] sm:$0xff]
    %v4723 = vld [vmem:[#allocation11 + $0x258] sm:$0xff]
    %v4724 = vld [vmem:[#allocation11 + $0x260] sm:$0xff]
    %v4725 = vld [vmem:[#allocation11 + $0x268] sm:$0xff]
    %v4726 = vld [vmem:[#allocation11 + $0x270] sm:$0xff]
    %v4727 = vld [vmem:[#allocation11 + $0x278] sm:$0xff]
    %v4728 = vld [vmem:[#allocation11 + $0x280] sm:$0xff]
    %v4729 = vld [vmem:[#allocation11 + $0x288] sm:$0xff]
    %v4730 = vld [vmem:[#allocation11 + $0x290] sm:$0xff]
    %v4731 = vld [vmem:[#allocation11 + $0x298] sm:$0xff]
    %v4732 = vld [vmem:[#allocation11 + $0x2a0] sm:$0xff]
    %v4733 = vld [vmem:[#allocation11 + $0x2a8] sm:$0xff]
    %v4734 = vld [vmem:[#allocation11 + $0x2b0] sm:$0xff]
    %v4735 = vld [vmem:[#allocation11 + $0x2b8] sm:$0xff]
    %v4736 = vld [vmem:[#allocation11 + $0x2c0] sm:$0xff]
    %v4737 = vld [vmem:[#allocation11 + $0x2c8] sm:$0xff]
    %v4738 = vld [vmem:[#allocation11 + $0x2d0] sm:$0xff]
    %v4739 = vld [vmem:[#allocation11 + $0x2d8] sm:$0xff]
    %v4740 = vld [vmem:[#allocation11 + $0x2e0] sm:$0xff]
    %v4741 = vld [vmem:[#allocation11 + $0x2e8] sm:$0xff]
    %v4742 = vld [vmem:[#allocation11 + $0x2f0] sm:$0xff]
    %v4743 = vld [vmem:[#allocation11 + $0x2f8] sm:$0xff]
    %v4744 = vld [vmem:[#allocation11 + $0x300] sm:$0xff]
    %v4745 = vld [vmem:[#allocation11 + $0x308] sm:$0xff]
    %v4746 = vld [vmem:[#allocation11 + $0x310] sm:$0xff]
    %v4747 = vld [vmem:[#allocation11 + $0x318] sm:$0xff]
    %v4748 = vld [vmem:[#allocation11 + $0x320] sm:$0xff]
    %v4749 = vld [vmem:[#allocation11 + $0x328] sm:$0xff]
    %v4750 = vld [vmem:[#allocation11 + $0x330] sm:$0xff]
    %v4751 = vld [vmem:[#allocation11 + $0x338] sm:$0xff]
    %v4752 = vld [vmem:[#allocation11 + $0x340] sm:$0xff]
    %v4753 = vld [vmem:[#allocation11 + $0x348] sm:$0xff]
    %v4754 = vld [vmem:[#allocation11 + $0x350] sm:$0xff]
    %v4755 = vld [vmem:[#allocation11 + $0x358] sm:$0xff]
    %v4756 = vld [vmem:[#allocation11 + $0x360] sm:$0xff]
    %v4757 = vld [vmem:[#allocation11 + $0x368] sm:$0xff]
    %v4758 = vld [vmem:[#allocation11 + $0x370] sm:$0xff]
    %v4759 = vld [vmem:[#allocation11 + $0x378] sm:$0xff]
    %v4760 = vld [vmem:[#allocation11 + $0x380] sm:$0xff]
    %v4761 = vld [vmem:[#allocation11 + $0x388] sm:$0xff]
    %v4762 = vld [vmem:[#allocation11 + $0x390] sm:$0xff]
    %v4763 = vld [vmem:[#allocation11 + $0x398] sm:$0xff]
    %v4764 = vld [vmem:[#allocation11 + $0x3a0] sm:$0xff]
    %v4765 = vld [vmem:[#allocation11 + $0x3a8] sm:$0xff]
    %v4766 = vld [vmem:[#allocation11 + $0x3b0] sm:$0xff]
    %v4767 = vld [vmem:[#allocation11 + $0x3b8] sm:$0xff]
    %v4768 = vld [vmem:[#allocation11 + $0x3c0] sm:$0xff]
    %v4769 = vld [vmem:[#allocation11 + $0x3c8] sm:$0xff]
    %v4770 = vld [vmem:[#allocation11 + $0x3d0] sm:$0xff]
    %v4771 = vld [vmem:[#allocation11 + $0x3d8] sm:$0xff]
    %v4772 = vld [vmem:[#allocation11 + $0x3e0] sm:$0xff]
    %v4773 = vld [vmem:[#allocation11 + $0x3e8] sm:$0xff]
    %v4774 = vld [vmem:[#allocation11 + $0x3f0] sm:$0xff]
    %v4775 = vld [vmem:[#allocation11 + $0x3f8] sm:$0xff]
    %4776 = vmatprep.subr.mxu0 %v4649
    %4777 = vmatpush1.msra.mxu0 %v4648
    %4778 = vmatprep.subr.mxu0 %v4653
    %4779 = vmatpush1.msra.mxu0 %v4652
    %4780 = vmatprep.subr.mxu0 %v4657
    %4781 = vmatpush1.msra.mxu0 %v4656
    %4782 = vmatprep.subr.mxu0 %v4661
    %4783 = vmatpush1.msra.mxu0 %v4660
    %4784 = vmatprep.subr.mxu0 %v4665
    %4785 = vmatpush1.msra.mxu0 %v4664
    %4786 = vmatprep.subr.mxu0 %v4669
    %4787 = vmatpush1.msra.mxu0 %v4668
    %4788 = vmatprep.subr.mxu0 %v4673
    %4789 = vmatpush1.msra.mxu0 %v4672
    %4790 = vmatprep.subr.mxu0 %v4677
    %4791 = vmatpush1.msra.mxu0 %v4676
    %4792 = vmatprep.subr.mxu0 %v4681
    %4793 = vmatpush1.msra.mxu0 %v4680
    %4794 = vmatprep.subr.mxu0 %v4685
    %4795 = vmatpush1.msra.mxu0 %v4684
    %4796 = vmatprep.subr.mxu0 %v4689
    %4797 = vmatpush1.msra.mxu0 %v4688
    %4798 = vmatprep.subr.mxu0 %v4693
    %4799 = vmatpush1.msra.mxu0 %v4692
    %4800 = vmatprep.subr.mxu0 %v4697
    %4801 = vmatpush1.msra.mxu0 %v4696
    %4802 = vmatprep.subr.mxu0 %v4701
    %4803 = vmatpush1.msra.mxu0 %v4700
    %4804 = vmatprep.subr.mxu0 %v4705
    %4805 = vmatpush1.msra.mxu0 %v4704
    %4806 = vmatprep.subr.mxu0 %v4709
    %4807 = vmatpush1.msra.mxu0 %v4708
    %4808 = vmatprep.subr.mxu0 %v4713
    %4809 = vmatpush1.msra.mxu0 %v4712
    %4810 = vmatprep.subr.mxu0 %v4717
    %4811 = vmatpush1.msra.mxu0 %v4716
    %4812 = vmatprep.subr.mxu0 %v4721
    %4813 = vmatpush1.msra.mxu0 %v4720
    %4814 = vmatprep.subr.mxu0 %v4725
    %4815 = vmatpush1.msra.mxu0 %v4724
    %4816 = vmatprep.subr.mxu0 %v4729
    %4817 = vmatpush1.msra.mxu0 %v4728
    %4818 = vmatprep.subr.mxu0 %v4733
    %4819 = vmatpush1.msra.mxu0 %v4732
    %4820 = vmatprep.subr.mxu0 %v4737
    %4821 = vmatpush1.msra.mxu0 %v4736
    %4822 = vmatprep.subr.mxu0 %v4741
    %4823 = vmatpush1.msra.mxu0 %v4740
    %4824 = vmatprep.subr.mxu0 %v4745
    %4825 = vmatpush1.msra.mxu0 %v4744
    %4826 = vmatprep.subr.mxu0 %v4749
    %4827 = vmatpush1.msra.mxu0 %v4748
    %4828 = vmatprep.subr.mxu0 %v4753
    %4829 = vmatpush1.msra.mxu0 %v4752
    %4830 = vmatprep.subr.mxu0 %v4757
    %4831 = vmatpush1.msra.mxu0 %v4756
    %4832 = vmatprep.subr.mxu0 %v4761
    %4833 = vmatpush1.msra.mxu0 %v4760
    %4834 = vmatprep.subr.mxu0 %v4765
    %4835 = vmatpush1.msra.mxu0 %v4764
    %4836 = vmatprep.subr.mxu0 %v4769
    %4837 = vmatpush1.msra.mxu0 %v4768
    %4838 = vmatprep.subr.mxu0 %v4773
    %4839 = vmatpush1.msra.mxu0 %v4772
    %4840 = vmatprep.mubr.f32.mxu0 %v4646
    %4841 = vmatmul.mubr.f32.gmra.mrb[0].mxu0 %v4644
    %v4842 = vpop.f32.mrb[0].mxu0
    %v4843 = vadd.f32 0.0, %v4842
    %v4844 = vpop.f32.mrb[0].mxu0
    %v4845 = vadd.f32 0.0, %v4844
    %4846 = vdwg.mxu0
    %4847 = vmatprep.subr.mxu0 %v4651
    %4848 = vmatpush1.msra.mxu0 %v4650
    %4849 = vmatprep.subr.mxu0 %v4655
    %4850 = vmatpush1.msra.mxu0 %v4654
    %4851 = vmatprep.subr.mxu0 %v4659
    %4852 = vmatpush1.msra.mxu0 %v4658
    %4853 = vmatprep.subr.mxu0 %v4663
    %4854 = vmatpush1.msra.mxu0 %v4662
    %4855 = vmatprep.subr.mxu0 %v4667
    %4856 = vmatpush1.msra.mxu0 %v4666
    %4857 = vmatprep.subr.mxu0 %v4671
    %4858 = vmatpush1.msra.mxu0 %v4670
    %4859 = vmatprep.subr.mxu0 %v4675
    %4860 = vmatpush1.msra.mxu0 %v4674
    %4861 = vmatprep.subr.mxu0 %v4679
    %4862 = vmatpush1.msra.mxu0 %v4678
    %4863 = vmatprep.subr.mxu0 %v4683
    %4864 = vmatpush1.msra.mxu0 %v4682
    %4865 = vmatprep.subr.mxu0 %v4687
    %4866 = vmatpush1.msra.mxu0 %v4686
    %4867 = vmatprep.subr.mxu0 %v4691
    %4868 = vmatpush1.msra.mxu0 %v4690
    %4869 = vmatprep.subr.mxu0 %v4695
    %4870 = vmatpush1.msra.mxu0 %v4694
    %4871 = vmatprep.subr.mxu0 %v4699
    %4872 = vmatpush1.msra.mxu0 %v4698
    %4873 = vmatprep.subr.mxu0 %v4703
    %4874 = vmatpush1.msra.mxu0 %v4702
    %4875 = vmatprep.subr.mxu0 %v4707
    %4876 = vmatpush1.msra.mxu0 %v4706
    %4877 = vmatprep.subr.mxu0 %v4711
    %4878 = vmatpush1.msra.mxu0 %v4710
    %4879 = vmatprep.subr.mxu0 %v4715
    %4880 = vmatpush1.msra.mxu0 %v4714
    %4881 = vmatprep.subr.mxu0 %v4719
    %4882 = vmatpush1.msra.mxu0 %v4718
    %4883 = vmatprep.subr.mxu0 %v4723
    %4884 = vmatpush1.msra.mxu0 %v4722
    %4885 = vmatprep.subr.mxu0 %v4727
    %4886 = vmatpush1.msra.mxu0 %v4726
    %4887 = vmatprep.subr.mxu0 %v4731
    %4888 = vmatpush1.msra.mxu0 %v4730
    %4889 = vmatprep.subr.mxu0 %v4735
    %4890 = vmatpush1.msra.mxu0 %v4734
    %4891 = vmatprep.subr.mxu0 %v4739
    %4892 = vmatpush1.msra.mxu0 %v4738
    %4893 = vmatprep.subr.mxu0 %v4743
    %4894 = vmatpush1.msra.mxu0 %v4742
    %4895 = vmatprep.subr.mxu0 %v4747
    %4896 = vmatpush1.msra.mxu0 %v4746
    %4897 = vmatprep.subr.mxu0 %v4751
    %4898 = vmatpush1.msra.mxu0 %v4750
    %4899 = vmatprep.subr.mxu0 %v4755
    %4900 = vmatpush1.msra.mxu0 %v4754
    %4901 = vmatprep.subr.mxu0 %v4759
    %4902 = vmatpush1.msra.mxu0 %v4758
    %4903 = vmatprep.subr.mxu0 %v4763
    %4904 = vmatpush1.msra.mxu0 %v4762
    %4905 = vmatprep.subr.mxu0 %v4767
    %4906 = vmatpush1.msra.mxu0 %v4766
    %4907 = vmatprep.subr.mxu0 %v4771
    %4908 = vmatpush1.msra.mxu0 %v4770
    %4909 = vmatprep.subr.mxu0 %v4775
    %4910 = vmatpush1.msra.mxu0 %v4774
    %4911 = vmatprep.mubr.f32.mxu0 %v4646
    %4912 = vmatmul.mubr.f32.gmra.mrb[0].mxu0 %v4644
    %v4913 = vpop.f32.mrb[0].mxu0
    %v4914 = vadd.f32 0.0, %v4913
    %v4915 = vpop.f32.mrb[0].mxu0
    %v4916 = vadd.f32 0.0, %v4915
    %4917 = vdwg.mxu0
    %v4918 = vlaneseq
    %v4919 = vshrl.u32 %v4918, 7
    %v4920 = vsub.s32 0, %v4919
    %v4921 = vrot.slane %v4843, %v4920
    %v4922 = vlaneseq
    %v4923 = vshrl.u32 %v4922, 7
    %v4924 = vsub.s32 0, %v4923
    %v4925 = vrot.slane %v4845, %v4924
    %v4926 = vlaneseq
    %v4927 = vshrl.u32 %v4926, 7
    %v4928 = vsub.s32 0, %v4927
    %v4929 = vrot.slane %v4914, %v4928
    %v4930 = vlaneseq
    %v4931 = vshrl.u32 %v4930, 7
    %v4932 = vsub.s32 0, %v4931
    %v4933 = vrot.slane %v4916, %v4932
    %v4934 = vsub.f32 %v4204, %v4921
    %v4935 = vsub.f32 %v4206, %v4925
    %v4936 = vsub.f32 %v4346, %v4929
    %v4937 = vsub.f32 %v4348, %v4933
    %v4938 = vmul.f32 %v4934, %v4934
    %v4939 = vmul.f32 %v4935, %v4935
    %v4940 = vmul.f32 %v4936, %v4936
    %v4941 = vmul.f32 %v4937, %v4937
    %v4942 = vrot.slane %v4938, 4
    %v4943 = vadd.f32 %v4938, %v4942
    %v4944 = vrot.slane %v4943, 2
    %v4945 = vadd.f32 %v4943, %v4944
    %v4946 = vrot.slane %v4945, 1
    %v4947 = vadd.f32 %v4945, %v4946
    %v4948 = vrot.slane %v4939, 4
    %v4949 = vadd.f32 %v4939, %v4948
    %v4950 = vrot.slane %v4949, 2
    %v4951 = vadd.f32 %v4949, %v4950
    %v4952 = vrot.slane %v4951, 1
    %v4953 = vadd.f32 %v4951, %v4952
    %v4954 = vrot.slane %v4940, 4
    %v4955 = vadd.f32 %v4940, %v4954
    %v4956 = vrot.slane %v4955, 2
    %v4957 = vadd.f32 %v4955, %v4956
    %v4958 = vrot.slane %v4957, 1
    %v4959 = vadd.f32 %v4957, %v4958
    %v4960 = vrot.slane %v4941, 4
    %v4961 = vadd.f32 %v4941, %v4960
    %v4962 = vrot.slane %v4961, 2
    %v4963 = vadd.f32 %v4961, %v4962
    %v4964 = vrot.slane %v4963, 1
    %v4965 = vadd.f32 %v4963, %v4964
    %v4966 = vmul.f32 %v4947, %v354
    %v4967 = vmul.f32 %v4953, %v354
    %v4968 = vmul.f32 %v4959, %v354
    %v4969 = vmul.f32 %v4965, %v354
    %4970 = vmatprep.subr.mxu0 %v4379
    %4971 = vmatpush1.msra.mxu0 %v4378
    %4972 = vmatprep.subr.mxu0 %v4381
    %4973 = vmatpush1.msra.mxu0 %v4380
    %4974 = vmatprep.subr.mxu0 %v4383
    %4975 = vmatpush1.msra.mxu0 %v4382
    %4976 = vmatprep.subr.mxu0 %v4385
    %4977 = vmatpush1.msra.mxu0 %v4384
    %4978 = vmatprep.subr.mxu0 %v4387
    %4979 = vmatpush1.msra.mxu0 %v4386
    %4980 = vmatprep.subr.mxu0 %v4389
    %4981 = vmatpush1.msra.mxu0 %v4388
    %4982 = vmatprep.subr.mxu0 %v4391
    %4983 = vmatpush1.msra.mxu0 %v4390
    %4984 = vmatprep.subr.mxu0 %v4393
    %4985 = vmatpush1.msra.mxu0 %v4392
    %4986 = vmatprep.subr.mxu0 %v4395
    %4987 = vmatpush1.msra.mxu0 %v4394
    %4988 = vmatprep.subr.mxu0 %v4397
    %4989 = vmatpush1.msra.mxu0 %v4396
    %4990 = vmatprep.subr.mxu0 %v4399
    %4991 = vmatpush1.msra.mxu0 %v4398
    %4992 = vmatprep.subr.mxu0 %v4401
    %4993 = vmatpush1.msra.mxu0 %v4400
    %4994 = vmatprep.subr.mxu0 %v4403
    %4995 = vmatpush1.msra.mxu0 %v4402
    %4996 = vmatprep.subr.mxu0 %v4405
    %4997 = vmatpush1.msra.mxu0 %v4404
    %4998 = vmatprep.subr.mxu0 %v4407
    %4999 = vmatpush1.msra.mxu0 %v4406
    %5000 = vmatprep.subr.mxu0 %v4409
    %5001 = vmatpush1.msra.mxu0 %v4408
    %5002 = vmatprep.subr.mxu0 %v4411
    %5003 = vmatpush1.msra.mxu0 %v4410
    %5004 = vmatprep.subr.mxu0 %v4413
    %5005 = vmatpush1.msra.mxu0 %v4412
    %5006 = vmatprep.subr.mxu0 %v4415
    %5007 = vmatpush1.msra.mxu0 %v4414
    %5008 = vmatprep.subr.mxu0 %v4417
    %5009 = vmatpush1.msra.mxu0 %v4416
    %5010 = vmatprep.subr.mxu0 %v4419
    %5011 = vmatpush1.msra.mxu0 %v4418
    %5012 = vmatprep.subr.mxu0 %v4421
    %5013 = vmatpush1.msra.mxu0 %v4420
    %5014 = vmatprep.subr.mxu0 %v4423
    %5015 = vmatpush1.msra.mxu0 %v4422
    %5016 = vmatprep.subr.mxu0 %v4425
    %5017 = vmatpush1.msra.mxu0 %v4424
    %5018 = vmatprep.subr.mxu0 %v4427
    %5019 = vmatpush1.msra.mxu0 %v4426
    %5020 = vmatprep.subr.mxu0 %v4429
    %5021 = vmatpush1.msra.mxu0 %v4428
    %5022 = vmatprep.subr.mxu0 %v4431
    %5023 = vmatpush1.msra.mxu0 %v4430
    %5024 = vmatprep.subr.mxu0 %v4433
    %5025 = vmatpush1.msra.mxu0 %v4432
    %5026 = vmatprep.subr.mxu0 %v4435
    %5027 = vmatpush1.msra.mxu0 %v4434
    %5028 = vmatprep.subr.mxu0 %v4437
    %5029 = vmatpush1.msra.mxu0 %v4436
    %5030 = vmatprep.subr.mxu0 %v4439
    %5031 = vmatpush1.msra.mxu0 %v4438
    %5032 = vmatprep.subr.mxu0 %v4441
    %5033 = vmatpush1.msra.mxu0 %v4440
    %5034 = vmatprep.mubr.f32.mxu0 %v4967
    %5035 = vmatmul.mubr.f32.gmra.mrb[0].mxu0 %v4966
    %v5036 = vpop.f32.mrb[0].mxu0
    %v5037 = vadd.f32 0.0, %v5036
    %v5038 = vpop.f32.mrb[0].mxu0
    %v5039 = vadd.f32 0.0, %v5038
    %5040 = vdwg.mxu0
    %5041 = vmatprep.subr.mxu0 %v4443
    %5042 = vmatpush1.msra.mxu0 %v4442
    %5043 = vmatprep.subr.mxu0 %v4445
    %5044 = vmatpush1.msra.mxu0 %v4444
    %5045 = vmatprep.subr.mxu0 %v4447
    %5046 = vmatpush1.msra.mxu0 %v4446
    %5047 = vmatprep.subr.mxu0 %v4449
    %5048 = vmatpush1.msra.mxu0 %v4448
    %5049 = vmatprep.subr.mxu0 %v4451
    %5050 = vmatpush1.msra.mxu0 %v4450
    %5051 = vmatprep.subr.mxu0 %v4453
    %5052 = vmatpush1.msra.mxu0 %v4452
    %5053 = vmatprep.subr.mxu0 %v4455
    %5054 = vmatpush1.msra.mxu0 %v4454
    %5055 = vmatprep.subr.mxu0 %v4457
    %5056 = vmatpush1.msra.mxu0 %v4456
    %5057 = vmatprep.subr.mxu0 %v4459
    %5058 = vmatpush1.msra.mxu0 %v4458
    %5059 = vmatprep.subr.mxu0 %v4461
    %5060 = vmatpush1.msra.mxu0 %v4460
    %5061 = vmatprep.subr.mxu0 %v4463
    %5062 = vmatpush1.msra.mxu0 %v4462
    %5063 = vmatprep.subr.mxu0 %v4465
    %5064 = vmatpush1.msra.mxu0 %v4464
    %5065 = vmatprep.subr.mxu0 %v4467
    %5066 = vmatpush1.msra.mxu0 %v4466
    %5067 = vmatprep.subr.mxu0 %v4469
    %5068 = vmatpush1.msra.mxu0 %v4468
    %5069 = vmatprep.subr.mxu0 %v4471
    %5070 = vmatpush1.msra.mxu0 %v4470
    %5071 = vmatprep.subr.mxu0 %v4473
    %5072 = vmatpush1.msra.mxu0 %v4472
    %5073 = vmatprep.subr.mxu0 %v4475
    %5074 = vmatpush1.msra.mxu0 %v4474
    %5075 = vmatprep.subr.mxu0 %v4477
    %5076 = vmatpush1.msra.mxu0 %v4476
    %5077 = vmatprep.subr.mxu0 %v4479
    %5078 = vmatpush1.msra.mxu0 %v4478
    %5079 = vmatprep.subr.mxu0 %v4481
    %5080 = vmatpush1.msra.mxu0 %v4480
    %5081 = vmatprep.subr.mxu0 %v4483
    %5082 = vmatpush1.msra.mxu0 %v4482
    %5083 = vmatprep.subr.mxu0 %v4485
    %5084 = vmatpush1.msra.mxu0 %v4484
    %5085 = vmatprep.subr.mxu0 %v4487
    %5086 = vmatpush1.msra.mxu0 %v4486
    %5087 = vmatprep.subr.mxu0 %v4489
    %5088 = vmatpush1.msra.mxu0 %v4488
    %5089 = vmatprep.subr.mxu0 %v4491
    %5090 = vmatpush1.msra.mxu0 %v4490
    %5091 = vmatprep.subr.mxu0 %v4493
    %5092 = vmatpush1.msra.mxu0 %v4492
    %5093 = vmatprep.subr.mxu0 %v4495
    %5094 = vmatpush1.msra.mxu0 %v4494
    %5095 = vmatprep.subr.mxu0 %v4497
    %5096 = vmatpush1.msra.mxu0 %v4496
    %5097 = vmatprep.subr.mxu0 %v4499
    %5098 = vmatpush1.msra.mxu0 %v4498
    %5099 = vmatprep.subr.mxu0 %v4501
    %5100 = vmatpush1.msra.mxu0 %v4500
    %5101 = vmatprep.subr.mxu0 %v4503
    %5102 = vmatpush1.msra.mxu0 %v4502
    %5103 = vmatprep.subr.mxu0 %v4505
    %5104 = vmatpush1.msra.mxu0 %v4504
    %5105 = vmatprep.mubr.f32.mxu0 %v4969
    %5106 = vmatmul.mubr.f32.gmra.mrb[0].mxu0 %v4968
    %v5107 = vpop.f32.mrb[0].mxu0
    %v5108 = vadd.f32 %v5037, %v5107
    %v5109 = vpop.f32.mrb[0].mxu0
    %v5110 = vadd.f32 %v5039, %v5109
    %5111 = vdwg.mxu0
    %5112 = vmatprep.subr.mxu0 %v4649
    %5113 = vmatpush1.msra.mxu0 %v4648
    %5114 = vmatprep.subr.mxu0 %v4653
    %5115 = vmatpush1.msra.mxu0 %v4652
    %5116 = vmatprep.subr.mxu0 %v4657
    %5117 = vmatpush1.msra.mxu0 %v4656
    %5118 = vmatprep.subr.mxu0 %v4661
    %5119 = vmatpush1.msra.mxu0 %v4660
    %5120 = vmatprep.subr.mxu0 %v4665
    %5121 = vmatpush1.msra.mxu0 %v4664
    %5122 = vmatprep.subr.mxu0 %v4669
    %5123 = vmatpush1.msra.mxu0 %v4668
    %5124 = vmatprep.subr.mxu0 %v4673
    %5125 = vmatpush1.msra.mxu0 %v4672
    %5126 = vmatprep.subr.mxu0 %v4677
    %5127 = vmatpush1.msra.mxu0 %v4676
    %5128 = vmatprep.subr.mxu0 %v4681
    %5129 = vmatpush1.msra.mxu0 %v4680
    %5130 = vmatprep.subr.mxu0 %v4685
    %5131 = vmatpush1.msra.mxu0 %v4684
    %5132 = vmatprep.subr.mxu0 %v4689
    %5133 = vmatpush1.msra.mxu0 %v4688
    %5134 = vmatprep.subr.mxu0 %v4693
    %5135 = vmatpush1.msra.mxu0 %v4692
    %5136 = vmatprep.subr.mxu0 %v4697
    %5137 = vmatpush1.msra.mxu0 %v4696
    %5138 = vmatprep.subr.mxu0 %v4701
    %5139 = vmatpush1.msra.mxu0 %v4700
    %5140 = vmatprep.subr.mxu0 %v4705
    %5141 = vmatpush1.msra.mxu0 %v4704
    %5142 = vmatprep.subr.mxu0 %v4709
    %5143 = vmatpush1.msra.mxu0 %v4708
    %5144 = vmatprep.subr.mxu0 %v4713
    %5145 = vmatpush1.msra.mxu0 %v4712
    %5146 = vmatprep.subr.mxu0 %v4717
    %5147 = vmatpush1.msra.mxu0 %v4716
    %5148 = vmatprep.subr.mxu0 %v4721
    %5149 = vmatpush1.msra.mxu0 %v4720
    %5150 = vmatprep.subr.mxu0 %v4725
    %5151 = vmatpush1.msra.mxu0 %v4724
    %5152 = vmatprep.subr.mxu0 %v4729
    %5153 = vmatpush1.msra.mxu0 %v4728
    %5154 = vmatprep.subr.mxu0 %v4733
    %5155 = vmatpush1.msra.mxu0 %v4732
    %5156 = vmatprep.subr.mxu0 %v4737
    %5157 = vmatpush1.msra.mxu0 %v4736
    %5158 = vmatprep.subr.mxu0 %v4741
    %5159 = vmatpush1.msra.mxu0 %v4740
    %5160 = vmatprep.subr.mxu0 %v4745
    %5161 = vmatpush1.msra.mxu0 %v4744
    %5162 = vmatprep.subr.mxu0 %v4749
    %5163 = vmatpush1.msra.mxu0 %v4748
    %5164 = vmatprep.subr.mxu0 %v4753
    %5165 = vmatpush1.msra.mxu0 %v4752
    %5166 = vmatprep.subr.mxu0 %v4757
    %5167 = vmatpush1.msra.mxu0 %v4756
    %5168 = vmatprep.subr.mxu0 %v4761
    %5169 = vmatpush1.msra.mxu0 %v4760
    %5170 = vmatprep.subr.mxu0 %v4765
    %5171 = vmatpush1.msra.mxu0 %v4764
    %5172 = vmatprep.subr.mxu0 %v4769
    %5173 = vmatpush1.msra.mxu0 %v4768
    %5174 = vmatprep.subr.mxu0 %v4773
    %5175 = vmatpush1.msra.mxu0 %v4772
    %5176 = vmatprep.mubr.f32.mxu0 %v5110
    %5177 = vmatmul.mubr.f32.gmra.mrb[0].mxu0 %v5108
    %v5178 = vpop.f32.mrb[0].mxu0
    %v5179 = vadd.f32 1e-05, %v5178
    %v5180 = vpop.f32.mrb[0].mxu0
    %v5181 = vadd.f32 1e-05, %v5180
    %5182 = vdwg.mxu0
    %5183 = vmatprep.subr.mxu0 %v4651
    %5184 = vmatpush1.msra.mxu0 %v4650
    %5185 = vmatprep.subr.mxu0 %v4655
    %5186 = vmatpush1.msra.mxu0 %v4654
    %5187 = vmatprep.subr.mxu0 %v4659
    %5188 = vmatpush1.msra.mxu0 %v4658
    %5189 = vmatprep.subr.mxu0 %v4663
    %5190 = vmatpush1.msra.mxu0 %v4662
    %5191 = vmatprep.subr.mxu0 %v4667
    %5192 = vmatpush1.msra.mxu0 %v4666
    %5193 = vmatprep.subr.mxu0 %v4671
    %5194 = vmatpush1.msra.mxu0 %v4670
    %5195 = vmatprep.subr.mxu0 %v4675
    %5196 = vmatpush1.msra.mxu0 %v4674
    %5197 = vmatprep.subr.mxu0 %v4679
    %5198 = vmatpush1.msra.mxu0 %v4678
    %5199 = vmatprep.subr.mxu0 %v4683
    %5200 = vmatpush1.msra.mxu0 %v4682
    %5201 = vmatprep.subr.mxu0 %v4687
    %5202 = vmatpush1.msra.mxu0 %v4686
    %5203 = vmatprep.subr.mxu0 %v4691
    %5204 = vmatpush1.msra.mxu0 %v4690
    %5205 = vmatprep.subr.mxu0 %v4695
    %5206 = vmatpush1.msra.mxu0 %v4694
    %5207 = vmatprep.subr.mxu0 %v4699
    %5208 = vmatpush1.msra.mxu0 %v4698
    %5209 = vmatprep.subr.mxu0 %v4703
    %5210 = vmatpush1.msra.mxu0 %v4702
    %5211 = vmatprep.subr.mxu0 %v4707
    %5212 = vmatpush1.msra.mxu0 %v4706
    %5213 = vmatprep.subr.mxu0 %v4711
    %5214 = vmatpush1.msra.mxu0 %v4710
    %5215 = vmatprep.subr.mxu0 %v4715
    %5216 = vmatpush1.msra.mxu0 %v4714
    %5217 = vmatprep.subr.mxu0 %v4719
    %5218 = vmatpush1.msra.mxu0 %v4718
    %5219 = vmatprep.subr.mxu0 %v4723
    %5220 = vmatpush1.msra.mxu0 %v4722
    %5221 = vmatprep.subr.mxu0 %v4727
    %5222 = vmatpush1.msra.mxu0 %v4726
    %5223 = vmatprep.subr.mxu0 %v4731
    %5224 = vmatpush1.msra.mxu0 %v4730
    %5225 = vmatprep.subr.mxu0 %v4735
    %5226 = vmatpush1.msra.mxu0 %v4734
    %5227 = vmatprep.subr.mxu0 %v4739
    %5228 = vmatpush1.msra.mxu0 %v4738
    %5229 = vmatprep.subr.mxu0 %v4743
    %5230 = vmatpush1.msra.mxu0 %v4742
    %5231 = vmatprep.subr.mxu0 %v4747
    %5232 = vmatpush1.msra.mxu0 %v4746
    %5233 = vmatprep.subr.mxu0 %v4751
    %5234 = vmatpush1.msra.mxu0 %v4750
    %5235 = vmatprep.subr.mxu0 %v4755
    %5236 = vmatpush1.msra.mxu0 %v4754
    %5237 = vmatprep.subr.mxu0 %v4759
    %5238 = vmatpush1.msra.mxu0 %v4758
    %5239 = vmatprep.subr.mxu0 %v4763
    %5240 = vmatpush1.msra.mxu0 %v4762
    %5241 = vmatprep.subr.mxu0 %v4767
    %5242 = vmatpush1.msra.mxu0 %v4766
    %5243 = vmatprep.subr.mxu0 %v4771
    %5244 = vmatpush1.msra.mxu0 %v4770
    %5245 = vmatprep.subr.mxu0 %v4775
    %5246 = vmatpush1.msra.mxu0 %v4774
    %5247 = vmatprep.mubr.f32.mxu0 %v5110
    %5248 = vmatmul.mubr.f32.gmra.mrb[0].mxu0 %v5108
    %v5249 = vpop.f32.mrb[0].mxu0
    %v5250 = vadd.f32 1e-05, %v5249
    %v5251 = vpop.f32.mrb[0].mxu0
    %v5252 = vadd.f32 1e-05, %v5251
    %5253 = vdwg.mxu0
    %v5254 = vrsqrt.pop %v5179
    %v5255 = vrsqrt.pop %v5181
    %v5256 = vrsqrt.pop %v5250
    %v5257 = vrsqrt.pop %v5252
    %v5258 = vlaneseq
    %v5259 = vshrl.u32 %v5258, 7
    %v5260 = vsub.s32 0, %v5259
    %v5261 = vrot.slane %v5254, %v5260
    %v5262 = vlaneseq
    %v5263 = vshrl.u32 %v5262, 7
    %v5264 = vsub.s32 0, %v5263
    %v5265 = vrot.slane %v5255, %v5264
    %v5266 = vlaneseq
    %v5267 = vshrl.u32 %v5266, 7
    %v5268 = vsub.s32 0, %v5267
    %v5269 = vrot.slane %v5256, %v5268
    %v5270 = vlaneseq
    %v5271 = vshrl.u32 %v5270, 7
    %v5272 = vsub.s32 0, %v5271
    %v5273 = vrot.slane %v5257, %v5272
    %v5274 = vmul.f32 %v4934, %v5261
    %v5275 = vmul.f32 %v4935, %v5265
    %v5276 = vmul.f32 %v4936, %v5269
    %v5277 = vmul.f32 %v4937, %v5273
    %v5278 = vmax.f32 %v5274, 0.0
    %v5279 = vmax.f32 %v5275, 0.0
    %v5280 = vmax.f32 %v5276, 0.0
    %v5281 = vmax.f32 %v5277, 0.0
    %v5282 = vld [vmem:[%s17] sm:$0xff]
    %v5283 = vld [vmem:[%s17 + $0x8] sm:$0xff]
    %v5284 = vld [vmem:[%s17 + $0x10] sm:$0xff]
    %v5285 = vld [vmem:[%s17 + $0x18] sm:$0xff]
    %v5286 = vld [vmem:[%s17 + $0x20] sm:$0xff]
    %v5287 = vld [vmem:[%s17 + $0x28] sm:$0xff]
    %v5288 = vld [vmem:[%s17 + $0x30] sm:$0xff]
    %v5289 = vld [vmem:[%s17 + $0x38] sm:$0xff]
    %v5290 = vld [vmem:[%s17 + $0x40] sm:$0xff]
    %v5291 = vld [vmem:[%s17 + $0x48] sm:$0xff]
    %v5292 = vld [vmem:[%s17 + $0x50] sm:$0xff]
    %v5293 = vld [vmem:[%s17 + $0x58] sm:$0xff]
    %v5294 = vld [vmem:[%s17 + $0x60] sm:$0xff]
    %v5295 = vld [vmem:[%s17 + $0x68] sm:$0xff]
    %v5296 = vld [vmem:[%s17 + $0x70] sm:$0xff]
    %v5297 = vld [vmem:[%s17 + $0x78] sm:$0xff]
    %v5298 = vld [vmem:[%s17 + $0x80] sm:$0xff]
    %v5299 = vld [vmem:[%s17 + $0x88] sm:$0xff]
    %v5300 = vld [vmem:[%s17 + $0x90] sm:$0xff]
    %v5301 = vld [vmem:[%s17 + $0x98] sm:$0xff]
    %v5302 = vld [vmem:[%s17 + $0xa0] sm:$0xff]
    %v5303 = vld [vmem:[%s17 + $0xa8] sm:$0xff]
    %v5304 = vld [vmem:[%s17 + $0xb0] sm:$0xff]
    %v5305 = vld [vmem:[%s17 + $0xb8] sm:$0xff]
    %v5306 = vld [vmem:[%s17 + $0xc0] sm:$0xff]
    %v5307 = vld [vmem:[%s17 + $0xc8] sm:$0xff]
    %v5308 = vld [vmem:[%s17 + $0xd0] sm:$0xff]
    %v5309 = vld [vmem:[%s17 + $0xd8] sm:$0xff]
    %v5310 = vld [vmem:[%s17 + $0xe0] sm:$0xff]
    %v5311 = vld [vmem:[%s17 + $0xe8] sm:$0xff]
    %v5312 = vld [vmem:[%s17 + $0xf0] sm:$0xff]
    %v5313 = vld [vmem:[%s17 + $0xf8] sm:$0xff]
    %v5314 = vld [vmem:[%s17 + $0x100] sm:$0xff]
    %v5315 = vld [vmem:[%s17 + $0x108] sm:$0xff]
    %v5316 = vld [vmem:[%s17 + $0x110] sm:$0xff]
    %v5317 = vld [vmem:[%s17 + $0x118] sm:$0xff]
    %v5318 = vld [vmem:[%s17 + $0x120] sm:$0xff]
    %v5319 = vld [vmem:[%s17 + $0x128] sm:$0xff]
    %v5320 = vld [vmem:[%s17 + $0x130] sm:$0xff]
    %v5321 = vld [vmem:[%s17 + $0x138] sm:$0xff]
    %v5322 = vld [vmem:[%s17 + $0x140] sm:$0xff]
    %v5323 = vld [vmem:[%s17 + $0x148] sm:$0xff]
    %v5324 = vld [vmem:[%s17 + $0x150] sm:$0xff]
    %v5325 = vld [vmem:[%s17 + $0x158] sm:$0xff]
    %v5326 = vld [vmem:[%s17 + $0x160] sm:$0xff]
    %v5327 = vld [vmem:[%s17 + $0x168] sm:$0xff]
    %v5328 = vld [vmem:[%s17 + $0x170] sm:$0xff]
    %v5329 = vld [vmem:[%s17 + $0x178] sm:$0xff]
    %v5330 = vld [vmem:[%s17 + $0x180] sm:$0xff]
    %v5331 = vld [vmem:[%s17 + $0x188] sm:$0xff]
    %v5332 = vld [vmem:[%s17 + $0x190] sm:$0xff]
    %v5333 = vld [vmem:[%s17 + $0x198] sm:$0xff]
    %v5334 = vld [vmem:[%s17 + $0x1a0] sm:$0xff]
    %v5335 = vld [vmem:[%s17 + $0x1a8] sm:$0xff]
    %v5336 = vld [vmem:[%s17 + $0x1b0] sm:$0xff]
    %v5337 = vld [vmem:[%s17 + $0x1b8] sm:$0xff]
    %v5338 = vld [vmem:[%s17 + $0x1c0] sm:$0xff]
    %v5339 = vld [vmem:[%s17 + $0x1c8] sm:$0xff]
    %v5340 = vld [vmem:[%s17 + $0x1d0] sm:$0xff]
    %v5341 = vld [vmem:[%s17 + $0x1d8] sm:$0xff]
    %v5342 = vld [vmem:[%s17 + $0x1e0] sm:$0xff]
    %v5343 = vld [vmem:[%s17 + $0x1e8] sm:$0xff]
    %v5344 = vld [vmem:[%s17 + $0x1f0] sm:$0xff]
    %v5345 = vld [vmem:[%s17 + $0x1f8] sm:$0xff]
    %v5346 = vld [vmem:[%s18] sm:$0x1]
    %v5348 = vlaneseq
    %v5349 = vshrl.u32 %v5348, 7
    %v5350 = vsub.s32 0, %v5349
    %v5351 = vrot.slane %v5346, %v5350
    %5353 = vmatprep.subr.mxu0 0.0
    %5354 = vmatpush1.msra.mxu0 %v5282
    %5355 = vmatprep.subr.mxu0 0.0
    %5356 = vmatpush1.msra.mxu0 %v5283
    %5357 = vmatprep.subr.mxu0 0.0
    %5358 = vmatpush1.msra.mxu0 %v5284
    %5359 = vmatprep.subr.mxu0 0.0
    %5360 = vmatpush1.msra.mxu0 %v5285
    %5361 = vmatprep.subr.mxu0 0.0
    %5362 = vmatpush1.msra.mxu0 %v5286
    %5363 = vmatprep.subr.mxu0 0.0
    %5364 = vmatpush1.msra.mxu0 %v5287
    %5365 = vmatprep.subr.mxu0 0.0
    %5366 = vmatpush1.msra.mxu0 %v5288
    %5367 = vmatprep.subr.mxu0 0.0
    %5368 = vmatpush1.msra.mxu0 %v5289
    %5369 = vmatprep.subr.mxu0 0.0
    %5370 = vmatpush1.msra.mxu0 %v5290
    %5371 = vmatprep.subr.mxu0 0.0
    %5372 = vmatpush1.msra.mxu0 %v5291
    %5373 = vmatprep.subr.mxu0 0.0
    %5374 = vmatpush1.msra.mxu0 %v5292
    %5375 = vmatprep.subr.mxu0 0.0
    %5376 = vmatpush1.msra.mxu0 %v5293
    %5377 = vmatprep.subr.mxu0 0.0
    %5378 = vmatpush1.msra.mxu0 %v5294
    %5379 = vmatprep.subr.mxu0 0.0
    %5380 = vmatpush1.msra.mxu0 %v5295
    %5381 = vmatprep.subr.mxu0 0.0
    %5382 = vmatpush1.msra.mxu0 %v5296
    %5383 = vmatprep.subr.mxu0 0.0
    %5384 = vmatpush1.msra.mxu0 %v5297
    %5385 = vmatprep.subr.mxu0 0.0
    %5386 = vmatpush1.msra.mxu0 %v5298
    %5387 = vmatprep.subr.mxu0 0.0
    %5388 = vmatpush1.msra.mxu0 %v5299
    %5389 = vmatprep.subr.mxu0 0.0
    %5390 = vmatpush1.msra.mxu0 %v5300
    %5391 = vmatprep.subr.mxu0 0.0
    %5392 = vmatpush1.msra.mxu0 %v5301
    %5393 = vmatprep.subr.mxu0 0.0
    %5394 = vmatpush1.msra.mxu0 %v5302
    %5395 = vmatprep.subr.mxu0 0.0
    %5396 = vmatpush1.msra.mxu0 %v5303
    %5397 = vmatprep.subr.mxu0 0.0
    %5398 = vmatpush1.msra.mxu0 %v5304
    %5399 = vmatprep.subr.mxu0 0.0
    %5400 = vmatpush1.msra.mxu0 %v5305
    %5401 = vmatprep.subr.mxu0 0.0
    %5402 = vmatpush1.msra.mxu0 %v5306
    %5403 = vmatprep.subr.mxu0 0.0
    %5404 = vmatpush1.msra.mxu0 %v5307
    %5405 = vmatprep.subr.mxu0 0.0
    %5406 = vmatpush1.msra.mxu0 %v5308
    %5407 = vmatprep.subr.mxu0 0.0
    %5408 = vmatpush1.msra.mxu0 %v5309
    %5409 = vmatprep.subr.mxu0 0.0
    %5410 = vmatpush1.msra.mxu0 %v5310
    %5411 = vmatprep.subr.mxu0 0.0
    %5412 = vmatpush1.msra.mxu0 %v5311
    %5413 = vmatprep.subr.mxu0 0.0
    %5414 = vmatpush1.msra.mxu0 %v5312
    %5415 = vmatprep.subr.mxu0 0.0
    %5416 = vmatpush1.msra.mxu0 %v5313
    %5417 = vmatprep.mubr.f32.mxu0 %v5279
    %5418 = vmatmul.mubr.f32.gmra.mrb[0].mxu0 %v5278
    %v5419 = vpop.f32.mrb[0].mxu0
    %v5420 = vadd.f32 %v5351, %v5419
    %v5421 = vpop.f32.mrb[0].mxu0
    %5422 = vdwg.mxu0
    %5423 = vmatprep.subr.mxu0 0.0
    %5424 = vmatpush1.msra.mxu0 %v5314
    %5425 = vmatprep.subr.mxu0 0.0
    %5426 = vmatpush1.msra.mxu0 %v5315
    %5427 = vmatprep.subr.mxu0 0.0
    %5428 = vmatpush1.msra.mxu0 %v5316
    %5429 = vmatprep.subr.mxu0 0.0
    %5430 = vmatpush1.msra.mxu0 %v5317
    %5431 = vmatprep.subr.mxu0 0.0
    %5432 = vmatpush1.msra.mxu0 %v5318
    %5433 = vmatprep.subr.mxu0 0.0
    %5434 = vmatpush1.msra.mxu0 %v5319
    %5435 = vmatprep.subr.mxu0 0.0
    %5436 = vmatpush1.msra.mxu0 %v5320
    %5437 = vmatprep.subr.mxu0 0.0
    %5438 = vmatpush1.msra.mxu0 %v5321
    %5439 = vmatprep.subr.mxu0 0.0
    %5440 = vmatpush1.msra.mxu0 %v5322
    %5441 = vmatprep.subr.mxu0 0.0
    %5442 = vmatpush1.msra.mxu0 %v5323
    %5443 = vmatprep.subr.mxu0 0.0
    %5444 = vmatpush1.msra.mxu0 %v5324
    %5445 = vmatprep.subr.mxu0 0.0
    %5446 = vmatpush1.msra.mxu0 %v5325
    %5447 = vmatprep.subr.mxu0 0.0
    %5448 = vmatpush1.msra.mxu0 %v5326
    %5449 = vmatprep.subr.mxu0 0.0
    %5450 = vmatpush1.msra.mxu0 %v5327
    %5451 = vmatprep.subr.mxu0 0.0
    %5452 = vmatpush1.msra.mxu0 %v5328
    %5453 = vmatprep.subr.mxu0 0.0
    %5454 = vmatpush1.msra.mxu0 %v5329
    %5455 = vmatprep.subr.mxu0 0.0
    %5456 = vmatpush1.msra.mxu0 %v5330
    %5457 = vmatprep.subr.mxu0 0.0
    %5458 = vmatpush1.msra.mxu0 %v5331
    %5459 = vmatprep.subr.mxu0 0.0
    %5460 = vmatpush1.msra.mxu0 %v5332
    %5461 = vmatprep.subr.mxu0 0.0
    %5462 = vmatpush1.msra.mxu0 %v5333
    %5463 = vmatprep.subr.mxu0 0.0
    %5464 = vmatpush1.msra.mxu0 %v5334
    %5465 = vmatprep.subr.mxu0 0.0
    %5466 = vmatpush1.msra.mxu0 %v5335
    %5467 = vmatprep.subr.mxu0 0.0
    %5468 = vmatpush1.msra.mxu0 %v5336
    %5469 = vmatprep.subr.mxu0 0.0
    %5470 = vmatpush1.msra.mxu0 %v5337
    %5471 = vmatprep.subr.mxu0 0.0
    %5472 = vmatpush1.msra.mxu0 %v5338
    %5473 = vmatprep.subr.mxu0 0.0
    %5474 = vmatpush1.msra.mxu0 %v5339
    %5475 = vmatprep.subr.mxu0 0.0
    %5476 = vmatpush1.msra.mxu0 %v5340
    %5477 = vmatprep.subr.mxu0 0.0
    %5478 = vmatpush1.msra.mxu0 %v5341
    %5479 = vmatprep.subr.mxu0 0.0
    %5480 = vmatpush1.msra.mxu0 %v5342
    %5481 = vmatprep.subr.mxu0 0.0
    %5482 = vmatpush1.msra.mxu0 %v5343
    %5483 = vmatprep.subr.mxu0 0.0
    %5484 = vmatpush1.msra.mxu0 %v5344
    %5485 = vmatprep.subr.mxu0 0.0
    %5486 = vmatpush1.msra.mxu0 %v5345
    %5487 = vmatprep.mubr.f32.mxu0 %v5281
    %5488 = vmatmul.mubr.f32.gmra.mrb[0].mxu0 %v5280
    %v5489 = vpop.f32.mrb[0].mxu0
    %v5490 = vadd.f32 %v5420, %v5489
    %v5491 = vpop.f32.mrb[0].mxu0
    %5492 = vdwg.mxu0
    %vm5493 = vcmask 80896
    %5494 = vst.msk [vmem:[#allocation13] sm:$0xff] %vm5493, %v5490
    // Predicated region
    $region102: #{tpu_custom_call.1} parent=1 // pred_check
      _
    $region103: #{tpu_custom_call.1} parent=1 // pred_check_branch
      %5496 = sbr.rel (0) target = $region105
    $region104: #{tpu_custom_call.1} parent=1 // pred_region
      %s5498 = ssub.s32 128, 128
      %5499 = vsyncadd [#allocation4], %s5498
      %s5501 = sshll.u32 [#allocation13], 4
      %s5502 = int_to_ptr.vmem [resolvable:$true] %s5501
      %5504 = dma.vmem_to_hbm [thread:$0]  %s5502, 128, %s19, [#allocation4]
    $region105: #{tpu_custom_call.1} parent=1 // pred_fallthru
      _
    // Predicated region
    $region106: #{tpu_custom_call.1} parent=1 // pred_check
      _
    $region107: #{tpu_custom_call.1} parent=1 // pred_check_branch
      %5506 = sbr.rel (0) target = $region109
    $region108: #{tpu_custom_call.1} parent=1 // pred_region
      %5507 = dma.done [#allocation4], 128
    $region109: #{tpu_custom_call.1} parent=1 // pred_fallthru
      _
    %5508 = vsyncpa [#allocation3], 1
    %5509 = vsyncpa [#allocation6], 1
    %5510 = vsyncpa [#allocation9], 1
    %5511 = vsyncpa [#allocation12], 1
    %5512 = vsyncpa [#allocation4], 1

</llo_original>
